<compile_context>
chip_gen: v7x
topology: tpu7x:2x2x1
jax: 0.10.0
libtpu: 0.0.40
codegen_flags: <defaults>
</compile_context>

<pallas_src>
import functools

import jax
import jax.numpy as jnp
from jax.experimental import pallas as pl
from jax.experimental.pallas import tpu as pltpu

IN_FEATURES = 28 * 28   # 784
H1, H2 = 64, 32
OUT_FEATURES = 10
OUT_PADDED = 16         # small lane pad for the output block; sliced in wrapper


def _mlp_kernel(x_ref, w1_ref, b1_ref, w2_ref, b2_ref, w3_ref, b3_ref, o_ref,
                *, precision):
    # Layer 1: (TB,784) @ (784,64) + (1,64), ReLU
    h1 = jnp.dot(x_ref[...], w1_ref[...],
                 preferred_element_type=jnp.float32, precision=precision)
    h1 = jnp.maximum(h1 + b1_ref[...], 0.0)
    # Layer 2: (TB,64) @ (64,32) + (1,32), ReLU
    h2 = jnp.dot(h1, w2_ref[...],
                 preferred_element_type=jnp.float32, precision=precision)
    h2 = jnp.maximum(h2 + b2_ref[...], 0.0)
    # Layer 3: (TB,32) @ (32,16) + (1,16); cols 10..15 are zero padding.
    out = jnp.dot(h2, w3_ref[...],
                  preferred_element_type=jnp.float32, precision=precision)
    o_ref[...] = (out + b3_ref[...]).astype(o_ref.dtype)


def mlp_forward(x_nchw, params, *, block_b=1024, x_dtype=jnp.float32):
    """x_nchw: (B, 1, 28, 28). Returns logits (B, 10) in float32."""
    w1, b1, w2, b2, w3, b3 = params
    B = x_nchw.shape[0]
    # nn.Flatten(): flatten all dims after batch, row-major (C,H,W order).
    x_flat = x_nchw.reshape(B, -1).astype(x_dtype)        # (B, 784)
    w1_c = w1.astype(x_dtype)                              # match first-dot operand dtype

    # f32 path: force true-f32 MXU passes (hidden under the mem-bound DMA).
    # bf16 path: operands are already the MXU's native input type.
    precision = (jax.lax.Precision.HIGHEST if x_dtype == jnp.float32
                 else jax.lax.Precision.DEFAULT)

    # Batch tile: multiple of 8, capped at block_b, and capped at ~B/2 so the
    # grid has >= 2 tiles whenever possible (v7x megacore).  Final partial
    # tile (if any) is handled by Pallas' edge masking.
    half = ((pl.cdiv(B, 2) + 7) // 8) * 8
    tb = max(8, min(block_b, half))
    nb = pl.cdiv(B, tb)

    # Only the tiny last-layer params get padded (10 -> 16 output cols).
    w3_p = jnp.pad(w3, ((0, 0), (0, OUT_PADDED - OUT_FEATURES)))
    b3_p = jnp.pad(b3, ((0, 0), (0, OUT_PADDED - OUT_FEATURES)))

    def const_spec(shape):
        # VMEM-resident constants: same block every grid step.
        return pl.BlockSpec(shape, lambda i: (0,) * len(shape))

    x_itemsize = jnp.dtype(x_dtype).itemsize
    bytes_accessed = (x_itemsize * (x_flat.size + w1_c.size)
                      + 4 * (b1.size + w2.size + b2.size + w3_p.size + b3_p.size
                             + B * OUT_PADDED))
    flops = 2 * B * (IN_FEATURES * H1 + H1 * H2 + H2 * OUT_PADDED)

    out = pl.pallas_call(
        functools.partial(_mlp_kernel, precision=precision),
        out_shape=jax.ShapeDtypeStruct((B, OUT_PADDED), jnp.float32),
        grid=(nb,),
        in_specs=[
            pl.BlockSpec((tb, IN_FEATURES), lambda i: (i, 0)),   # streamed input
            const_spec(w1_c.shape), const_spec(b1.shape),        # resident weights
            const_spec(w2.shape), const_spec(b2.shape),
            const_spec(w3_p.shape), const_spec(b3_p.shape),
        ],
        out_specs=pl.BlockSpec((tb, OUT_PADDED), lambda i: (i, 0)),
        compiler_params=pltpu.CompilerParams(
            dimension_semantics=("parallel",),
        ),
        cost_estimate=pl.CostEstimate(
            flops=flops, transcendentals=0, bytes_accessed=bytes_accessed),
    )(x_flat, w1_c, b1, w2, b2, w3_p, b3_p)

    return out[:, :OUT_FEATURES]


def init_params(key):
    """Deterministic init. PyTorch Linear weight is (out,in); we store (in,out)."""
    k1, k2, k3, k4, k5, k6 = jax.random.split(key, 6)

    def linear_init(kw, kb, fan_in, fan_out):
        # PyTorch default: uniform(-1/sqrt(fan_in), 1/sqrt(fan_in))
        bound = 1.0 / jnp.sqrt(fan_in)
        w = jax.random.uniform(kw, (fan_in, fan_out), jnp.float32, -bound, bound)
        b = jax.random.uniform(kb, (1, fan_out), jnp.float32, -bound, bound)
        return w, b

    w1, b1 = linear_init(k1, k2, IN_FEATURES, H1)
    w2, b2 = linear_init(k3, k4, H1, H2)
    w3, b3 = linear_init(k5, k6, H2, OUT_FEATURES)
    return (w1, b1, w2, b2, w3, b3)


def reference_forward(x_nchw, params):
    w1, b1, w2, b2, w3, b3 = params
    hi = jax.lax.Precision.HIGHEST
    x = x_nchw.reshape(x_nchw.shape[0], -1)
    h = jnp.maximum(jnp.dot(x, w1, precision=hi) + b1, 0.0)
    h = jnp.maximum(jnp.dot(h, w2, precision=hi) + b2, 0.0)
    return jnp.dot(h, w3, precision=hi) + b3


if __name__ == "__main__":
    key = jax.random.PRNGKey(0)
    k_param, k_x = jax.random.split(key)
    params = init_params(k_param)

    B = 8
    x = jax.random.normal(k_x, (B, 1, 28, 28), dtype=jnp.float32)

    ref = reference_forward(x, params)

    # Default f32 path (matches the PyTorch module's numerics).
    out = jax.block_until_ready(mlp_forward(x, params))
    assert out.shape == (B, 10)
    assert jnp.allclose(out, ref, atol=1e-4, rtol=1e-4), "f32 mismatch vs reference"

    # Optional bf16-input fast path (halves the dominant HBM stream).
    out_bf16 = jax.block_until_ready(mlp_forward(x, params, x_dtype=jnp.bfloat16))
    assert out_bf16.shape == (B, 10)
    assert jnp.allclose(out_bf16, ref, atol=5e-2, rtol=5e-2), "bf16 mismatch vs reference"

    print("KERNEL_OK")
</pallas_src>

<mosaic_0001>
module attributes {stable_mosaic.version = 11 : i64} {
  func.func @_mlp_kernel(%arg0: i32, %arg1: memref<8x784xf32, #tpu.memory_space<vmem>>, %arg2: memref<784x64xf32, #tpu.memory_space<vmem>>, %arg3: memref<1x64xf32, #tpu.memory_space<vmem>>, %arg4: memref<64x32xf32, #tpu.memory_space<vmem>>, %arg5: memref<1x32xf32, #tpu.memory_space<vmem>>, %arg6: memref<32x16xf32, #tpu.memory_space<vmem>>, %arg7: memref<1x16xf32, #tpu.memory_space<vmem>>, %arg8: memref<8x16xf32, #tpu.memory_space<vmem>>) attributes {dimension_semantics = [#tpu.dimension_semantics<parallel>], iteration_bounds = array<i64: 1>, scalar_prefetch = 0 : i64, scratch_operands = 0 : i64, tpu.core_type = #tpu.core_type<tc>, window_params = [{transform_indices = @transform_0, window_bounds = array<i64: 8, 784>}, {pipeline_mode = #tpu.pipeline_mode<synchronous>, transform_indices = @transform_1, window_bounds = array<i64: 784, 64>}, {pipeline_mode = #tpu.pipeline_mode<synchronous>, transform_indices = @transform_2, window_bounds = array<i64: 1, 64>}, {pipeline_mode = #tpu.pipeline_mode<synchronous>, transform_indices = @transform_3, window_bounds = array<i64: 64, 32>}, {pipeline_mode = #tpu.pipeline_mode<synchronous>, transform_indices = @transform_4, window_bounds = array<i64: 1, 32>}, {pipeline_mode = #tpu.pipeline_mode<synchronous>, transform_indices = @transform_5, window_bounds = array<i64: 32, 16>}, {pipeline_mode = #tpu.pipeline_mode<synchronous>, transform_indices = @transform_6, window_bounds = array<i64: 1, 16>}, {transform_indices = @transform_7, window_bounds = array<i64: 8, 16>}]} {
    %c0 = arith.constant 0 : index
    %c0_0 = arith.constant 0 : index
    %0 = vector.load %arg1[%c0, %c0_0] : memref<8x784xf32, #tpu.memory_space<vmem>>, vector<8x784xf32>
    %c0_1 = arith.constant 0 : index
    %c0_2 = arith.constant 0 : index
    %1 = vector.load %arg2[%c0_1, %c0_2] : memref<784x64xf32, #tpu.memory_space<vmem>>, vector<784x64xf32>
    %cst = arith.constant dense<0.000000e+00> : vector<8x64xf32>
    %2 = tpu.matmul %0, %1, %cst {dimension_numbers = #tpu.dot_dimension_numbers<[1], [0], [0], [1], [0, 0, 1, 1], [], []>, precision = #tpu.contract_precision<fp32>} : vector<8x784xf32>, vector<784x64xf32>, vector<8x64xf32> -> vector<8x64xf32>
    %c0_3 = arith.constant 0 : index
    %c0_4 = arith.constant 0 : index
    %3 = vector.load %arg3[%c0_3, %c0_4] : memref<1x64xf32, #tpu.memory_space<vmem>>, vector<1x64xf32>
    %4 = vector.broadcast %3 : vector<1x64xf32> to vector<8x64xf32>
    %5 = arith.addf %2, %4 : vector<8x64xf32>
    %cst_5 = arith.constant 0.000000e+00 : f32
    %6 = vector.broadcast %cst_5 : f32 to vector<8x64xf32>
    %7 = arith.maximumf %5, %6 : vector<8x64xf32>
    %c0_6 = arith.constant 0 : index
    %c0_7 = arith.constant 0 : index
    %8 = vector.load %arg4[%c0_6, %c0_7] : memref<64x32xf32, #tpu.memory_space<vmem>>, vector<64x32xf32>
    %cst_8 = arith.constant dense<0.000000e+00> : vector<8x32xf32>
    %9 = tpu.matmul %7, %8, %cst_8 {dimension_numbers = #tpu.dot_dimension_numbers<[1], [0], [0], [1], [0, 0, 1, 1], [], []>, precision = #tpu.contract_precision<fp32>} : vector<8x64xf32>, vector<64x32xf32>, vector<8x32xf32> -> vector<8x32xf32>
    %c0_9 = arith.constant 0 : index
    %c0_10 = arith.constant 0 : index
    %10 = vector.load %arg5[%c0_9, %c0_10] : memref<1x32xf32, #tpu.memory_space<vmem>>, vector<1x32xf32>
    %11 = vector.broadcast %10 : vector<1x32xf32> to vector<8x32xf32>
    %12 = arith.addf %9, %11 : vector<8x32xf32>
    %cst_11 = arith.constant 0.000000e+00 : f32
    %13 = vector.broadcast %cst_11 : f32 to vector<8x32xf32>
    %14 = arith.maximumf %12, %13 : vector<8x32xf32>
    %c0_12 = arith.constant 0 : index
    %c0_13 = arith.constant 0 : index
    %15 = vector.load %arg6[%c0_12, %c0_13] : memref<32x16xf32, #tpu.memory_space<vmem>>, vector<32x16xf32>
    %cst_14 = arith.constant dense<0.000000e+00> : vector<8x16xf32>
    %16 = tpu.matmul %14, %15, %cst_14 {dimension_numbers = #tpu.dot_dimension_numbers<[1], [0], [0], [1], [0, 0, 1, 1], [], []>, precision = #tpu.contract_precision<fp32>} : vector<8x32xf32>, vector<32x16xf32>, vector<8x16xf32> -> vector<8x16xf32>
    %c0_15 = arith.constant 0 : index
    %c0_16 = arith.constant 0 : index
    %17 = vector.load %arg7[%c0_15, %c0_16] : memref<1x16xf32, #tpu.memory_space<vmem>>, vector<1x16xf32>
    %18 = vector.broadcast %17 : vector<1x16xf32> to vector<8x16xf32>
    %19 = arith.addf %16, %18 : vector<8x16xf32>
    %c0_17 = arith.constant 0 : index
    %c0_18 = arith.constant 0 : index
    %20 = vector.load %arg8[%c0_17, %c0_18] : memref<8x16xf32, #tpu.memory_space<vmem>>, vector<8x16xf32>
    tpu.vector_store %arg8[%c0_17, %c0_18], %19 {strides = array<i32>} : memref<8x16xf32, #tpu.memory_space<vmem>>, vector<8x16xf32>,
    return
  }
  func.func @transform_0(%arg0: i32) -> (i32, i32) {
    %c0_i32 = arith.constant 0 : i32
    %c0_i32_0 = arith.constant 0 : i32
    return %arg0, %c0_i32 : i32, i32
  }
  func.func @transform_1(%arg0: i32) -> (i32, i32) {
    %c0_i32 = arith.constant 0 : i32
    %c0_i32_0 = arith.constant 0 : i32
    %c0_i32_1 = arith.constant 0 : i32
    return %c0_i32, %c0_i32_0 : i32, i32
  }
  func.func @transform_2(%arg0: i32) -> (i32, i32) {
    %c0_i32 = arith.constant 0 : i32
    %c0_i32_0 = arith.constant 0 : i32
    %c0_i32_1 = arith.constant 0 : i32
    return %c0_i32, %c0_i32_0 : i32, i32
  }
  func.func @transform_3(%arg0: i32) -> (i32, i32) {
    %c0_i32 = arith.constant 0 : i32
    %c0_i32_0 = arith.constant 0 : i32
    %c0_i32_1 = arith.constant 0 : i32
    return %c0_i32, %c0_i32_0 : i32, i32
  }
  func.func @transform_4(%arg0: i32) -> (i32, i32) {
    %c0_i32 = arith.constant 0 : i32
    %c0_i32_0 = arith.constant 0 : i32
    %c0_i32_1 = arith.constant 0 : i32
    return %c0_i32, %c0_i32_0 : i32, i32
  }
  func.func @transform_5(%arg0: i32) -> (i32, i32) {
    %c0_i32 = arith.constant 0 : i32
    %c0_i32_0 = arith.constant 0 : i32
    %c0_i32_1 = arith.constant 0 : i32
    return %c0_i32, %c0_i32_0 : i32, i32
  }
  func.func @transform_6(%arg0: i32) -> (i32, i32) {
    %c0_i32 = arith.constant 0 : i32
    %c0_i32_0 = arith.constant 0 : i32
    %c0_i32_1 = arith.constant 0 : i32
    return %c0_i32, %c0_i32_0 : i32, i32
  }
  func.func @transform_7(%arg0: i32) -> (i32, i32) {
    %c0_i32 = arith.constant 0 : i32
    %c0_i32_0 = arith.constant 0 : i32
    return %arg0, %c0_i32 : i32, i32
  }
}

</mosaic_0001>

<llo_original>
// kernel: tpu_custom_call.1
$region0: #{tpu_custom_call.1}
  #allocation0 [shape = 'u32[]', space=smem, size = 0x4, offset = 0x4, fixed_abs, tag = 'smem constant byte address 0x4 - core index']
  #allocation1 [shape = 'u32[144,128]{1,0:T(1,128)}', space=vmem, size = 0x12000, scoped, tag = 'internal scratch']
  %s0 = inlined_call_operand.vmem [shape: f32[8,784], index: 0, kind: input, shape index: {}]
  %s1 = inlined_call_operand.vmem [shape: f32[784,64], index: 1, kind: input, shape index: {}]
  %s2 = inlined_call_operand.vmem [shape: f32[1,64], index: 2, kind: input, shape index: {}]
  %s3 = inlined_call_operand.vmem [shape: f32[64,32], index: 3, kind: input, shape index: {}]
  %s4 = inlined_call_operand.vmem [shape: f32[1,32], index: 4, kind: input, shape index: {}]
  %s5 = inlined_call_operand.vmem [shape: f32[32,16], index: 5, kind: input, shape index: {}]
  %s6 = inlined_call_operand.vmem [shape: f32[1,16], index: 6, kind: input, shape index: {}]
  %s7 = inlined_call_operand.hbm [shape: f32[8,16], index: 7, kind: output, shape index: {}]
  %s8 = sld [smem:[#allocation0]]
  $region38: #{tpu_custom_call.1} parent=0
    _
  %s10 = ssub.s32 1, %s8
  %s11 = scalar_select 0, %s10, %s8
  $region1: #{tpu_custom_call.1} parent=0
    #allocation2 [shape = 'u8[4096]{0}', space=vmem, size = 0x1000, scoped, tag = 'output window, operand 0, single buffered']
    #allocation3 [shape = 's32[1]{0}', space=sflag, size = 0x4, scoped, tag = 'scoped memory for tpu_custom_call.1']
    %12 = vsyncpa [#allocation3], 0
    // Predicated region
    $region2: #{tpu_custom_call.1} parent=1 // pred_check
      _
    $region3: #{tpu_custom_call.1} parent=1 // pred_check_branch
      %14 = sbr.rel (0) target = $region5
    $region4: #{tpu_custom_call.1} parent=1 // pred_region
      _
    $region5: #{tpu_custom_call.1} parent=1 // pred_fallthru
      _
    // Predicated region
    $region6: #{tpu_custom_call.1} parent=1 // pred_check
      _
    $region7: #{tpu_custom_call.1} parent=1 // pred_check_branch
      %16 = sbr.rel (0) target = $region9
    $region8: #{tpu_custom_call.1} parent=1 // pred_region
      _
    $region9: #{tpu_custom_call.1} parent=1 // pred_fallthru
      _
    // Predicated region
    $region10: #{tpu_custom_call.1} parent=1 // pred_check
      _
    $region11: #{tpu_custom_call.1} parent=1 // pred_check_branch
      %18 = sbr.rel (0) target = $region13
    $region12: #{tpu_custom_call.1} parent=1 // pred_region
      _
    $region13: #{tpu_custom_call.1} parent=1 // pred_fallthru
      _
    // Predicated region
    $region14: #{tpu_custom_call.1} parent=1 // pred_check
      _
    $region15: #{tpu_custom_call.1} parent=1 // pred_check_branch
      %20 = sbr.rel (0) target = $region17
    $region16: #{tpu_custom_call.1} parent=1 // pred_region
      _
    $region17: #{tpu_custom_call.1} parent=1 // pred_fallthru
      _
    // Predicated region
    $region18: #{tpu_custom_call.1} parent=1 // pred_check
      _
    $region19: #{tpu_custom_call.1} parent=1 // pred_check_branch
      %22 = sbr.rel (0) target = $region21
    $region20: #{tpu_custom_call.1} parent=1 // pred_region
      _
    $region21: #{tpu_custom_call.1} parent=1 // pred_fallthru
      _
    // Predicated region
    $region22: #{tpu_custom_call.1} parent=1 // pred_check
      _
    $region23: #{tpu_custom_call.1} parent=1 // pred_check_branch
      %24 = sbr.rel (0) target = $region25
    $region24: #{tpu_custom_call.1} parent=1 // pred_region
      _
    $region25: #{tpu_custom_call.1} parent=1 // pred_fallthru
      _
    // Predicated region
    $region26: #{tpu_custom_call.1} parent=1 // pred_check
      _
    $region27: #{tpu_custom_call.1} parent=1 // pred_check_branch
      %26 = sbr.rel (0) target = $region29
    $region28: #{tpu_custom_call.1} parent=1 // pred_region
      _
    $region29: #{tpu_custom_call.1} parent=1 // pred_fallthru
      _
    %v27 = vld [vmem:[%s0] sm:$0xff]
    %v28 = vld [vmem:[%s0 + $0x8] sm:$0xff]
    %v29 = vld [vmem:[%s0 + $0x10] sm:$0xff]
    %v30 = vld [vmem:[%s0 + $0x18] sm:$0xff]
    %v31 = vld [vmem:[%s0 + $0x20] sm:$0xff]
    %v32 = vld [vmem:[%s0 + $0x28] sm:$0xff]
    %v33 = vld [vmem:[%s0 + $0x30] sm:$0xff]
    %v34 = vld [vmem:[%s1] sm:$0xff]
    %v35 = vld [vmem:[%s1 + $0x8] sm:$0xff]
    %v36 = vld [vmem:[%s1 + $0x10] sm:$0xff]
    %v37 = vld [vmem:[%s1 + $0x18] sm:$0xff]
    %v38 = vld [vmem:[%s1 + $0x20] sm:$0xff]
    %v39 = vld [vmem:[%s1 + $0x28] sm:$0xff]
    %v40 = vld [vmem:[%s1 + $0x30] sm:$0xff]
    %v41 = vld [vmem:[%s1 + $0x38] sm:$0xff]
    %v42 = vld [vmem:[%s1 + $0x40] sm:$0xff]
    %v43 = vld [vmem:[%s1 + $0x48] sm:$0xff]
    %v44 = vld [vmem:[%s1 + $0x50] sm:$0xff]
    %v45 = vld [vmem:[%s1 + $0x58] sm:$0xff]
    %v46 = vld [vmem:[%s1 + $0x60] sm:$0xff]
    %v47 = vld [vmem:[%s1 + $0x68] sm:$0xff]
    %v48 = vld [vmem:[%s1 + $0x70] sm:$0xff]
    %v49 = vld [vmem:[%s1 + $0x78] sm:$0xff]
    %v50 = vld [vmem:[%s1 + $0x80] sm:$0xff]
    %v51 = vld [vmem:[%s1 + $0x88] sm:$0xff]
    %v52 = vld [vmem:[%s1 + $0x90] sm:$0xff]
    %v53 = vld [vmem:[%s1 + $0x98] sm:$0xff]
    %v54 = vld [vmem:[%s1 + $0xa0] sm:$0xff]
    %v55 = vld [vmem:[%s1 + $0xa8] sm:$0xff]
    %v56 = vld [vmem:[%s1 + $0xb0] sm:$0xff]
    %v57 = vld [vmem:[%s1 + $0xb8] sm:$0xff]
    %v58 = vld [vmem:[%s1 + $0xc0] sm:$0xff]
    %v59 = vld [vmem:[%s1 + $0xc8] sm:$0xff]
    %v60 = vld [vmem:[%s1 + $0xd0] sm:$0xff]
    %v61 = vld [vmem:[%s1 + $0xd8] sm:$0xff]
    %v62 = vld [vmem:[%s1 + $0xe0] sm:$0xff]
    %v63 = vld [vmem:[%s1 + $0xe8] sm:$0xff]
    %v64 = vld [vmem:[%s1 + $0xf0] sm:$0xff]
    %v65 = vld [vmem:[%s1 + $0xf8] sm:$0xff]
    %v66 = vld [vmem:[%s1 + $0x100] sm:$0xff]
    %v67 = vld [vmem:[%s1 + $0x108] sm:$0xff]
    %v68 = vld [vmem:[%s1 + $0x110] sm:$0xff]
    %v69 = vld [vmem:[%s1 + $0x118] sm:$0xff]
    %v70 = vld [vmem:[%s1 + $0x120] sm:$0xff]
    %v71 = vld [vmem:[%s1 + $0x128] sm:$0xff]
    %v72 = vld [vmem:[%s1 + $0x130] sm:$0xff]
    %v73 = vld [vmem:[%s1 + $0x138] sm:$0xff]
    %v74 = vld [vmem:[%s1 + $0x140] sm:$0xff]
    %v75 = vld [vmem:[%s1 + $0x148] sm:$0xff]
    %v76 = vld [vmem:[%s1 + $0x150] sm:$0xff]
    %v77 = vld [vmem:[%s1 + $0x158] sm:$0xff]
    %v78 = vld [vmem:[%s1 + $0x160] sm:$0xff]
    %v79 = vld [vmem:[%s1 + $0x168] sm:$0xff]
    %v80 = vld [vmem:[%s1 + $0x170] sm:$0xff]
    %v81 = vld [vmem:[%s1 + $0x178] sm:$0xff]
    %v82 = vld [vmem:[%s1 + $0x180] sm:$0xff]
    %v83 = vld [vmem:[%s1 + $0x188] sm:$0xff]
    %v84 = vld [vmem:[%s1 + $0x190] sm:$0xff]
    %v85 = vld [vmem:[%s1 + $0x198] sm:$0xff]
    %v86 = vld [vmem:[%s1 + $0x1a0] sm:$0xff]
    %v87 = vld [vmem:[%s1 + $0x1a8] sm:$0xff]
    %v88 = vld [vmem:[%s1 + $0x1b0] sm:$0xff]
    %v89 = vld [vmem:[%s1 + $0x1b8] sm:$0xff]
    %v90 = vld [vmem:[%s1 + $0x1c0] sm:$0xff]
    %v91 = vld [vmem:[%s1 + $0x1c8] sm:$0xff]
    %v92 = vld [vmem:[%s1 + $0x1d0] sm:$0xff]
    %v93 = vld [vmem:[%s1 + $0x1d8] sm:$0xff]
    %v94 = vld [vmem:[%s1 + $0x1e0] sm:$0xff]
    %v95 = vld [vmem:[%s1 + $0x1e8] sm:$0xff]
    %v96 = vld [vmem:[%s1 + $0x1f0] sm:$0xff]
    %v97 = vld [vmem:[%s1 + $0x1f8] sm:$0xff]
    %v98 = vld [vmem:[%s1 + $0x200] sm:$0xff]
    %v99 = vld [vmem:[%s1 + $0x208] sm:$0xff]
    %v100 = vld [vmem:[%s1 + $0x210] sm:$0xff]
    %v101 = vld [vmem:[%s1 + $0x218] sm:$0xff]
    %v102 = vld [vmem:[%s1 + $0x220] sm:$0xff]
    %v103 = vld [vmem:[%s1 + $0x228] sm:$0xff]
    %v104 = vld [vmem:[%s1 + $0x230] sm:$0xff]
    %v105 = vld [vmem:[%s1 + $0x238] sm:$0xff]
    %v106 = vld [vmem:[%s1 + $0x240] sm:$0xff]
    %v107 = vld [vmem:[%s1 + $0x248] sm:$0xff]
    %v108 = vld [vmem:[%s1 + $0x250] sm:$0xff]
    %v109 = vld [vmem:[%s1 + $0x258] sm:$0xff]
    %v110 = vld [vmem:[%s1 + $0x260] sm:$0xff]
    %v111 = vld [vmem:[%s1 + $0x268] sm:$0xff]
    %v112 = vld [vmem:[%s1 + $0x270] sm:$0xff]
    %v113 = vld [vmem:[%s1 + $0x278] sm:$0xff]
    %v114 = vld [vmem:[%s1 + $0x280] sm:$0xff]
    %v115 = vld [vmem:[%s1 + $0x288] sm:$0xff]
    %v116 = vld [vmem:[%s1 + $0x290] sm:$0xff]
    %v117 = vld [vmem:[%s1 + $0x298] sm:$0xff]
    %v118 = vld [vmem:[%s1 + $0x2a0] sm:$0xff]
    %v119 = vld [vmem:[%s1 + $0x2a8] sm:$0xff]
    %v120 = vld [vmem:[%s1 + $0x2b0] sm:$0xff]
    %v121 = vld [vmem:[%s1 + $0x2b8] sm:$0xff]
    %v122 = vld [vmem:[%s1 + $0x2c0] sm:$0xff]
    %v123 = vld [vmem:[%s1 + $0x2c8] sm:$0xff]
    %v124 = vld [vmem:[%s1 + $0x2d0] sm:$0xff]
    %v125 = vld [vmem:[%s1 + $0x2d8] sm:$0xff]
    %v126 = vld [vmem:[%s1 + $0x2e0] sm:$0xff]
    %v127 = vld [vmem:[%s1 + $0x2e8] sm:$0xff]
    %v128 = vld [vmem:[%s1 + $0x2f0] sm:$0xff]
    %v129 = vld [vmem:[%s1 + $0x2f8] sm:$0xff]
    %v130 = vld [vmem:[%s1 + $0x300] sm:$0xff]
    %v131 = vld [vmem:[%s1 + $0x308] sm:$0xff]
    %v132 = vld [vmem:[%s2] sm:$0x1]
    %v134 = vlaneseq
    %v135 = vshrl.u32 %v134, 7
    %v136 = vsub.s32 0, %v135
    %v137 = vrot.slane %v132, %v136
    %vm139 = vcmask 130048
    %v141 = vsel %vm139, %v33, 0
    %143 = vmatprep.subr.mxu0 0.0
    %v144 = vand.u32 %v34, 4294901760
    %145 = vmatpush1.msra.mxu0 %v144
    %146 = vmatprep.subr.mxu0 0.0
    %v147 = vand.u32 %v35, 4294901760
    %148 = vmatpush1.msra.mxu0 %v147
    %149 = vmatprep.subr.mxu0 0.0
    %v150 = vand.u32 %v36, 4294901760
    %151 = vmatpush1.msra.mxu0 %v150
    %152 = vmatprep.subr.mxu0 0.0
    %v153 = vand.u32 %v37, 4294901760
    %154 = vmatpush1.msra.mxu0 %v153
    %155 = vmatprep.subr.mxu0 0.0
    %v156 = vand.u32 %v38, 4294901760
    %157 = vmatpush1.msra.mxu0 %v156
    %158 = vmatprep.subr.mxu0 0.0
    %v159 = vand.u32 %v39, 4294901760
    %160 = vmatpush1.msra.mxu0 %v159
    %161 = vmatprep.subr.mxu0 0.0
    %v162 = vand.u32 %v40, 4294901760
    %163 = vmatpush1.msra.mxu0 %v162
    %164 = vmatprep.subr.mxu0 0.0
    %v165 = vand.u32 %v41, 4294901760
    %166 = vmatpush1.msra.mxu0 %v165
    %167 = vmatprep.subr.mxu0 0.0
    %v168 = vand.u32 %v42, 4294901760
    %169 = vmatpush1.msra.mxu0 %v168
    %170 = vmatprep.subr.mxu0 0.0
    %v171 = vand.u32 %v43, 4294901760
    %172 = vmatpush1.msra.mxu0 %v171
    %173 = vmatprep.subr.mxu0 0.0
    %v174 = vand.u32 %v44, 4294901760
    %175 = vmatpush1.msra.mxu0 %v174
    %176 = vmatprep.subr.mxu0 0.0
    %v177 = vand.u32 %v45, 4294901760
    %178 = vmatpush1.msra.mxu0 %v177
    %179 = vmatprep.subr.mxu0 0.0
    %v180 = vand.u32 %v46, 4294901760
    %181 = vmatpush1.msra.mxu0 %v180
    %182 = vmatprep.subr.mxu0 0.0
    %v183 = vand.u32 %v47, 4294901760
    %184 = vmatpush1.msra.mxu0 %v183
    %185 = vmatprep.subr.mxu0 0.0
    %v186 = vand.u32 %v48, 4294901760
    %187 = vmatpush1.msra.mxu0 %v186
    %188 = vmatprep.subr.mxu0 0.0
    %v189 = vand.u32 %v49, 4294901760
    %190 = vmatpush1.msra.mxu0 %v189
    %191 = vmatprep.subr.mxu0 0.0
    %v192 = vand.u32 %v50, 4294901760
    %193 = vmatpush1.msra.mxu0 %v192
    %194 = vmatprep.subr.mxu0 0.0
    %v195 = vand.u32 %v51, 4294901760
    %196 = vmatpush1.msra.mxu0 %v195
    %197 = vmatprep.subr.mxu0 0.0
    %v198 = vand.u32 %v52, 4294901760
    %199 = vmatpush1.msra.mxu0 %v198
    %200 = vmatprep.subr.mxu0 0.0
    %v201 = vand.u32 %v53, 4294901760
    %202 = vmatpush1.msra.mxu0 %v201
    %203 = vmatprep.subr.mxu0 0.0
    %v204 = vand.u32 %v54, 4294901760
    %205 = vmatpush1.msra.mxu0 %v204
    %206 = vmatprep.subr.mxu0 0.0
    %v207 = vand.u32 %v55, 4294901760
    %208 = vmatpush1.msra.mxu0 %v207
    %209 = vmatprep.subr.mxu0 0.0
    %v210 = vand.u32 %v56, 4294901760
    %211 = vmatpush1.msra.mxu0 %v210
    %212 = vmatprep.subr.mxu0 0.0
    %v213 = vand.u32 %v57, 4294901760
    %214 = vmatpush1.msra.mxu0 %v213
    %215 = vmatprep.subr.mxu0 0.0
    %v216 = vand.u32 %v58, 4294901760
    %217 = vmatpush1.msra.mxu0 %v216
    %218 = vmatprep.subr.mxu0 0.0
    %v219 = vand.u32 %v59, 4294901760
    %220 = vmatpush1.msra.mxu0 %v219
    %221 = vmatprep.subr.mxu0 0.0
    %v222 = vand.u32 %v60, 4294901760
    %223 = vmatpush1.msra.mxu0 %v222
    %224 = vmatprep.subr.mxu0 0.0
    %v225 = vand.u32 %v61, 4294901760
    %226 = vmatpush1.msra.mxu0 %v225
    %227 = vmatprep.subr.mxu0 0.0
    %v228 = vand.u32 %v62, 4294901760
    %229 = vmatpush1.msra.mxu0 %v228
    %230 = vmatprep.subr.mxu0 0.0
    %v231 = vand.u32 %v63, 4294901760
    %232 = vmatpush1.msra.mxu0 %v231
    %233 = vmatprep.subr.mxu0 0.0
    %v234 = vand.u32 %v64, 4294901760
    %235 = vmatpush1.msra.mxu0 %v234
    %236 = vmatprep.subr.mxu0 0.0
    %v237 = vand.u32 %v65, 4294901760
    %238 = vmatpush1.msra.mxu0 %v237
    %v239 = vand.u32 %v28, 4294901760
    %v240 = vsub.f32 %v28, %v239
    %v241 = vand.u32 %v240, 4294901760
    %v242 = vsub.f32 %v240, %v241
    %v243 = vand.u32 %v242, 4294901760
    %244 = vmatprep.mubr.f32.mxu0 %v243
    %v245 = vand.u32 %v27, 4294901760
    %v246 = vsub.f32 %v27, %v245
    %v247 = vand.u32 %v246, 4294901760
    %v248 = vsub.f32 %v246, %v247
    %v249 = vand.u32 %v248, 4294901760
    %250 = vmatmul.mubr.f32.gmra.mrb[0].mxu0 %v249
    %v251 = vpop.f32.mrb[0].mxu0
    %v252 = vadd.f32 %v137, %v251
    %v253 = vpop.f32.mrb[0].mxu0
    %254 = vdwg.mxu0
    %255 = vmatprep.subr.mxu0 0.0
    %v256 = vand.u32 %v34, 4294901760
    %v257 = vsub.f32 %v34, %v256
    %v258 = vand.u32 %v257, 4294901760
    %v259 = vsub.f32 %v257, %v258
    %v260 = vand.u32 %v259, 4294901760
    %261 = vmatpush1.msra.mxu0 %v260
    %262 = vmatprep.subr.mxu0 0.0
    %v263 = vand.u32 %v35, 4294901760
    %v264 = vsub.f32 %v35, %v263
    %v265 = vand.u32 %v264, 4294901760
    %v266 = vsub.f32 %v264, %v265
    %v267 = vand.u32 %v266, 4294901760
    %268 = vmatpush1.msra.mxu0 %v267
    %269 = vmatprep.subr.mxu0 0.0
    %v270 = vand.u32 %v36, 4294901760
    %v271 = vsub.f32 %v36, %v270
    %v272 = vand.u32 %v271, 4294901760
    %v273 = vsub.f32 %v271, %v272
    %v274 = vand.u32 %v273, 4294901760
    %275 = vmatpush1.msra.mxu0 %v274
    %276 = vmatprep.subr.mxu0 0.0
    %v277 = vand.u32 %v37, 4294901760
    %v278 = vsub.f32 %v37, %v277
    %v279 = vand.u32 %v278, 4294901760
    %v280 = vsub.f32 %v278, %v279
    %v281 = vand.u32 %v280, 4294901760
    %282 = vmatpush1.msra.mxu0 %v281
    %283 = vmatprep.subr.mxu0 0.0
    %v284 = vand.u32 %v38, 4294901760
    %v285 = vsub.f32 %v38, %v284
    %v286 = vand.u32 %v285, 4294901760
    %v287 = vsub.f32 %v285, %v286
    %v288 = vand.u32 %v287, 4294901760
    %289 = vmatpush1.msra.mxu0 %v288
    %290 = vmatprep.subr.mxu0 0.0
    %v291 = vand.u32 %v39, 4294901760
    %v292 = vsub.f32 %v39, %v291
    %v293 = vand.u32 %v292, 4294901760
    %v294 = vsub.f32 %v292, %v293
    %v295 = vand.u32 %v294, 4294901760
    %296 = vmatpush1.msra.mxu0 %v295
    %297 = vmatprep.subr.mxu0 0.0
    %v298 = vand.u32 %v40, 4294901760
    %v299 = vsub.f32 %v40, %v298
    %v300 = vand.u32 %v299, 4294901760
    %v301 = vsub.f32 %v299, %v300
    %v302 = vand.u32 %v301, 4294901760
    %303 = vmatpush1.msra.mxu0 %v302
    %304 = vmatprep.subr.mxu0 0.0
    %v305 = vand.u32 %v41, 4294901760
    %v306 = vsub.f32 %v41, %v305
    %v307 = vand.u32 %v306, 4294901760
    %v308 = vsub.f32 %v306, %v307
    %v309 = vand.u32 %v308, 4294901760
    %310 = vmatpush1.msra.mxu0 %v309
    %311 = vmatprep.subr.mxu0 0.0
    %v312 = vand.u32 %v42, 4294901760
    %v313 = vsub.f32 %v42, %v312
    %v314 = vand.u32 %v313, 4294901760
    %v315 = vsub.f32 %v313, %v314
    %v316 = vand.u32 %v315, 4294901760
    %317 = vmatpush1.msra.mxu0 %v316
    %318 = vmatprep.subr.mxu0 0.0
    %v319 = vand.u32 %v43, 4294901760
    %v320 = vsub.f32 %v43, %v319
    %v321 = vand.u32 %v320, 4294901760
    %v322 = vsub.f32 %v320, %v321
    %v323 = vand.u32 %v322, 4294901760
    %324 = vmatpush1.msra.mxu0 %v323
    %325 = vmatprep.subr.mxu0 0.0
    %v326 = vand.u32 %v44, 4294901760
    %v327 = vsub.f32 %v44, %v326
    %v328 = vand.u32 %v327, 4294901760
    %v329 = vsub.f32 %v327, %v328
    %v330 = vand.u32 %v329, 4294901760
    %331 = vmatpush1.msra.mxu0 %v330
    %332 = vmatprep.subr.mxu0 0.0
    %v333 = vand.u32 %v45, 4294901760
    %v334 = vsub.f32 %v45, %v333
    %v335 = vand.u32 %v334, 4294901760
    %v336 = vsub.f32 %v334, %v335
    %v337 = vand.u32 %v336, 4294901760
    %338 = vmatpush1.msra.mxu0 %v337
    %339 = vmatprep.subr.mxu0 0.0
    %v340 = vand.u32 %v46, 4294901760
    %v341 = vsub.f32 %v46, %v340
    %v342 = vand.u32 %v341, 4294901760
    %v343 = vsub.f32 %v341, %v342
    %v344 = vand.u32 %v343, 4294901760
    %345 = vmatpush1.msra.mxu0 %v344
    %346 = vmatprep.subr.mxu0 0.0
    %v347 = vand.u32 %v47, 4294901760
    %v348 = vsub.f32 %v47, %v347
    %v349 = vand.u32 %v348, 4294901760
    %v350 = vsub.f32 %v348, %v349
    %v351 = vand.u32 %v350, 4294901760
    %352 = vmatpush1.msra.mxu0 %v351
    %353 = vmatprep.subr.mxu0 0.0
    %v354 = vand.u32 %v48, 4294901760
    %v355 = vsub.f32 %v48, %v354
    %v356 = vand.u32 %v355, 4294901760
    %v357 = vsub.f32 %v355, %v356
    %v358 = vand.u32 %v357, 4294901760
    %359 = vmatpush1.msra.mxu0 %v358
    %360 = vmatprep.subr.mxu0 0.0
    %v361 = vand.u32 %v49, 4294901760
    %v362 = vsub.f32 %v49, %v361
    %v363 = vand.u32 %v362, 4294901760
    %v364 = vsub.f32 %v362, %v363
    %v365 = vand.u32 %v364, 4294901760
    %366 = vmatpush1.msra.mxu0 %v365
    %367 = vmatprep.subr.mxu0 0.0
    %v368 = vand.u32 %v50, 4294901760
    %v369 = vsub.f32 %v50, %v368
    %v370 = vand.u32 %v369, 4294901760
    %v371 = vsub.f32 %v369, %v370
    %v372 = vand.u32 %v371, 4294901760
    %373 = vmatpush1.msra.mxu0 %v372
    %374 = vmatprep.subr.mxu0 0.0
    %v375 = vand.u32 %v51, 4294901760
    %v376 = vsub.f32 %v51, %v375
    %v377 = vand.u32 %v376, 4294901760
    %v378 = vsub.f32 %v376, %v377
    %v379 = vand.u32 %v378, 4294901760
    %380 = vmatpush1.msra.mxu0 %v379
    %381 = vmatprep.subr.mxu0 0.0
    %v382 = vand.u32 %v52, 4294901760
    %v383 = vsub.f32 %v52, %v382
    %v384 = vand.u32 %v383, 4294901760
    %v385 = vsub.f32 %v383, %v384
    %v386 = vand.u32 %v385, 4294901760
    %387 = vmatpush1.msra.mxu0 %v386
    %388 = vmatprep.subr.mxu0 0.0
    %v389 = vand.u32 %v53, 4294901760
    %v390 = vsub.f32 %v53, %v389
    %v391 = vand.u32 %v390, 4294901760
    %v392 = vsub.f32 %v390, %v391
    %v393 = vand.u32 %v392, 4294901760
    %394 = vmatpush1.msra.mxu0 %v393
    %395 = vmatprep.subr.mxu0 0.0
    %v396 = vand.u32 %v54, 4294901760
    %v397 = vsub.f32 %v54, %v396
    %v398 = vand.u32 %v397, 4294901760
    %v399 = vsub.f32 %v397, %v398
    %v400 = vand.u32 %v399, 4294901760
    %401 = vmatpush1.msra.mxu0 %v400
    %402 = vmatprep.subr.mxu0 0.0
    %v403 = vand.u32 %v55, 4294901760
    %v404 = vsub.f32 %v55, %v403
    %v405 = vand.u32 %v404, 4294901760
    %v406 = vsub.f32 %v404, %v405
    %v407 = vand.u32 %v406, 4294901760
    %408 = vmatpush1.msra.mxu0 %v407
    %409 = vmatprep.subr.mxu0 0.0
    %v410 = vand.u32 %v56, 4294901760
    %v411 = vsub.f32 %v56, %v410
    %v412 = vand.u32 %v411, 4294901760
    %v413 = vsub.f32 %v411, %v412
    %v414 = vand.u32 %v413, 4294901760
    %415 = vmatpush1.msra.mxu0 %v414
    %416 = vmatprep.subr.mxu0 0.0
    %v417 = vand.u32 %v57, 4294901760
    %v418 = vsub.f32 %v57, %v417
    %v419 = vand.u32 %v418, 4294901760
    %v420 = vsub.f32 %v418, %v419
    %v421 = vand.u32 %v420, 4294901760
    %422 = vmatpush1.msra.mxu0 %v421
    %423 = vmatprep.subr.mxu0 0.0
    %v424 = vand.u32 %v58, 4294901760
    %v425 = vsub.f32 %v58, %v424
    %v426 = vand.u32 %v425, 4294901760
    %v427 = vsub.f32 %v425, %v426
    %v428 = vand.u32 %v427, 4294901760
    %429 = vmatpush1.msra.mxu0 %v428
    %430 = vmatprep.subr.mxu0 0.0
    %v431 = vand.u32 %v59, 4294901760
    %v432 = vsub.f32 %v59, %v431
    %v433 = vand.u32 %v432, 4294901760
    %v434 = vsub.f32 %v432, %v433
    %v435 = vand.u32 %v434, 4294901760
    %436 = vmatpush1.msra.mxu0 %v435
    %437 = vmatprep.subr.mxu0 0.0
    %v438 = vand.u32 %v60, 4294901760
    %v439 = vsub.f32 %v60, %v438
    %v440 = vand.u32 %v439, 4294901760
    %v441 = vsub.f32 %v439, %v440
    %v442 = vand.u32 %v441, 4294901760
    %443 = vmatpush1.msra.mxu0 %v442
    %444 = vmatprep.subr.mxu0 0.0
    %v445 = vand.u32 %v61, 4294901760
    %v446 = vsub.f32 %v61, %v445
    %v447 = vand.u32 %v446, 4294901760
    %v448 = vsub.f32 %v446, %v447
    %v449 = vand.u32 %v448, 4294901760
    %450 = vmatpush1.msra.mxu0 %v449
    %451 = vmatprep.subr.mxu0 0.0
    %v452 = vand.u32 %v62, 4294901760
    %v453 = vsub.f32 %v62, %v452
    %v454 = vand.u32 %v453, 4294901760
    %v455 = vsub.f32 %v453, %v454
    %v456 = vand.u32 %v455, 4294901760
    %457 = vmatpush1.msra.mxu0 %v456
    %458 = vmatprep.subr.mxu0 0.0
    %v459 = vand.u32 %v63, 4294901760
    %v460 = vsub.f32 %v63, %v459
    %v461 = vand.u32 %v460, 4294901760
    %v462 = vsub.f32 %v460, %v461
    %v463 = vand.u32 %v462, 4294901760
    %464 = vmatpush1.msra.mxu0 %v463
    %465 = vmatprep.subr.mxu0 0.0
    %v466 = vand.u32 %v64, 4294901760
    %v467 = vsub.f32 %v64, %v466
    %v468 = vand.u32 %v467, 4294901760
    %v469 = vsub.f32 %v467, %v468
    %v470 = vand.u32 %v469, 4294901760
    %471 = vmatpush1.msra.mxu0 %v470
    %472 = vmatprep.subr.mxu0 0.0
    %v473 = vand.u32 %v65, 4294901760
    %v474 = vsub.f32 %v65, %v473
    %v475 = vand.u32 %v474, 4294901760
    %v476 = vsub.f32 %v474, %v475
    %v477 = vand.u32 %v476, 4294901760
    %478 = vmatpush1.msra.mxu0 %v477
    %v479 = vand.u32 %v28, 4294901760
    %480 = vmatprep.mubr.f32.mxu0 %v479
    %v481 = vand.u32 %v27, 4294901760
    %482 = vmatmul.mubr.f32.gmra.mrb[0].mxu0 %v481
    %v483 = vpop.f32.mrb[0].mxu0
    %v484 = vadd.f32 %v252, %v483
    %v485 = vpop.f32.mrb[0].mxu0
    %486 = vdwg.mxu0
    %487 = vmatprep.subr.mxu0 0.0
    %v488 = vand.u32 %v34, 4294901760
    %v489 = vsub.f32 %v34, %v488
    %490 = vmatpush1.msra.mxu0 %v489
    %491 = vmatprep.subr.mxu0 0.0
    %v492 = vand.u32 %v35, 4294901760
    %v493 = vsub.f32 %v35, %v492
    %494 = vmatpush1.msra.mxu0 %v493
    %495 = vmatprep.subr.mxu0 0.0
    %v496 = vand.u32 %v36, 4294901760
    %v497 = vsub.f32 %v36, %v496
    %498 = vmatpush1.msra.mxu0 %v497
    %499 = vmatprep.subr.mxu0 0.0
    %v500 = vand.u32 %v37, 4294901760
    %v501 = vsub.f32 %v37, %v500
    %502 = vmatpush1.msra.mxu0 %v501
    %503 = vmatprep.subr.mxu0 0.0
    %v504 = vand.u32 %v38, 4294901760
    %v505 = vsub.f32 %v38, %v504
    %506 = vmatpush1.msra.mxu0 %v505
    %507 = vmatprep.subr.mxu0 0.0
    %v508 = vand.u32 %v39, 4294901760
    %v509 = vsub.f32 %v39, %v508
    %510 = vmatpush1.msra.mxu0 %v509
    %511 = vmatprep.subr.mxu0 0.0
    %v512 = vand.u32 %v40, 4294901760
    %v513 = vsub.f32 %v40, %v512
    %514 = vmatpush1.msra.mxu0 %v513
    %515 = vmatprep.subr.mxu0 0.0
    %v516 = vand.u32 %v41, 4294901760
    %v517 = vsub.f32 %v41, %v516
    %518 = vmatpush1.msra.mxu0 %v517
    %519 = vmatprep.subr.mxu0 0.0
    %v520 = vand.u32 %v42, 4294901760
    %v521 = vsub.f32 %v42, %v520
    %522 = vmatpush1.msra.mxu0 %v521
    %523 = vmatprep.subr.mxu0 0.0
    %v524 = vand.u32 %v43, 4294901760
    %v525 = vsub.f32 %v43, %v524
    %526 = vmatpush1.msra.mxu0 %v525
    %527 = vmatprep.subr.mxu0 0.0
    %v528 = vand.u32 %v44, 4294901760
    %v529 = vsub.f32 %v44, %v528
    %530 = vmatpush1.msra.mxu0 %v529
    %531 = vmatprep.subr.mxu0 0.0
    %v532 = vand.u32 %v45, 4294901760
    %v533 = vsub.f32 %v45, %v532
    %534 = vmatpush1.msra.mxu0 %v533
    %535 = vmatprep.subr.mxu0 0.0
    %v536 = vand.u32 %v46, 4294901760
    %v537 = vsub.f32 %v46, %v536
    %538 = vmatpush1.msra.mxu0 %v537
    %539 = vmatprep.subr.mxu0 0.0
    %v540 = vand.u32 %v47, 4294901760
    %v541 = vsub.f32 %v47, %v540
    %542 = vmatpush1.msra.mxu0 %v541
    %543 = vmatprep.subr.mxu0 0.0
    %v544 = vand.u32 %v48, 4294901760
    %v545 = vsub.f32 %v48, %v544
    %546 = vmatpush1.msra.mxu0 %v545
    %547 = vmatprep.subr.mxu0 0.0
    %v548 = vand.u32 %v49, 4294901760
    %v549 = vsub.f32 %v49, %v548
    %550 = vmatpush1.msra.mxu0 %v549
    %551 = vmatprep.subr.mxu0 0.0
    %v552 = vand.u32 %v50, 4294901760
    %v553 = vsub.f32 %v50, %v552
    %554 = vmatpush1.msra.mxu0 %v553
    %555 = vmatprep.subr.mxu0 0.0
    %v556 = vand.u32 %v51, 4294901760
    %v557 = vsub.f32 %v51, %v556
    %558 = vmatpush1.msra.mxu0 %v557
    %559 = vmatprep.subr.mxu0 0.0
    %v560 = vand.u32 %v52, 4294901760
    %v561 = vsub.f32 %v52, %v560
    %562 = vmatpush1.msra.mxu0 %v561
    %563 = vmatprep.subr.mxu0 0.0
    %v564 = vand.u32 %v53, 4294901760
    %v565 = vsub.f32 %v53, %v564
    %566 = vmatpush1.msra.mxu0 %v565
    %567 = vmatprep.subr.mxu0 0.0
    %v568 = vand.u32 %v54, 4294901760
    %v569 = vsub.f32 %v54, %v568
    %570 = vmatpush1.msra.mxu0 %v569
    %571 = vmatprep.subr.mxu0 0.0
    %v572 = vand.u32 %v55, 4294901760
    %v573 = vsub.f32 %v55, %v572
    %574 = vmatpush1.msra.mxu0 %v573
    %575 = vmatprep.subr.mxu0 0.0
    %v576 = vand.u32 %v56, 4294901760
    %v577 = vsub.f32 %v56, %v576
    %578 = vmatpush1.msra.mxu0 %v577
    %579 = vmatprep.subr.mxu0 0.0
    %v580 = vand.u32 %v57, 4294901760
    %v581 = vsub.f32 %v57, %v580
    %582 = vmatpush1.msra.mxu0 %v581
    %583 = vmatprep.subr.mxu0 0.0
    %v584 = vand.u32 %v58, 4294901760
    %v585 = vsub.f32 %v58, %v584
    %586 = vmatpush1.msra.mxu0 %v585
    %587 = vmatprep.subr.mxu0 0.0
    %v588 = vand.u32 %v59, 4294901760
    %v589 = vsub.f32 %v59, %v588
    %590 = vmatpush1.msra.mxu0 %v589
    %591 = vmatprep.subr.mxu0 0.0
    %v592 = vand.u32 %v60, 4294901760
    %v593 = vsub.f32 %v60, %v592
    %594 = vmatpush1.msra.mxu0 %v593
    %595 = vmatprep.subr.mxu0 0.0
    %v596 = vand.u32 %v61, 4294901760
    %v597 = vsub.f32 %v61, %v596
    %598 = vmatpush1.msra.mxu0 %v597
    %599 = vmatprep.subr.mxu0 0.0
    %v600 = vand.u32 %v62, 4294901760
    %v601 = vsub.f32 %v62, %v600
    %602 = vmatpush1.msra.mxu0 %v601
    %603 = vmatprep.subr.mxu0 0.0
    %v604 = vand.u32 %v63, 4294901760
    %v605 = vsub.f32 %v63, %v604
    %606 = vmatpush1.msra.mxu0 %v605
    %607 = vmatprep.subr.mxu0 0.0
    %v608 = vand.u32 %v64, 4294901760
    %v609 = vsub.f32 %v64, %v608
    %610 = vmatpush1.msra.mxu0 %v609
    %611 = vmatprep.subr.mxu0 0.0
    %v612 = vand.u32 %v65, 4294901760
    %v613 = vsub.f32 %v65, %v612
    %614 = vmatpush1.msra.mxu0 %v613
    %v615 = vand.u32 %v28, 4294901760
    %v616 = vsub.f32 %v28, %v615
    %617 = vmatprep.mubr.f32.mxu0 %v616
    %v618 = vand.u32 %v27, 4294901760
    %v619 = vsub.f32 %v27, %v618
    %620 = vmatmul.mubr.f32.gmra.mrb[0].mxu0 %v619
    %v621 = vpop.f32.mrb[0].mxu0
    %v622 = vadd.f32 %v484, %v621
    %v623 = vpop.f32.mrb[0].mxu0
    %624 = vdwg.mxu0
    %625 = vmatprep.subr.mxu0 0.0
    %v626 = vand.u32 %v34, 4294901760
    %627 = vmatpush1.msra.mxu0 %v626
    %628 = vmatprep.subr.mxu0 0.0
    %v629 = vand.u32 %v35, 4294901760
    %630 = vmatpush1.msra.mxu0 %v629
    %631 = vmatprep.subr.mxu0 0.0
    %v632 = vand.u32 %v36, 4294901760
    %633 = vmatpush1.msra.mxu0 %v632
    %634 = vmatprep.subr.mxu0 0.0
    %v635 = vand.u32 %v37, 4294901760
    %636 = vmatpush1.msra.mxu0 %v635
    %637 = vmatprep.subr.mxu0 0.0
    %v638 = vand.u32 %v38, 4294901760
    %639 = vmatpush1.msra.mxu0 %v638
    %640 = vmatprep.subr.mxu0 0.0
    %v641 = vand.u32 %v39, 4294901760
    %642 = vmatpush1.msra.mxu0 %v641
    %643 = vmatprep.subr.mxu0 0.0
    %v644 = vand.u32 %v40, 4294901760
    %645 = vmatpush1.msra.mxu0 %v644
    %646 = vmatprep.subr.mxu0 0.0
    %v647 = vand.u32 %v41, 4294901760
    %648 = vmatpush1.msra.mxu0 %v647
    %649 = vmatprep.subr.mxu0 0.0
    %v650 = vand.u32 %v42, 4294901760
    %651 = vmatpush1.msra.mxu0 %v650
    %652 = vmatprep.subr.mxu0 0.0
    %v653 = vand.u32 %v43, 4294901760
    %654 = vmatpush1.msra.mxu0 %v653
    %655 = vmatprep.subr.mxu0 0.0
    %v656 = vand.u32 %v44, 4294901760
    %657 = vmatpush1.msra.mxu0 %v656
    %658 = vmatprep.subr.mxu0 0.0
    %v659 = vand.u32 %v45, 4294901760
    %660 = vmatpush1.msra.mxu0 %v659
    %661 = vmatprep.subr.mxu0 0.0
    %v662 = vand.u32 %v46, 4294901760
    %663 = vmatpush1.msra.mxu0 %v662
    %664 = vmatprep.subr.mxu0 0.0
    %v665 = vand.u32 %v47, 4294901760
    %666 = vmatpush1.msra.mxu0 %v665
    %667 = vmatprep.subr.mxu0 0.0
    %v668 = vand.u32 %v48, 4294901760
    %669 = vmatpush1.msra.mxu0 %v668
    %670 = vmatprep.subr.mxu0 0.0
    %v671 = vand.u32 %v49, 4294901760
    %672 = vmatpush1.msra.mxu0 %v671
    %673 = vmatprep.subr.mxu0 0.0
    %v674 = vand.u32 %v50, 4294901760
    %675 = vmatpush1.msra.mxu0 %v674
    %676 = vmatprep.subr.mxu0 0.0
    %v677 = vand.u32 %v51, 4294901760
    %678 = vmatpush1.msra.mxu0 %v677
    %679 = vmatprep.subr.mxu0 0.0
    %v680 = vand.u32 %v52, 4294901760
    %681 = vmatpush1.msra.mxu0 %v680
    %682 = vmatprep.subr.mxu0 0.0
    %v683 = vand.u32 %v53, 4294901760
    %684 = vmatpush1.msra.mxu0 %v683
    %685 = vmatprep.subr.mxu0 0.0
    %v686 = vand.u32 %v54, 4294901760
    %687 = vmatpush1.msra.mxu0 %v686
    %688 = vmatprep.subr.mxu0 0.0
    %v689 = vand.u32 %v55, 4294901760
    %690 = vmatpush1.msra.mxu0 %v689
    %691 = vmatprep.subr.mxu0 0.0
    %v692 = vand.u32 %v56, 4294901760
    %693 = vmatpush1.msra.mxu0 %v692
    %694 = vmatprep.subr.mxu0 0.0
    %v695 = vand.u32 %v57, 4294901760
    %696 = vmatpush1.msra.mxu0 %v695
    %697 = vmatprep.subr.mxu0 0.0
    %v698 = vand.u32 %v58, 4294901760
    %699 = vmatpush1.msra.mxu0 %v698
    %700 = vmatprep.subr.mxu0 0.0
    %v701 = vand.u32 %v59, 4294901760
    %702 = vmatpush1.msra.mxu0 %v701
    %703 = vmatprep.subr.mxu0 0.0
    %v704 = vand.u32 %v60, 4294901760
    %705 = vmatpush1.msra.mxu0 %v704
    %706 = vmatprep.subr.mxu0 0.0
    %v707 = vand.u32 %v61, 4294901760
    %708 = vmatpush1.msra.mxu0 %v707
    %709 = vmatprep.subr.mxu0 0.0
    %v710 = vand.u32 %v62, 4294901760
    %711 = vmatpush1.msra.mxu0 %v710
    %712 = vmatprep.subr.mxu0 0.0
    %v713 = vand.u32 %v63, 4294901760
    %714 = vmatpush1.msra.mxu0 %v713
    %715 = vmatprep.subr.mxu0 0.0
    %v716 = vand.u32 %v64, 4294901760
    %717 = vmatpush1.msra.mxu0 %v716
    %718 = vmatprep.subr.mxu0 0.0
    %v719 = vand.u32 %v65, 4294901760
    %720 = vmatpush1.msra.mxu0 %v719
    %v721 = vand.u32 %v28, 4294901760
    %v722 = vsub.f32 %v28, %v721
    %v723 = vand.u32 %v722, 4294901760
    %724 = vmatprep.mubr.f32.mxu0 %v723
    %v725 = vand.u32 %v27, 4294901760
    %v726 = vsub.f32 %v27, %v725
    %v727 = vand.u32 %v726, 4294901760
    %728 = vmatmul.mubr.f32.gmra.mrb[0].mxu0 %v727
    %v729 = vpop.f32.mrb[0].mxu0
    %v730 = vadd.f32 %v622, %v729
    %v731 = vpop.f32.mrb[0].mxu0
    %732 = vdwg.mxu0
    %733 = vmatprep.subr.mxu0 0.0
    %v734 = vand.u32 %v34, 4294901760
    %v735 = vsub.f32 %v34, %v734
    %v736 = vand.u32 %v735, 4294901760
    %737 = vmatpush1.msra.mxu0 %v736
    %738 = vmatprep.subr.mxu0 0.0
    %v739 = vand.u32 %v35, 4294901760
    %v740 = vsub.f32 %v35, %v739
    %v741 = vand.u32 %v740, 4294901760
    %742 = vmatpush1.msra.mxu0 %v741
    %743 = vmatprep.subr.mxu0 0.0
    %v744 = vand.u32 %v36, 4294901760
    %v745 = vsub.f32 %v36, %v744
    %v746 = vand.u32 %v745, 4294901760
    %747 = vmatpush1.msra.mxu0 %v746
    %748 = vmatprep.subr.mxu0 0.0
    %v749 = vand.u32 %v37, 4294901760
    %v750 = vsub.f32 %v37, %v749
    %v751 = vand.u32 %v750, 4294901760
    %752 = vmatpush1.msra.mxu0 %v751
    %753 = vmatprep.subr.mxu0 0.0
    %v754 = vand.u32 %v38, 4294901760
    %v755 = vsub.f32 %v38, %v754
    %v756 = vand.u32 %v755, 4294901760
    %757 = vmatpush1.msra.mxu0 %v756
    %758 = vmatprep.subr.mxu0 0.0
    %v759 = vand.u32 %v39, 4294901760
    %v760 = vsub.f32 %v39, %v759
    %v761 = vand.u32 %v760, 4294901760
    %762 = vmatpush1.msra.mxu0 %v761
    %763 = vmatprep.subr.mxu0 0.0
    %v764 = vand.u32 %v40, 4294901760
    %v765 = vsub.f32 %v40, %v764
    %v766 = vand.u32 %v765, 4294901760
    %767 = vmatpush1.msra.mxu0 %v766
    %768 = vmatprep.subr.mxu0 0.0
    %v769 = vand.u32 %v41, 4294901760
    %v770 = vsub.f32 %v41, %v769
    %v771 = vand.u32 %v770, 4294901760
    %772 = vmatpush1.msra.mxu0 %v771
    %773 = vmatprep.subr.mxu0 0.0
    %v774 = vand.u32 %v42, 4294901760
    %v775 = vsub.f32 %v42, %v774
    %v776 = vand.u32 %v775, 4294901760
    %777 = vmatpush1.msra.mxu0 %v776
    %778 = vmatprep.subr.mxu0 0.0
    %v779 = vand.u32 %v43, 4294901760
    %v780 = vsub.f32 %v43, %v779
    %v781 = vand.u32 %v780, 4294901760
    %782 = vmatpush1.msra.mxu0 %v781
    %783 = vmatprep.subr.mxu0 0.0
    %v784 = vand.u32 %v44, 4294901760
    %v785 = vsub.f32 %v44, %v784
    %v786 = vand.u32 %v785, 4294901760
    %787 = vmatpush1.msra.mxu0 %v786
    %788 = vmatprep.subr.mxu0 0.0
    %v789 = vand.u32 %v45, 4294901760
    %v790 = vsub.f32 %v45, %v789
    %v791 = vand.u32 %v790, 4294901760
    %792 = vmatpush1.msra.mxu0 %v791
    %793 = vmatprep.subr.mxu0 0.0
    %v794 = vand.u32 %v46, 4294901760
    %v795 = vsub.f32 %v46, %v794
    %v796 = vand.u32 %v795, 4294901760
    %797 = vmatpush1.msra.mxu0 %v796
    %798 = vmatprep.subr.mxu0 0.0
    %v799 = vand.u32 %v47, 4294901760
    %v800 = vsub.f32 %v47, %v799
    %v801 = vand.u32 %v800, 4294901760
    %802 = vmatpush1.msra.mxu0 %v801
    %803 = vmatprep.subr.mxu0 0.0
    %v804 = vand.u32 %v48, 4294901760
    %v805 = vsub.f32 %v48, %v804
    %v806 = vand.u32 %v805, 4294901760
    %807 = vmatpush1.msra.mxu0 %v806
    %808 = vmatprep.subr.mxu0 0.0
    %v809 = vand.u32 %v49, 4294901760
    %v810 = vsub.f32 %v49, %v809
    %v811 = vand.u32 %v810, 4294901760
    %812 = vmatpush1.msra.mxu0 %v811
    %813 = vmatprep.subr.mxu0 0.0
    %v814 = vand.u32 %v50, 4294901760
    %v815 = vsub.f32 %v50, %v814
    %v816 = vand.u32 %v815, 4294901760
    %817 = vmatpush1.msra.mxu0 %v816
    %818 = vmatprep.subr.mxu0 0.0
    %v819 = vand.u32 %v51, 4294901760
    %v820 = vsub.f32 %v51, %v819
    %v821 = vand.u32 %v820, 4294901760
    %822 = vmatpush1.msra.mxu0 %v821
    %823 = vmatprep.subr.mxu0 0.0
    %v824 = vand.u32 %v52, 4294901760
    %v825 = vsub.f32 %v52, %v824
    %v826 = vand.u32 %v825, 4294901760
    %827 = vmatpush1.msra.mxu0 %v826
    %828 = vmatprep.subr.mxu0 0.0
    %v829 = vand.u32 %v53, 4294901760
    %v830 = vsub.f32 %v53, %v829
    %v831 = vand.u32 %v830, 4294901760
    %832 = vmatpush1.msra.mxu0 %v831
    %833 = vmatprep.subr.mxu0 0.0
    %v834 = vand.u32 %v54, 4294901760
    %v835 = vsub.f32 %v54, %v834
    %v836 = vand.u32 %v835, 4294901760
    %837 = vmatpush1.msra.mxu0 %v836
    %838 = vmatprep.subr.mxu0 0.0
    %v839 = vand.u32 %v55, 4294901760
    %v840 = vsub.f32 %v55, %v839
    %v841 = vand.u32 %v840, 4294901760
    %842 = vmatpush1.msra.mxu0 %v841
    %843 = vmatprep.subr.mxu0 0.0
    %v844 = vand.u32 %v56, 4294901760
    %v845 = vsub.f32 %v56, %v844
    %v846 = vand.u32 %v845, 4294901760
    %847 = vmatpush1.msra.mxu0 %v846
    %848 = vmatprep.subr.mxu0 0.0
    %v849 = vand.u32 %v57, 4294901760
    %v850 = vsub.f32 %v57, %v849
    %v851 = vand.u32 %v850, 4294901760
    %852 = vmatpush1.msra.mxu0 %v851
    %853 = vmatprep.subr.mxu0 0.0
    %v854 = vand.u32 %v58, 4294901760
    %v855 = vsub.f32 %v58, %v854
    %v856 = vand.u32 %v855, 4294901760
    %857 = vmatpush1.msra.mxu0 %v856
    %858 = vmatprep.subr.mxu0 0.0
    %v859 = vand.u32 %v59, 4294901760
    %v860 = vsub.f32 %v59, %v859
    %v861 = vand.u32 %v860, 4294901760
    %862 = vmatpush1.msra.mxu0 %v861
    %863 = vmatprep.subr.mxu0 0.0
    %v864 = vand.u32 %v60, 4294901760
    %v865 = vsub.f32 %v60, %v864
    %v866 = vand.u32 %v865, 4294901760
    %867 = vmatpush1.msra.mxu0 %v866
    %868 = vmatprep.subr.mxu0 0.0
    %v869 = vand.u32 %v61, 4294901760
    %v870 = vsub.f32 %v61, %v869
    %v871 = vand.u32 %v870, 4294901760
    %872 = vmatpush1.msra.mxu0 %v871
    %873 = vmatprep.subr.mxu0 0.0
    %v874 = vand.u32 %v62, 4294901760
    %v875 = vsub.f32 %v62, %v874
    %v876 = vand.u32 %v875, 4294901760
    %877 = vmatpush1.msra.mxu0 %v876
    %878 = vmatprep.subr.mxu0 0.0
    %v879 = vand.u32 %v63, 4294901760
    %v880 = vsub.f32 %v63, %v879
    %v881 = vand.u32 %v880, 4294901760
    %882 = vmatpush1.msra.mxu0 %v881
    %883 = vmatprep.subr.mxu0 0.0
    %v884 = vand.u32 %v64, 4294901760
    %v885 = vsub.f32 %v64, %v884
    %v886 = vand.u32 %v885, 4294901760
    %887 = vmatpush1.msra.mxu0 %v886
    %888 = vmatprep.subr.mxu0 0.0
    %v889 = vand.u32 %v65, 4294901760
    %v890 = vsub.f32 %v65, %v889
    %v891 = vand.u32 %v890, 4294901760
    %892 = vmatpush1.msra.mxu0 %v891
    %v893 = vand.u32 %v28, 4294901760
    %894 = vmatprep.mubr.f32.mxu0 %v893
    %v895 = vand.u32 %v27, 4294901760
    %896 = vmatmul.mubr.f32.gmra.mrb[0].mxu0 %v895
    %v897 = vpop.f32.mrb[0].mxu0
    %v898 = vadd.f32 %v730, %v897
    %v899 = vpop.f32.mrb[0].mxu0
    %900 = vdwg.mxu0
    %901 = vmatprep.subr.mxu0 0.0
    %v902 = vand.u32 %v34, 4294901760
    %903 = vmatpush1.msra.mxu0 %v902
    %904 = vmatprep.subr.mxu0 0.0
    %v905 = vand.u32 %v35, 4294901760
    %906 = vmatpush1.msra.mxu0 %v905
    %907 = vmatprep.subr.mxu0 0.0
    %v908 = vand.u32 %v36, 4294901760
    %909 = vmatpush1.msra.mxu0 %v908
    %910 = vmatprep.subr.mxu0 0.0
    %v911 = vand.u32 %v37, 4294901760
    %912 = vmatpush1.msra.mxu0 %v911
    %913 = vmatprep.subr.mxu0 0.0
    %v914 = vand.u32 %v38, 4294901760
    %915 = vmatpush1.msra.mxu0 %v914
    %916 = vmatprep.subr.mxu0 0.0
    %v917 = vand.u32 %v39, 4294901760
    %918 = vmatpush1.msra.mxu0 %v917
    %919 = vmatprep.subr.mxu0 0.0
    %v920 = vand.u32 %v40, 4294901760
    %921 = vmatpush1.msra.mxu0 %v920
    %922 = vmatprep.subr.mxu0 0.0
    %v923 = vand.u32 %v41, 4294901760
    %924 = vmatpush1.msra.mxu0 %v923
    %925 = vmatprep.subr.mxu0 0.0
    %v926 = vand.u32 %v42, 4294901760
    %927 = vmatpush1.msra.mxu0 %v926
    %928 = vmatprep.subr.mxu0 0.0
    %v929 = vand.u32 %v43, 4294901760
    %930 = vmatpush1.msra.mxu0 %v929
    %931 = vmatprep.subr.mxu0 0.0
    %v932 = vand.u32 %v44, 4294901760
    %933 = vmatpush1.msra.mxu0 %v932
    %934 = vmatprep.subr.mxu0 0.0
    %v935 = vand.u32 %v45, 4294901760
    %936 = vmatpush1.msra.mxu0 %v935
    %937 = vmatprep.subr.mxu0 0.0
    %v938 = vand.u32 %v46, 4294901760
    %939 = vmatpush1.msra.mxu0 %v938
    %940 = vmatprep.subr.mxu0 0.0
    %v941 = vand.u32 %v47, 4294901760
    %942 = vmatpush1.msra.mxu0 %v941
    %943 = vmatprep.subr.mxu0 0.0
    %v944 = vand.u32 %v48, 4294901760
    %945 = vmatpush1.msra.mxu0 %v944
    %946 = vmatprep.subr.mxu0 0.0
    %v947 = vand.u32 %v49, 4294901760
    %948 = vmatpush1.msra.mxu0 %v947
    %949 = vmatprep.subr.mxu0 0.0
    %v950 = vand.u32 %v50, 4294901760
    %951 = vmatpush1.msra.mxu0 %v950
    %952 = vmatprep.subr.mxu0 0.0
    %v953 = vand.u32 %v51, 4294901760
    %954 = vmatpush1.msra.mxu0 %v953
    %955 = vmatprep.subr.mxu0 0.0
    %v956 = vand.u32 %v52, 4294901760
    %957 = vmatpush1.msra.mxu0 %v956
    %958 = vmatprep.subr.mxu0 0.0
    %v959 = vand.u32 %v53, 4294901760
    %960 = vmatpush1.msra.mxu0 %v959
    %961 = vmatprep.subr.mxu0 0.0
    %v962 = vand.u32 %v54, 4294901760
    %963 = vmatpush1.msra.mxu0 %v962
    %964 = vmatprep.subr.mxu0 0.0
    %v965 = vand.u32 %v55, 4294901760
    %966 = vmatpush1.msra.mxu0 %v965
    %967 = vmatprep.subr.mxu0 0.0
    %v968 = vand.u32 %v56, 4294901760
    %969 = vmatpush1.msra.mxu0 %v968
    %970 = vmatprep.subr.mxu0 0.0
    %v971 = vand.u32 %v57, 4294901760
    %972 = vmatpush1.msra.mxu0 %v971
    %973 = vmatprep.subr.mxu0 0.0
    %v974 = vand.u32 %v58, 4294901760
    %975 = vmatpush1.msra.mxu0 %v974
    %976 = vmatprep.subr.mxu0 0.0
    %v977 = vand.u32 %v59, 4294901760
    %978 = vmatpush1.msra.mxu0 %v977
    %979 = vmatprep.subr.mxu0 0.0
    %v980 = vand.u32 %v60, 4294901760
    %981 = vmatpush1.msra.mxu0 %v980
    %982 = vmatprep.subr.mxu0 0.0
    %v983 = vand.u32 %v61, 4294901760
    %984 = vmatpush1.msra.mxu0 %v983
    %985 = vmatprep.subr.mxu0 0.0
    %v986 = vand.u32 %v62, 4294901760
    %987 = vmatpush1.msra.mxu0 %v986
    %988 = vmatprep.subr.mxu0 0.0
    %v989 = vand.u32 %v63, 4294901760
    %990 = vmatpush1.msra.mxu0 %v989
    %991 = vmatprep.subr.mxu0 0.0
    %v992 = vand.u32 %v64, 4294901760
    %993 = vmatpush1.msra.mxu0 %v992
    %994 = vmatprep.subr.mxu0 0.0
    %v995 = vand.u32 %v65, 4294901760
    %996 = vmatpush1.msra.mxu0 %v995
    %v997 = vand.u32 %v28, 4294901760
    %998 = vmatprep.mubr.f32.mxu0 %v997
    %v999 = vand.u32 %v27, 4294901760
    %1000 = vmatmul.mubr.f32.gmra.mrb[0].mxu0 %v999
    %v1001 = vpop.f32.mrb[0].mxu0
    %v1002 = vadd.f32 %v898, %v1001
    %v1003 = vpop.f32.mrb[0].mxu0
    %1004 = vdwg.mxu0
    %1005 = vmatprep.subr.mxu0 0.0
    %v1006 = vand.u32 %v66, 4294901760
    %1007 = vmatpush1.msra.mxu0 %v1006
    %1008 = vmatprep.subr.mxu0 0.0
    %v1009 = vand.u32 %v67, 4294901760
    %1010 = vmatpush1.msra.mxu0 %v1009
    %1011 = vmatprep.subr.mxu0 0.0
    %v1012 = vand.u32 %v68, 4294901760
    %1013 = vmatpush1.msra.mxu0 %v1012
    %1014 = vmatprep.subr.mxu0 0.0
    %v1015 = vand.u32 %v69, 4294901760
    %1016 = vmatpush1.msra.mxu0 %v1015
    %1017 = vmatprep.subr.mxu0 0.0
    %v1018 = vand.u32 %v70, 4294901760
    %1019 = vmatpush1.msra.mxu0 %v1018
    %1020 = vmatprep.subr.mxu0 0.0
    %v1021 = vand.u32 %v71, 4294901760
    %1022 = vmatpush1.msra.mxu0 %v1021
    %1023 = vmatprep.subr.mxu0 0.0
    %v1024 = vand.u32 %v72, 4294901760
    %1025 = vmatpush1.msra.mxu0 %v1024
    %1026 = vmatprep.subr.mxu0 0.0
    %v1027 = vand.u32 %v73, 4294901760
    %1028 = vmatpush1.msra.mxu0 %v1027
    %1029 = vmatprep.subr.mxu0 0.0
    %v1030 = vand.u32 %v74, 4294901760
    %1031 = vmatpush1.msra.mxu0 %v1030
    %1032 = vmatprep.subr.mxu0 0.0
    %v1033 = vand.u32 %v75, 4294901760
    %1034 = vmatpush1.msra.mxu0 %v1033
    %1035 = vmatprep.subr.mxu0 0.0
    %v1036 = vand.u32 %v76, 4294901760
    %1037 = vmatpush1.msra.mxu0 %v1036
    %1038 = vmatprep.subr.mxu0 0.0
    %v1039 = vand.u32 %v77, 4294901760
    %1040 = vmatpush1.msra.mxu0 %v1039
    %1041 = vmatprep.subr.mxu0 0.0
    %v1042 = vand.u32 %v78, 4294901760
    %1043 = vmatpush1.msra.mxu0 %v1042
    %1044 = vmatprep.subr.mxu0 0.0
    %v1045 = vand.u32 %v79, 4294901760
    %1046 = vmatpush1.msra.mxu0 %v1045
    %1047 = vmatprep.subr.mxu0 0.0
    %v1048 = vand.u32 %v80, 4294901760
    %1049 = vmatpush1.msra.mxu0 %v1048
    %1050 = vmatprep.subr.mxu0 0.0
    %v1051 = vand.u32 %v81, 4294901760
    %1052 = vmatpush1.msra.mxu0 %v1051
    %1053 = vmatprep.subr.mxu0 0.0
    %v1054 = vand.u32 %v82, 4294901760
    %1055 = vmatpush1.msra.mxu0 %v1054
    %1056 = vmatprep.subr.mxu0 0.0
    %v1057 = vand.u32 %v83, 4294901760
    %1058 = vmatpush1.msra.mxu0 %v1057
    %1059 = vmatprep.subr.mxu0 0.0
    %v1060 = vand.u32 %v84, 4294901760
    %1061 = vmatpush1.msra.mxu0 %v1060
    %1062 = vmatprep.subr.mxu0 0.0
    %v1063 = vand.u32 %v85, 4294901760
    %1064 = vmatpush1.msra.mxu0 %v1063
    %1065 = vmatprep.subr.mxu0 0.0
    %v1066 = vand.u32 %v86, 4294901760
    %1067 = vmatpush1.msra.mxu0 %v1066
    %1068 = vmatprep.subr.mxu0 0.0
    %v1069 = vand.u32 %v87, 4294901760
    %1070 = vmatpush1.msra.mxu0 %v1069
    %1071 = vmatprep.subr.mxu0 0.0
    %v1072 = vand.u32 %v88, 4294901760
    %1073 = vmatpush1.msra.mxu0 %v1072
    %1074 = vmatprep.subr.mxu0 0.0
    %v1075 = vand.u32 %v89, 4294901760
    %1076 = vmatpush1.msra.mxu0 %v1075
    %1077 = vmatprep.subr.mxu0 0.0
    %v1078 = vand.u32 %v90, 4294901760
    %1079 = vmatpush1.msra.mxu0 %v1078
    %1080 = vmatprep.subr.mxu0 0.0
    %v1081 = vand.u32 %v91, 4294901760
    %1082 = vmatpush1.msra.mxu0 %v1081
    %1083 = vmatprep.subr.mxu0 0.0
    %v1084 = vand.u32 %v92, 4294901760
    %1085 = vmatpush1.msra.mxu0 %v1084
    %1086 = vmatprep.subr.mxu0 0.0
    %v1087 = vand.u32 %v93, 4294901760
    %1088 = vmatpush1.msra.mxu0 %v1087
    %1089 = vmatprep.subr.mxu0 0.0
    %v1090 = vand.u32 %v94, 4294901760
    %1091 = vmatpush1.msra.mxu0 %v1090
    %1092 = vmatprep.subr.mxu0 0.0
    %v1093 = vand.u32 %v95, 4294901760
    %1094 = vmatpush1.msra.mxu0 %v1093
    %1095 = vmatprep.subr.mxu0 0.0
    %v1096 = vand.u32 %v96, 4294901760
    %1097 = vmatpush1.msra.mxu0 %v1096
    %1098 = vmatprep.subr.mxu0 0.0
    %v1099 = vand.u32 %v97, 4294901760
    %1100 = vmatpush1.msra.mxu0 %v1099
    %v1101 = vand.u32 %v30, 4294901760
    %v1102 = vsub.f32 %v30, %v1101
    %v1103 = vand.u32 %v1102, 4294901760
    %v1104 = vsub.f32 %v1102, %v1103
    %v1105 = vand.u32 %v1104, 4294901760
    %1106 = vmatprep.mubr.f32.mxu0 %v1105
    %v1107 = vand.u32 %v29, 4294901760
    %v1108 = vsub.f32 %v29, %v1107
    %v1109 = vand.u32 %v1108, 4294901760
    %v1110 = vsub.f32 %v1108, %v1109
    %v1111 = vand.u32 %v1110, 4294901760
    %1112 = vmatmul.mubr.f32.gmra.mrb[0].mxu0 %v1111
    %v1113 = vpop.f32.mrb[0].mxu0
    %v1114 = vadd.f32 %v1002, %v1113
    %v1115 = vpop.f32.mrb[0].mxu0
    %1116 = vdwg.mxu0
    %1117 = vmatprep.subr.mxu0 0.0
    %v1118 = vand.u32 %v66, 4294901760
    %v1119 = vsub.f32 %v66, %v1118
    %v1120 = vand.u32 %v1119, 4294901760
    %v1121 = vsub.f32 %v1119, %v1120
    %v1122 = vand.u32 %v1121, 4294901760
    %1123 = vmatpush1.msra.mxu0 %v1122
    %1124 = vmatprep.subr.mxu0 0.0
    %v1125 = vand.u32 %v67, 4294901760
    %v1126 = vsub.f32 %v67, %v1125
    %v1127 = vand.u32 %v1126, 4294901760
    %v1128 = vsub.f32 %v1126, %v1127
    %v1129 = vand.u32 %v1128, 4294901760
    %1130 = vmatpush1.msra.mxu0 %v1129
    %1131 = vmatprep.subr.mxu0 0.0
    %v1132 = vand.u32 %v68, 4294901760
    %v1133 = vsub.f32 %v68, %v1132
    %v1134 = vand.u32 %v1133, 4294901760
    %v1135 = vsub.f32 %v1133, %v1134
    %v1136 = vand.u32 %v1135, 4294901760
    %1137 = vmatpush1.msra.mxu0 %v1136
    %1138 = vmatprep.subr.mxu0 0.0
    %v1139 = vand.u32 %v69, 4294901760
    %v1140 = vsub.f32 %v69, %v1139
    %v1141 = vand.u32 %v1140, 4294901760
    %v1142 = vsub.f32 %v1140, %v1141
    %v1143 = vand.u32 %v1142, 4294901760
    %1144 = vmatpush1.msra.mxu0 %v1143
    %1145 = vmatprep.subr.mxu0 0.0
    %v1146 = vand.u32 %v70, 4294901760
    %v1147 = vsub.f32 %v70, %v1146
    %v1148 = vand.u32 %v1147, 4294901760
    %v1149 = vsub.f32 %v1147, %v1148
    %v1150 = vand.u32 %v1149, 4294901760
    %1151 = vmatpush1.msra.mxu0 %v1150
    %1152 = vmatprep.subr.mxu0 0.0
    %v1153 = vand.u32 %v71, 4294901760
    %v1154 = vsub.f32 %v71, %v1153
    %v1155 = vand.u32 %v1154, 4294901760
    %v1156 = vsub.f32 %v1154, %v1155
    %v1157 = vand.u32 %v1156, 4294901760
    %1158 = vmatpush1.msra.mxu0 %v1157
    %1159 = vmatprep.subr.mxu0 0.0
    %v1160 = vand.u32 %v72, 4294901760
    %v1161 = vsub.f32 %v72, %v1160
    %v1162 = vand.u32 %v1161, 4294901760
    %v1163 = vsub.f32 %v1161, %v1162
    %v1164 = vand.u32 %v1163, 4294901760
    %1165 = vmatpush1.msra.mxu0 %v1164
    %1166 = vmatprep.subr.mxu0 0.0
    %v1167 = vand.u32 %v73, 4294901760
    %v1168 = vsub.f32 %v73, %v1167
    %v1169 = vand.u32 %v1168, 4294901760
    %v1170 = vsub.f32 %v1168, %v1169
    %v1171 = vand.u32 %v1170, 4294901760
    %1172 = vmatpush1.msra.mxu0 %v1171
    %1173 = vmatprep.subr.mxu0 0.0
    %v1174 = vand.u32 %v74, 4294901760
    %v1175 = vsub.f32 %v74, %v1174
    %v1176 = vand.u32 %v1175, 4294901760
    %v1177 = vsub.f32 %v1175, %v1176
    %v1178 = vand.u32 %v1177, 4294901760
    %1179 = vmatpush1.msra.mxu0 %v1178
    %1180 = vmatprep.subr.mxu0 0.0
    %v1181 = vand.u32 %v75, 4294901760
    %v1182 = vsub.f32 %v75, %v1181
    %v1183 = vand.u32 %v1182, 4294901760
    %v1184 = vsub.f32 %v1182, %v1183
    %v1185 = vand.u32 %v1184, 4294901760
    %1186 = vmatpush1.msra.mxu0 %v1185
    %1187 = vmatprep.subr.mxu0 0.0
    %v1188 = vand.u32 %v76, 4294901760
    %v1189 = vsub.f32 %v76, %v1188
    %v1190 = vand.u32 %v1189, 4294901760
    %v1191 = vsub.f32 %v1189, %v1190
    %v1192 = vand.u32 %v1191, 4294901760
    %1193 = vmatpush1.msra.mxu0 %v1192
    %1194 = vmatprep.subr.mxu0 0.0
    %v1195 = vand.u32 %v77, 4294901760
    %v1196 = vsub.f32 %v77, %v1195
    %v1197 = vand.u32 %v1196, 4294901760
    %v1198 = vsub.f32 %v1196, %v1197
    %v1199 = vand.u32 %v1198, 4294901760
    %1200 = vmatpush1.msra.mxu0 %v1199
    %1201 = vmatprep.subr.mxu0 0.0
    %v1202 = vand.u32 %v78, 4294901760
    %v1203 = vsub.f32 %v78, %v1202
    %v1204 = vand.u32 %v1203, 4294901760
    %v1205 = vsub.f32 %v1203, %v1204
    %v1206 = vand.u32 %v1205, 4294901760
    %1207 = vmatpush1.msra.mxu0 %v1206
    %1208 = vmatprep.subr.mxu0 0.0
    %v1209 = vand.u32 %v79, 4294901760
    %v1210 = vsub.f32 %v79, %v1209
    %v1211 = vand.u32 %v1210, 4294901760
    %v1212 = vsub.f32 %v1210, %v1211
    %v1213 = vand.u32 %v1212, 4294901760
    %1214 = vmatpush1.msra.mxu0 %v1213
    %1215 = vmatprep.subr.mxu0 0.0
    %v1216 = vand.u32 %v80, 4294901760
    %v1217 = vsub.f32 %v80, %v1216
    %v1218 = vand.u32 %v1217, 4294901760
    %v1219 = vsub.f32 %v1217, %v1218
    %v1220 = vand.u32 %v1219, 4294901760
    %1221 = vmatpush1.msra.mxu0 %v1220
    %1222 = vmatprep.subr.mxu0 0.0
    %v1223 = vand.u32 %v81, 4294901760
    %v1224 = vsub.f32 %v81, %v1223
    %v1225 = vand.u32 %v1224, 4294901760
    %v1226 = vsub.f32 %v1224, %v1225
    %v1227 = vand.u32 %v1226, 4294901760
    %1228 = vmatpush1.msra.mxu0 %v1227
    %1229 = vmatprep.subr.mxu0 0.0
    %v1230 = vand.u32 %v82, 4294901760
    %v1231 = vsub.f32 %v82, %v1230
    %v1232 = vand.u32 %v1231, 4294901760
    %v1233 = vsub.f32 %v1231, %v1232
    %v1234 = vand.u32 %v1233, 4294901760
    %1235 = vmatpush1.msra.mxu0 %v1234
    %1236 = vmatprep.subr.mxu0 0.0
    %v1237 = vand.u32 %v83, 4294901760
    %v1238 = vsub.f32 %v83, %v1237
    %v1239 = vand.u32 %v1238, 4294901760
    %v1240 = vsub.f32 %v1238, %v1239
    %v1241 = vand.u32 %v1240, 4294901760
    %1242 = vmatpush1.msra.mxu0 %v1241
    %1243 = vmatprep.subr.mxu0 0.0
    %v1244 = vand.u32 %v84, 4294901760
    %v1245 = vsub.f32 %v84, %v1244
    %v1246 = vand.u32 %v1245, 4294901760
    %v1247 = vsub.f32 %v1245, %v1246
    %v1248 = vand.u32 %v1247, 4294901760
    %1249 = vmatpush1.msra.mxu0 %v1248
    %1250 = vmatprep.subr.mxu0 0.0
    %v1251 = vand.u32 %v85, 4294901760
    %v1252 = vsub.f32 %v85, %v1251
    %v1253 = vand.u32 %v1252, 4294901760
    %v1254 = vsub.f32 %v1252, %v1253
    %v1255 = vand.u32 %v1254, 4294901760
    %1256 = vmatpush1.msra.mxu0 %v1255
    %1257 = vmatprep.subr.mxu0 0.0
    %v1258 = vand.u32 %v86, 4294901760
    %v1259 = vsub.f32 %v86, %v1258
    %v1260 = vand.u32 %v1259, 4294901760
    %v1261 = vsub.f32 %v1259, %v1260
    %v1262 = vand.u32 %v1261, 4294901760
    %1263 = vmatpush1.msra.mxu0 %v1262
    %1264 = vmatprep.subr.mxu0 0.0
    %v1265 = vand.u32 %v87, 4294901760
    %v1266 = vsub.f32 %v87, %v1265
    %v1267 = vand.u32 %v1266, 4294901760
    %v1268 = vsub.f32 %v1266, %v1267
    %v1269 = vand.u32 %v1268, 4294901760
    %1270 = vmatpush1.msra.mxu0 %v1269
    %1271 = vmatprep.subr.mxu0 0.0
    %v1272 = vand.u32 %v88, 4294901760
    %v1273 = vsub.f32 %v88, %v1272
    %v1274 = vand.u32 %v1273, 4294901760
    %v1275 = vsub.f32 %v1273, %v1274
    %v1276 = vand.u32 %v1275, 4294901760
    %1277 = vmatpush1.msra.mxu0 %v1276
    %1278 = vmatprep.subr.mxu0 0.0
    %v1279 = vand.u32 %v89, 4294901760
    %v1280 = vsub.f32 %v89, %v1279
    %v1281 = vand.u32 %v1280, 4294901760
    %v1282 = vsub.f32 %v1280, %v1281
    %v1283 = vand.u32 %v1282, 4294901760
    %1284 = vmatpush1.msra.mxu0 %v1283
    %1285 = vmatprep.subr.mxu0 0.0
    %v1286 = vand.u32 %v90, 4294901760
    %v1287 = vsub.f32 %v90, %v1286
    %v1288 = vand.u32 %v1287, 4294901760
    %v1289 = vsub.f32 %v1287, %v1288
    %v1290 = vand.u32 %v1289, 4294901760
    %1291 = vmatpush1.msra.mxu0 %v1290
    %1292 = vmatprep.subr.mxu0 0.0
    %v1293 = vand.u32 %v91, 4294901760
    %v1294 = vsub.f32 %v91, %v1293
    %v1295 = vand.u32 %v1294, 4294901760
    %v1296 = vsub.f32 %v1294, %v1295
    %v1297 = vand.u32 %v1296, 4294901760
    %1298 = vmatpush1.msra.mxu0 %v1297
    %1299 = vmatprep.subr.mxu0 0.0
    %v1300 = vand.u32 %v92, 4294901760
    %v1301 = vsub.f32 %v92, %v1300
    %v1302 = vand.u32 %v1301, 4294901760
    %v1303 = vsub.f32 %v1301, %v1302
    %v1304 = vand.u32 %v1303, 4294901760
    %1305 = vmatpush1.msra.mxu0 %v1304
    %1306 = vmatprep.subr.mxu0 0.0
    %v1307 = vand.u32 %v93, 4294901760
    %v1308 = vsub.f32 %v93, %v1307
    %v1309 = vand.u32 %v1308, 4294901760
    %v1310 = vsub.f32 %v1308, %v1309
    %v1311 = vand.u32 %v1310, 4294901760
    %1312 = vmatpush1.msra.mxu0 %v1311
    %1313 = vmatprep.subr.mxu0 0.0
    %v1314 = vand.u32 %v94, 4294901760
    %v1315 = vsub.f32 %v94, %v1314
    %v1316 = vand.u32 %v1315, 4294901760
    %v1317 = vsub.f32 %v1315, %v1316
    %v1318 = vand.u32 %v1317, 4294901760
    %1319 = vmatpush1.msra.mxu0 %v1318
    %1320 = vmatprep.subr.mxu0 0.0
    %v1321 = vand.u32 %v95, 4294901760
    %v1322 = vsub.f32 %v95, %v1321
    %v1323 = vand.u32 %v1322, 4294901760
    %v1324 = vsub.f32 %v1322, %v1323
    %v1325 = vand.u32 %v1324, 4294901760
    %1326 = vmatpush1.msra.mxu0 %v1325
    %1327 = vmatprep.subr.mxu0 0.0
    %v1328 = vand.u32 %v96, 4294901760
    %v1329 = vsub.f32 %v96, %v1328
    %v1330 = vand.u32 %v1329, 4294901760
    %v1331 = vsub.f32 %v1329, %v1330
    %v1332 = vand.u32 %v1331, 4294901760
    %1333 = vmatpush1.msra.mxu0 %v1332
    %1334 = vmatprep.subr.mxu0 0.0
    %v1335 = vand.u32 %v97, 4294901760
    %v1336 = vsub.f32 %v97, %v1335
    %v1337 = vand.u32 %v1336, 4294901760
    %v1338 = vsub.f32 %v1336, %v1337
    %v1339 = vand.u32 %v1338, 4294901760
    %1340 = vmatpush1.msra.mxu0 %v1339
    %v1341 = vand.u32 %v30, 4294901760
    %1342 = vmatprep.mubr.f32.mxu0 %v1341
    %v1343 = vand.u32 %v29, 4294901760
    %1344 = vmatmul.mubr.f32.gmra.mrb[0].mxu0 %v1343
    %v1345 = vpop.f32.mrb[0].mxu0
    %v1346 = vadd.f32 %v1114, %v1345
    %v1347 = vpop.f32.mrb[0].mxu0
    %1348 = vdwg.mxu0
    %1349 = vmatprep.subr.mxu0 0.0
    %v1350 = vand.u32 %v66, 4294901760
    %v1351 = vsub.f32 %v66, %v1350
    %1352 = vmatpush1.msra.mxu0 %v1351
    %1353 = vmatprep.subr.mxu0 0.0
    %v1354 = vand.u32 %v67, 4294901760
    %v1355 = vsub.f32 %v67, %v1354
    %1356 = vmatpush1.msra.mxu0 %v1355
    %1357 = vmatprep.subr.mxu0 0.0
    %v1358 = vand.u32 %v68, 4294901760
    %v1359 = vsub.f32 %v68, %v1358
    %1360 = vmatpush1.msra.mxu0 %v1359
    %1361 = vmatprep.subr.mxu0 0.0
    %v1362 = vand.u32 %v69, 4294901760
    %v1363 = vsub.f32 %v69, %v1362
    %1364 = vmatpush1.msra.mxu0 %v1363
    %1365 = vmatprep.subr.mxu0 0.0
    %v1366 = vand.u32 %v70, 4294901760
    %v1367 = vsub.f32 %v70, %v1366
    %1368 = vmatpush1.msra.mxu0 %v1367
    %1369 = vmatprep.subr.mxu0 0.0
    %v1370 = vand.u32 %v71, 4294901760
    %v1371 = vsub.f32 %v71, %v1370
    %1372 = vmatpush1.msra.mxu0 %v1371
    %1373 = vmatprep.subr.mxu0 0.0
    %v1374 = vand.u32 %v72, 4294901760
    %v1375 = vsub.f32 %v72, %v1374
    %1376 = vmatpush1.msra.mxu0 %v1375
    %1377 = vmatprep.subr.mxu0 0.0
    %v1378 = vand.u32 %v73, 4294901760
    %v1379 = vsub.f32 %v73, %v1378
    %1380 = vmatpush1.msra.mxu0 %v1379
    %1381 = vmatprep.subr.mxu0 0.0
    %v1382 = vand.u32 %v74, 4294901760
    %v1383 = vsub.f32 %v74, %v1382
    %1384 = vmatpush1.msra.mxu0 %v1383
    %1385 = vmatprep.subr.mxu0 0.0
    %v1386 = vand.u32 %v75, 4294901760
    %v1387 = vsub.f32 %v75, %v1386
    %1388 = vmatpush1.msra.mxu0 %v1387
    %1389 = vmatprep.subr.mxu0 0.0
    %v1390 = vand.u32 %v76, 4294901760
    %v1391 = vsub.f32 %v76, %v1390
    %1392 = vmatpush1.msra.mxu0 %v1391
    %1393 = vmatprep.subr.mxu0 0.0
    %v1394 = vand.u32 %v77, 4294901760
    %v1395 = vsub.f32 %v77, %v1394
    %1396 = vmatpush1.msra.mxu0 %v1395
    %1397 = vmatprep.subr.mxu0 0.0
    %v1398 = vand.u32 %v78, 4294901760
    %v1399 = vsub.f32 %v78, %v1398
    %1400 = vmatpush1.msra.mxu0 %v1399
    %1401 = vmatprep.subr.mxu0 0.0
    %v1402 = vand.u32 %v79, 4294901760
    %v1403 = vsub.f32 %v79, %v1402
    %1404 = vmatpush1.msra.mxu0 %v1403
    %1405 = vmatprep.subr.mxu0 0.0
    %v1406 = vand.u32 %v80, 4294901760
    %v1407 = vsub.f32 %v80, %v1406
    %1408 = vmatpush1.msra.mxu0 %v1407
    %1409 = vmatprep.subr.mxu0 0.0
    %v1410 = vand.u32 %v81, 4294901760
    %v1411 = vsub.f32 %v81, %v1410
    %1412 = vmatpush1.msra.mxu0 %v1411
    %1413 = vmatprep.subr.mxu0 0.0
    %v1414 = vand.u32 %v82, 4294901760
    %v1415 = vsub.f32 %v82, %v1414
    %1416 = vmatpush1.msra.mxu0 %v1415
    %1417 = vmatprep.subr.mxu0 0.0
    %v1418 = vand.u32 %v83, 4294901760
    %v1419 = vsub.f32 %v83, %v1418
    %1420 = vmatpush1.msra.mxu0 %v1419
    %1421 = vmatprep.subr.mxu0 0.0
    %v1422 = vand.u32 %v84, 4294901760
    %v1423 = vsub.f32 %v84, %v1422
    %1424 = vmatpush1.msra.mxu0 %v1423
    %1425 = vmatprep.subr.mxu0 0.0
    %v1426 = vand.u32 %v85, 4294901760
    %v1427 = vsub.f32 %v85, %v1426
    %1428 = vmatpush1.msra.mxu0 %v1427
    %1429 = vmatprep.subr.mxu0 0.0
    %v1430 = vand.u32 %v86, 4294901760
    %v1431 = vsub.f32 %v86, %v1430
    %1432 = vmatpush1.msra.mxu0 %v1431
    %1433 = vmatprep.subr.mxu0 0.0
    %v1434 = vand.u32 %v87, 4294901760
    %v1435 = vsub.f32 %v87, %v1434
    %1436 = vmatpush1.msra.mxu0 %v1435
    %1437 = vmatprep.subr.mxu0 0.0
    %v1438 = vand.u32 %v88, 4294901760
    %v1439 = vsub.f32 %v88, %v1438
    %1440 = vmatpush1.msra.mxu0 %v1439
    %1441 = vmatprep.subr.mxu0 0.0
    %v1442 = vand.u32 %v89, 4294901760
    %v1443 = vsub.f32 %v89, %v1442
    %1444 = vmatpush1.msra.mxu0 %v1443
    %1445 = vmatprep.subr.mxu0 0.0
    %v1446 = vand.u32 %v90, 4294901760
    %v1447 = vsub.f32 %v90, %v1446
    %1448 = vmatpush1.msra.mxu0 %v1447
    %1449 = vmatprep.subr.mxu0 0.0
    %v1450 = vand.u32 %v91, 4294901760
    %v1451 = vsub.f32 %v91, %v1450
    %1452 = vmatpush1.msra.mxu0 %v1451
    %1453 = vmatprep.subr.mxu0 0.0
    %v1454 = vand.u32 %v92, 4294901760
    %v1455 = vsub.f32 %v92, %v1454
    %1456 = vmatpush1.msra.mxu0 %v1455
    %1457 = vmatprep.subr.mxu0 0.0
    %v1458 = vand.u32 %v93, 4294901760
    %v1459 = vsub.f32 %v93, %v1458
    %1460 = vmatpush1.msra.mxu0 %v1459
    %1461 = vmatprep.subr.mxu0 0.0
    %v1462 = vand.u32 %v94, 4294901760
    %v1463 = vsub.f32 %v94, %v1462
    %1464 = vmatpush1.msra.mxu0 %v1463
    %1465 = vmatprep.subr.mxu0 0.0
    %v1466 = vand.u32 %v95, 4294901760
    %v1467 = vsub.f32 %v95, %v1466
    %1468 = vmatpush1.msra.mxu0 %v1467
    %1469 = vmatprep.subr.mxu0 0.0
    %v1470 = vand.u32 %v96, 4294901760
    %v1471 = vsub.f32 %v96, %v1470
    %1472 = vmatpush1.msra.mxu0 %v1471
    %1473 = vmatprep.subr.mxu0 0.0
    %v1474 = vand.u32 %v97, 4294901760
    %v1475 = vsub.f32 %v97, %v1474
    %1476 = vmatpush1.msra.mxu0 %v1475
    %v1477 = vand.u32 %v30, 4294901760
    %v1478 = vsub.f32 %v30, %v1477
    %1479 = vmatprep.mubr.f32.mxu0 %v1478
    %v1480 = vand.u32 %v29, 4294901760
    %v1481 = vsub.f32 %v29, %v1480
    %1482 = vmatmul.mubr.f32.gmra.mrb[0].mxu0 %v1481
    %v1483 = vpop.f32.mrb[0].mxu0
    %v1484 = vadd.f32 %v1346, %v1483
    %v1485 = vpop.f32.mrb[0].mxu0
    %1486 = vdwg.mxu0
    %1487 = vmatprep.subr.mxu0 0.0
    %v1488 = vand.u32 %v66, 4294901760
    %1489 = vmatpush1.msra.mxu0 %v1488
    %1490 = vmatprep.subr.mxu0 0.0
    %v1491 = vand.u32 %v67, 4294901760
    %1492 = vmatpush1.msra.mxu0 %v1491
    %1493 = vmatprep.subr.mxu0 0.0
    %v1494 = vand.u32 %v68, 4294901760
    %1495 = vmatpush1.msra.mxu0 %v1494
    %1496 = vmatprep.subr.mxu0 0.0
    %v1497 = vand.u32 %v69, 4294901760
    %1498 = vmatpush1.msra.mxu0 %v1497
    %1499 = vmatprep.subr.mxu0 0.0
    %v1500 = vand.u32 %v70, 4294901760
    %1501 = vmatpush1.msra.mxu0 %v1500
    %1502 = vmatprep.subr.mxu0 0.0
    %v1503 = vand.u32 %v71, 4294901760
    %1504 = vmatpush1.msra.mxu0 %v1503
    %1505 = vmatprep.subr.mxu0 0.0
    %v1506 = vand.u32 %v72, 4294901760
    %1507 = vmatpush1.msra.mxu0 %v1506
    %1508 = vmatprep.subr.mxu0 0.0
    %v1509 = vand.u32 %v73, 4294901760
    %1510 = vmatpush1.msra.mxu0 %v1509
    %1511 = vmatprep.subr.mxu0 0.0
    %v1512 = vand.u32 %v74, 4294901760
    %1513 = vmatpush1.msra.mxu0 %v1512
    %1514 = vmatprep.subr.mxu0 0.0
    %v1515 = vand.u32 %v75, 4294901760
    %1516 = vmatpush1.msra.mxu0 %v1515
    %1517 = vmatprep.subr.mxu0 0.0
    %v1518 = vand.u32 %v76, 4294901760
    %1519 = vmatpush1.msra.mxu0 %v1518
    %1520 = vmatprep.subr.mxu0 0.0
    %v1521 = vand.u32 %v77, 4294901760
    %1522 = vmatpush1.msra.mxu0 %v1521
    %1523 = vmatprep.subr.mxu0 0.0
    %v1524 = vand.u32 %v78, 4294901760
    %1525 = vmatpush1.msra.mxu0 %v1524
    %1526 = vmatprep.subr.mxu0 0.0
    %v1527 = vand.u32 %v79, 4294901760
    %1528 = vmatpush1.msra.mxu0 %v1527
    %1529 = vmatprep.subr.mxu0 0.0
    %v1530 = vand.u32 %v80, 4294901760
    %1531 = vmatpush1.msra.mxu0 %v1530
    %1532 = vmatprep.subr.mxu0 0.0
    %v1533 = vand.u32 %v81, 4294901760
    %1534 = vmatpush1.msra.mxu0 %v1533
    %1535 = vmatprep.subr.mxu0 0.0
    %v1536 = vand.u32 %v82, 4294901760
    %1537 = vmatpush1.msra.mxu0 %v1536
    %1538 = vmatprep.subr.mxu0 0.0
    %v1539 = vand.u32 %v83, 4294901760
    %1540 = vmatpush1.msra.mxu0 %v1539
    %1541 = vmatprep.subr.mxu0 0.0
    %v1542 = vand.u32 %v84, 4294901760
    %1543 = vmatpush1.msra.mxu0 %v1542
    %1544 = vmatprep.subr.mxu0 0.0
    %v1545 = vand.u32 %v85, 4294901760
    %1546 = vmatpush1.msra.mxu0 %v1545
    %1547 = vmatprep.subr.mxu0 0.0
    %v1548 = vand.u32 %v86, 4294901760
    %1549 = vmatpush1.msra.mxu0 %v1548
    %1550 = vmatprep.subr.mxu0 0.0
    %v1551 = vand.u32 %v87, 4294901760
    %1552 = vmatpush1.msra.mxu0 %v1551
    %1553 = vmatprep.subr.mxu0 0.0
    %v1554 = vand.u32 %v88, 4294901760
    %1555 = vmatpush1.msra.mxu0 %v1554
    %1556 = vmatprep.subr.mxu0 0.0
    %v1557 = vand.u32 %v89, 4294901760
    %1558 = vmatpush1.msra.mxu0 %v1557
    %1559 = vmatprep.subr.mxu0 0.0
    %v1560 = vand.u32 %v90, 4294901760
    %1561 = vmatpush1.msra.mxu0 %v1560
    %1562 = vmatprep.subr.mxu0 0.0
    %v1563 = vand.u32 %v91, 4294901760
    %1564 = vmatpush1.msra.mxu0 %v1563
    %1565 = vmatprep.subr.mxu0 0.0
    %v1566 = vand.u32 %v92, 4294901760
    %1567 = vmatpush1.msra.mxu0 %v1566
    %1568 = vmatprep.subr.mxu0 0.0
    %v1569 = vand.u32 %v93, 4294901760
    %1570 = vmatpush1.msra.mxu0 %v1569
    %1571 = vmatprep.subr.mxu0 0.0
    %v1572 = vand.u32 %v94, 4294901760
    %1573 = vmatpush1.msra.mxu0 %v1572
    %1574 = vmatprep.subr.mxu0 0.0
    %v1575 = vand.u32 %v95, 4294901760
    %1576 = vmatpush1.msra.mxu0 %v1575
    %1577 = vmatprep.subr.mxu0 0.0
    %v1578 = vand.u32 %v96, 4294901760
    %1579 = vmatpush1.msra.mxu0 %v1578
    %1580 = vmatprep.subr.mxu0 0.0
    %v1581 = vand.u32 %v97, 4294901760
    %1582 = vmatpush1.msra.mxu0 %v1581
    %v1583 = vand.u32 %v30, 4294901760
    %v1584 = vsub.f32 %v30, %v1583
    %v1585 = vand.u32 %v1584, 4294901760
    %1586 = vmatprep.mubr.f32.mxu0 %v1585
    %v1587 = vand.u32 %v29, 4294901760
    %v1588 = vsub.f32 %v29, %v1587
    %v1589 = vand.u32 %v1588, 4294901760
    %1590 = vmatmul.mubr.f32.gmra.mrb[0].mxu0 %v1589
    %v1591 = vpop.f32.mrb[0].mxu0
    %v1592 = vadd.f32 %v1484, %v1591
    %v1593 = vpop.f32.mrb[0].mxu0
    %1594 = vdwg.mxu0
    %1595 = vmatprep.subr.mxu0 0.0
    %v1596 = vand.u32 %v66, 4294901760
    %v1597 = vsub.f32 %v66, %v1596
    %v1598 = vand.u32 %v1597, 4294901760
    %1599 = vmatpush1.msra.mxu0 %v1598
    %1600 = vmatprep.subr.mxu0 0.0
    %v1601 = vand.u32 %v67, 4294901760
    %v1602 = vsub.f32 %v67, %v1601
    %v1603 = vand.u32 %v1602, 4294901760
    %1604 = vmatpush1.msra.mxu0 %v1603
    %1605 = vmatprep.subr.mxu0 0.0
    %v1606 = vand.u32 %v68, 4294901760
    %v1607 = vsub.f32 %v68, %v1606
    %v1608 = vand.u32 %v1607, 4294901760
    %1609 = vmatpush1.msra.mxu0 %v1608
    %1610 = vmatprep.subr.mxu0 0.0
    %v1611 = vand.u32 %v69, 4294901760
    %v1612 = vsub.f32 %v69, %v1611
    %v1613 = vand.u32 %v1612, 4294901760
    %1614 = vmatpush1.msra.mxu0 %v1613
    %1615 = vmatprep.subr.mxu0 0.0
    %v1616 = vand.u32 %v70, 4294901760
    %v1617 = vsub.f32 %v70, %v1616
    %v1618 = vand.u32 %v1617, 4294901760
    %1619 = vmatpush1.msra.mxu0 %v1618
    %1620 = vmatprep.subr.mxu0 0.0
    %v1621 = vand.u32 %v71, 4294901760
    %v1622 = vsub.f32 %v71, %v1621
    %v1623 = vand.u32 %v1622, 4294901760
    %1624 = vmatpush1.msra.mxu0 %v1623
    %1625 = vmatprep.subr.mxu0 0.0
    %v1626 = vand.u32 %v72, 4294901760
    %v1627 = vsub.f32 %v72, %v1626
    %v1628 = vand.u32 %v1627, 4294901760
    %1629 = vmatpush1.msra.mxu0 %v1628
    %1630 = vmatprep.subr.mxu0 0.0
    %v1631 = vand.u32 %v73, 4294901760
    %v1632 = vsub.f32 %v73, %v1631
    %v1633 = vand.u32 %v1632, 4294901760
    %1634 = vmatpush1.msra.mxu0 %v1633
    %1635 = vmatprep.subr.mxu0 0.0
    %v1636 = vand.u32 %v74, 4294901760
    %v1637 = vsub.f32 %v74, %v1636
    %v1638 = vand.u32 %v1637, 4294901760
    %1639 = vmatpush1.msra.mxu0 %v1638
    %1640 = vmatprep.subr.mxu0 0.0
    %v1641 = vand.u32 %v75, 4294901760
    %v1642 = vsub.f32 %v75, %v1641
    %v1643 = vand.u32 %v1642, 4294901760
    %1644 = vmatpush1.msra.mxu0 %v1643
    %1645 = vmatprep.subr.mxu0 0.0
    %v1646 = vand.u32 %v76, 4294901760
    %v1647 = vsub.f32 %v76, %v1646
    %v1648 = vand.u32 %v1647, 4294901760
    %1649 = vmatpush1.msra.mxu0 %v1648
    %1650 = vmatprep.subr.mxu0 0.0
    %v1651 = vand.u32 %v77, 4294901760
    %v1652 = vsub.f32 %v77, %v1651
    %v1653 = vand.u32 %v1652, 4294901760
    %1654 = vmatpush1.msra.mxu0 %v1653
    %1655 = vmatprep.subr.mxu0 0.0
    %v1656 = vand.u32 %v78, 4294901760
    %v1657 = vsub.f32 %v78, %v1656
    %v1658 = vand.u32 %v1657, 4294901760
    %1659 = vmatpush1.msra.mxu0 %v1658
    %1660 = vmatprep.subr.mxu0 0.0
    %v1661 = vand.u32 %v79, 4294901760
    %v1662 = vsub.f32 %v79, %v1661
    %v1663 = vand.u32 %v1662, 4294901760
    %1664 = vmatpush1.msra.mxu0 %v1663
    %1665 = vmatprep.subr.mxu0 0.0
    %v1666 = vand.u32 %v80, 4294901760
    %v1667 = vsub.f32 %v80, %v1666
    %v1668 = vand.u32 %v1667, 4294901760
    %1669 = vmatpush1.msra.mxu0 %v1668
    %1670 = vmatprep.subr.mxu0 0.0
    %v1671 = vand.u32 %v81, 4294901760
    %v1672 = vsub.f32 %v81, %v1671
    %v1673 = vand.u32 %v1672, 4294901760
    %1674 = vmatpush1.msra.mxu0 %v1673
    %1675 = vmatprep.subr.mxu0 0.0
    %v1676 = vand.u32 %v82, 4294901760
    %v1677 = vsub.f32 %v82, %v1676
    %v1678 = vand.u32 %v1677, 4294901760
    %1679 = vmatpush1.msra.mxu0 %v1678
    %1680 = vmatprep.subr.mxu0 0.0
    %v1681 = vand.u32 %v83, 4294901760
    %v1682 = vsub.f32 %v83, %v1681
    %v1683 = vand.u32 %v1682, 4294901760
    %1684 = vmatpush1.msra.mxu0 %v1683
    %1685 = vmatprep.subr.mxu0 0.0
    %v1686 = vand.u32 %v84, 4294901760
    %v1687 = vsub.f32 %v84, %v1686
    %v1688 = vand.u32 %v1687, 4294901760
    %1689 = vmatpush1.msra.mxu0 %v1688
    %1690 = vmatprep.subr.mxu0 0.0
    %v1691 = vand.u32 %v85, 4294901760
    %v1692 = vsub.f32 %v85, %v1691
    %v1693 = vand.u32 %v1692, 4294901760
    %1694 = vmatpush1.msra.mxu0 %v1693
    %1695 = vmatprep.subr.mxu0 0.0
    %v1696 = vand.u32 %v86, 4294901760
    %v1697 = vsub.f32 %v86, %v1696
    %v1698 = vand.u32 %v1697, 4294901760
    %1699 = vmatpush1.msra.mxu0 %v1698
    %1700 = vmatprep.subr.mxu0 0.0
    %v1701 = vand.u32 %v87, 4294901760
    %v1702 = vsub.f32 %v87, %v1701
    %v1703 = vand.u32 %v1702, 4294901760
    %1704 = vmatpush1.msra.mxu0 %v1703
    %1705 = vmatprep.subr.mxu0 0.0
    %v1706 = vand.u32 %v88, 4294901760
    %v1707 = vsub.f32 %v88, %v1706
    %v1708 = vand.u32 %v1707, 4294901760
    %1709 = vmatpush1.msra.mxu0 %v1708
    %1710 = vmatprep.subr.mxu0 0.0
    %v1711 = vand.u32 %v89, 4294901760
    %v1712 = vsub.f32 %v89, %v1711
    %v1713 = vand.u32 %v1712, 4294901760
    %1714 = vmatpush1.msra.mxu0 %v1713
    %1715 = vmatprep.subr.mxu0 0.0
    %v1716 = vand.u32 %v90, 4294901760
    %v1717 = vsub.f32 %v90, %v1716
    %v1718 = vand.u32 %v1717, 4294901760
    %1719 = vmatpush1.msra.mxu0 %v1718
    %1720 = vmatprep.subr.mxu0 0.0
    %v1721 = vand.u32 %v91, 4294901760
    %v1722 = vsub.f32 %v91, %v1721
    %v1723 = vand.u32 %v1722, 4294901760
    %1724 = vmatpush1.msra.mxu0 %v1723
    %1725 = vmatprep.subr.mxu0 0.0
    %v1726 = vand.u32 %v92, 4294901760
    %v1727 = vsub.f32 %v92, %v1726
    %v1728 = vand.u32 %v1727, 4294901760
    %1729 = vmatpush1.msra.mxu0 %v1728
    %1730 = vmatprep.subr.mxu0 0.0
    %v1731 = vand.u32 %v93, 4294901760
    %v1732 = vsub.f32 %v93, %v1731
    %v1733 = vand.u32 %v1732, 4294901760
    %1734 = vmatpush1.msra.mxu0 %v1733
    %1735 = vmatprep.subr.mxu0 0.0
    %v1736 = vand.u32 %v94, 4294901760
    %v1737 = vsub.f32 %v94, %v1736
    %v1738 = vand.u32 %v1737, 4294901760
    %1739 = vmatpush1.msra.mxu0 %v1738
    %1740 = vmatprep.subr.mxu0 0.0
    %v1741 = vand.u32 %v95, 4294901760
    %v1742 = vsub.f32 %v95, %v1741
    %v1743 = vand.u32 %v1742, 4294901760
    %1744 = vmatpush1.msra.mxu0 %v1743
    %1745 = vmatprep.subr.mxu0 0.0
    %v1746 = vand.u32 %v96, 4294901760
    %v1747 = vsub.f32 %v96, %v1746
    %v1748 = vand.u32 %v1747, 4294901760
    %1749 = vmatpush1.msra.mxu0 %v1748
    %1750 = vmatprep.subr.mxu0 0.0
    %v1751 = vand.u32 %v97, 4294901760
    %v1752 = vsub.f32 %v97, %v1751
    %v1753 = vand.u32 %v1752, 4294901760
    %1754 = vmatpush1.msra.mxu0 %v1753
    %v1755 = vand.u32 %v30, 4294901760
    %1756 = vmatprep.mubr.f32.mxu0 %v1755
    %v1757 = vand.u32 %v29, 4294901760
    %1758 = vmatmul.mubr.f32.gmra.mrb[0].mxu0 %v1757
    %v1759 = vpop.f32.mrb[0].mxu0
    %v1760 = vadd.f32 %v1592, %v1759
    %v1761 = vpop.f32.mrb[0].mxu0
    %1762 = vdwg.mxu0
    %1763 = vmatprep.subr.mxu0 0.0
    %v1764 = vand.u32 %v66, 4294901760
    %1765 = vmatpush1.msra.mxu0 %v1764
    %1766 = vmatprep.subr.mxu0 0.0
    %v1767 = vand.u32 %v67, 4294901760
    %1768 = vmatpush1.msra.mxu0 %v1767
    %1769 = vmatprep.subr.mxu0 0.0
    %v1770 = vand.u32 %v68, 4294901760
    %1771 = vmatpush1.msra.mxu0 %v1770
    %1772 = vmatprep.subr.mxu0 0.0
    %v1773 = vand.u32 %v69, 4294901760
    %1774 = vmatpush1.msra.mxu0 %v1773
    %1775 = vmatprep.subr.mxu0 0.0
    %v1776 = vand.u32 %v70, 4294901760
    %1777 = vmatpush1.msra.mxu0 %v1776
    %1778 = vmatprep.subr.mxu0 0.0
    %v1779 = vand.u32 %v71, 4294901760
    %1780 = vmatpush1.msra.mxu0 %v1779
    %1781 = vmatprep.subr.mxu0 0.0
    %v1782 = vand.u32 %v72, 4294901760
    %1783 = vmatpush1.msra.mxu0 %v1782
    %1784 = vmatprep.subr.mxu0 0.0
    %v1785 = vand.u32 %v73, 4294901760
    %1786 = vmatpush1.msra.mxu0 %v1785
    %1787 = vmatprep.subr.mxu0 0.0
    %v1788 = vand.u32 %v74, 4294901760
    %1789 = vmatpush1.msra.mxu0 %v1788
    %1790 = vmatprep.subr.mxu0 0.0
    %v1791 = vand.u32 %v75, 4294901760
    %1792 = vmatpush1.msra.mxu0 %v1791
    %1793 = vmatprep.subr.mxu0 0.0
    %v1794 = vand.u32 %v76, 4294901760
    %1795 = vmatpush1.msra.mxu0 %v1794
    %1796 = vmatprep.subr.mxu0 0.0
    %v1797 = vand.u32 %v77, 4294901760
    %1798 = vmatpush1.msra.mxu0 %v1797
    %1799 = vmatprep.subr.mxu0 0.0
    %v1800 = vand.u32 %v78, 4294901760
    %1801 = vmatpush1.msra.mxu0 %v1800
    %1802 = vmatprep.subr.mxu0 0.0
    %v1803 = vand.u32 %v79, 4294901760
    %1804 = vmatpush1.msra.mxu0 %v1803
    %1805 = vmatprep.subr.mxu0 0.0
    %v1806 = vand.u32 %v80, 4294901760
    %1807 = vmatpush1.msra.mxu0 %v1806
    %1808 = vmatprep.subr.mxu0 0.0
    %v1809 = vand.u32 %v81, 4294901760
    %1810 = vmatpush1.msra.mxu0 %v1809
    %1811 = vmatprep.subr.mxu0 0.0
    %v1812 = vand.u32 %v82, 4294901760
    %1813 = vmatpush1.msra.mxu0 %v1812
    %1814 = vmatprep.subr.mxu0 0.0
    %v1815 = vand.u32 %v83, 4294901760
    %1816 = vmatpush1.msra.mxu0 %v1815
    %1817 = vmatprep.subr.mxu0 0.0
    %v1818 = vand.u32 %v84, 4294901760
    %1819 = vmatpush1.msra.mxu0 %v1818
    %1820 = vmatprep.subr.mxu0 0.0
    %v1821 = vand.u32 %v85, 4294901760
    %1822 = vmatpush1.msra.mxu0 %v1821
    %1823 = vmatprep.subr.mxu0 0.0
    %v1824 = vand.u32 %v86, 4294901760
    %1825 = vmatpush1.msra.mxu0 %v1824
    %1826 = vmatprep.subr.mxu0 0.0
    %v1827 = vand.u32 %v87, 4294901760
    %1828 = vmatpush1.msra.mxu0 %v1827
    %1829 = vmatprep.subr.mxu0 0.0
    %v1830 = vand.u32 %v88, 4294901760
    %1831 = vmatpush1.msra.mxu0 %v1830
    %1832 = vmatprep.subr.mxu0 0.0
    %v1833 = vand.u32 %v89, 4294901760
    %1834 = vmatpush1.msra.mxu0 %v1833
    %1835 = vmatprep.subr.mxu0 0.0
    %v1836 = vand.u32 %v90, 4294901760
    %1837 = vmatpush1.msra.mxu0 %v1836
    %1838 = vmatprep.subr.mxu0 0.0
    %v1839 = vand.u32 %v91, 4294901760
    %1840 = vmatpush1.msra.mxu0 %v1839
    %1841 = vmatprep.subr.mxu0 0.0
    %v1842 = vand.u32 %v92, 4294901760
    %1843 = vmatpush1.msra.mxu0 %v1842
    %1844 = vmatprep.subr.mxu0 0.0
    %v1845 = vand.u32 %v93, 4294901760
    %1846 = vmatpush1.msra.mxu0 %v1845
    %1847 = vmatprep.subr.mxu0 0.0
    %v1848 = vand.u32 %v94, 4294901760
    %1849 = vmatpush1.msra.mxu0 %v1848
    %1850 = vmatprep.subr.mxu0 0.0
    %v1851 = vand.u32 %v95, 4294901760
    %1852 = vmatpush1.msra.mxu0 %v1851
    %1853 = vmatprep.subr.mxu0 0.0
    %v1854 = vand.u32 %v96, 4294901760
    %1855 = vmatpush1.msra.mxu0 %v1854
    %1856 = vmatprep.subr.mxu0 0.0
    %v1857 = vand.u32 %v97, 4294901760
    %1858 = vmatpush1.msra.mxu0 %v1857
    %v1859 = vand.u32 %v30, 4294901760
    %1860 = vmatprep.mubr.f32.mxu0 %v1859
    %v1861 = vand.u32 %v29, 4294901760
    %1862 = vmatmul.mubr.f32.gmra.mrb[0].mxu0 %v1861
    %v1863 = vpop.f32.mrb[0].mxu0
    %v1864 = vadd.f32 %v1760, %v1863
    %v1865 = vpop.f32.mrb[0].mxu0
    %1866 = vdwg.mxu0
    %1867 = vmatprep.subr.mxu0 0.0
    %v1868 = vand.u32 %v98, 4294901760
    %1869 = vmatpush1.msra.mxu0 %v1868
    %1870 = vmatprep.subr.mxu0 0.0
    %v1871 = vand.u32 %v99, 4294901760
    %1872 = vmatpush1.msra.mxu0 %v1871
    %1873 = vmatprep.subr.mxu0 0.0
    %v1874 = vand.u32 %v100, 4294901760
    %1875 = vmatpush1.msra.mxu0 %v1874
    %1876 = vmatprep.subr.mxu0 0.0
    %v1877 = vand.u32 %v101, 4294901760
    %1878 = vmatpush1.msra.mxu0 %v1877
    %1879 = vmatprep.subr.mxu0 0.0
    %v1880 = vand.u32 %v102, 4294901760
    %1881 = vmatpush1.msra.mxu0 %v1880
    %1882 = vmatprep.subr.mxu0 0.0
    %v1883 = vand.u32 %v103, 4294901760
    %1884 = vmatpush1.msra.mxu0 %v1883
    %1885 = vmatprep.subr.mxu0 0.0
    %v1886 = vand.u32 %v104, 4294901760
    %1887 = vmatpush1.msra.mxu0 %v1886
    %1888 = vmatprep.subr.mxu0 0.0
    %v1889 = vand.u32 %v105, 4294901760
    %1890 = vmatpush1.msra.mxu0 %v1889
    %1891 = vmatprep.subr.mxu0 0.0
    %v1892 = vand.u32 %v106, 4294901760
    %1893 = vmatpush1.msra.mxu0 %v1892
    %1894 = vmatprep.subr.mxu0 0.0
    %v1895 = vand.u32 %v107, 4294901760
    %1896 = vmatpush1.msra.mxu0 %v1895
    %1897 = vmatprep.subr.mxu0 0.0
    %v1898 = vand.u32 %v108, 4294901760
    %1899 = vmatpush1.msra.mxu0 %v1898
    %1900 = vmatprep.subr.mxu0 0.0
    %v1901 = vand.u32 %v109, 4294901760
    %1902 = vmatpush1.msra.mxu0 %v1901
    %1903 = vmatprep.subr.mxu0 0.0
    %v1904 = vand.u32 %v110, 4294901760
    %1905 = vmatpush1.msra.mxu0 %v1904
    %1906 = vmatprep.subr.mxu0 0.0
    %v1907 = vand.u32 %v111, 4294901760
    %1908 = vmatpush1.msra.mxu0 %v1907
    %1909 = vmatprep.subr.mxu0 0.0
    %v1910 = vand.u32 %v112, 4294901760
    %1911 = vmatpush1.msra.mxu0 %v1910
    %1912 = vmatprep.subr.mxu0 0.0
    %v1913 = vand.u32 %v113, 4294901760
    %1914 = vmatpush1.msra.mxu0 %v1913
    %1915 = vmatprep.subr.mxu0 0.0
    %v1916 = vand.u32 %v114, 4294901760
    %1917 = vmatpush1.msra.mxu0 %v1916
    %1918 = vmatprep.subr.mxu0 0.0
    %v1919 = vand.u32 %v115, 4294901760
    %1920 = vmatpush1.msra.mxu0 %v1919
    %1921 = vmatprep.subr.mxu0 0.0
    %v1922 = vand.u32 %v116, 4294901760
    %1923 = vmatpush1.msra.mxu0 %v1922
    %1924 = vmatprep.subr.mxu0 0.0
    %v1925 = vand.u32 %v117, 4294901760
    %1926 = vmatpush1.msra.mxu0 %v1925
    %1927 = vmatprep.subr.mxu0 0.0
    %v1928 = vand.u32 %v118, 4294901760
    %1929 = vmatpush1.msra.mxu0 %v1928
    %1930 = vmatprep.subr.mxu0 0.0
    %v1931 = vand.u32 %v119, 4294901760
    %1932 = vmatpush1.msra.mxu0 %v1931
    %1933 = vmatprep.subr.mxu0 0.0
    %v1934 = vand.u32 %v120, 4294901760
    %1935 = vmatpush1.msra.mxu0 %v1934
    %1936 = vmatprep.subr.mxu0 0.0
    %v1937 = vand.u32 %v121, 4294901760
    %1938 = vmatpush1.msra.mxu0 %v1937
    %1939 = vmatprep.subr.mxu0 0.0
    %v1940 = vand.u32 %v122, 4294901760
    %1941 = vmatpush1.msra.mxu0 %v1940
    %1942 = vmatprep.subr.mxu0 0.0
    %v1943 = vand.u32 %v123, 4294901760
    %1944 = vmatpush1.msra.mxu0 %v1943
    %1945 = vmatprep.subr.mxu0 0.0
    %v1946 = vand.u32 %v124, 4294901760
    %1947 = vmatpush1.msra.mxu0 %v1946
    %1948 = vmatprep.subr.mxu0 0.0
    %v1949 = vand.u32 %v125, 4294901760
    %1950 = vmatpush1.msra.mxu0 %v1949
    %1951 = vmatprep.subr.mxu0 0.0
    %v1952 = vand.u32 %v126, 4294901760
    %1953 = vmatpush1.msra.mxu0 %v1952
    %1954 = vmatprep.subr.mxu0 0.0
    %v1955 = vand.u32 %v127, 4294901760
    %1956 = vmatpush1.msra.mxu0 %v1955
    %1957 = vmatprep.subr.mxu0 0.0
    %v1958 = vand.u32 %v128, 4294901760
    %1959 = vmatpush1.msra.mxu0 %v1958
    %1960 = vmatprep.subr.mxu0 0.0
    %v1961 = vand.u32 %v129, 4294901760
    %1962 = vmatpush1.msra.mxu0 %v1961
    %v1963 = vand.u32 %v32, 4294901760
    %v1964 = vsub.f32 %v32, %v1963
    %v1965 = vand.u32 %v1964, 4294901760
    %v1966 = vsub.f32 %v1964, %v1965
    %v1967 = vand.u32 %v1966, 4294901760
    %1968 = vmatprep.mubr.f32.mxu0 %v1967
    %v1969 = vand.u32 %v31, 4294901760
    %v1970 = vsub.f32 %v31, %v1969
    %v1971 = vand.u32 %v1970, 4294901760
    %v1972 = vsub.f32 %v1970, %v1971
    %v1973 = vand.u32 %v1972, 4294901760
    %1974 = vmatmul.mubr.f32.gmra.mrb[0].mxu0 %v1973
    %v1975 = vpop.f32.mrb[0].mxu0
    %v1976 = vadd.f32 %v1864, %v1975
    %v1977 = vpop.f32.mrb[0].mxu0
    %1978 = vdwg.mxu0
    %1979 = vmatprep.subr.mxu0 0.0
    %v1980 = vand.u32 %v98, 4294901760
    %v1981 = vsub.f32 %v98, %v1980
    %v1982 = vand.u32 %v1981, 4294901760
    %v1983 = vsub.f32 %v1981, %v1982
    %v1984 = vand.u32 %v1983, 4294901760
    %1985 = vmatpush1.msra.mxu0 %v1984
    %1986 = vmatprep.subr.mxu0 0.0
    %v1987 = vand.u32 %v99, 4294901760
    %v1988 = vsub.f32 %v99, %v1987
    %v1989 = vand.u32 %v1988, 4294901760
    %v1990 = vsub.f32 %v1988, %v1989
    %v1991 = vand.u32 %v1990, 4294901760
    %1992 = vmatpush1.msra.mxu0 %v1991
    %1993 = vmatprep.subr.mxu0 0.0
    %v1994 = vand.u32 %v100, 4294901760
    %v1995 = vsub.f32 %v100, %v1994
    %v1996 = vand.u32 %v1995, 4294901760
    %v1997 = vsub.f32 %v1995, %v1996
    %v1998 = vand.u32 %v1997, 4294901760
    %1999 = vmatpush1.msra.mxu0 %v1998
    %2000 = vmatprep.subr.mxu0 0.0
    %v2001 = vand.u32 %v101, 4294901760
    %v2002 = vsub.f32 %v101, %v2001
    %v2003 = vand.u32 %v2002, 4294901760
    %v2004 = vsub.f32 %v2002, %v2003
    %v2005 = vand.u32 %v2004, 4294901760
    %2006 = vmatpush1.msra.mxu0 %v2005
    %2007 = vmatprep.subr.mxu0 0.0
    %v2008 = vand.u32 %v102, 4294901760
    %v2009 = vsub.f32 %v102, %v2008
    %v2010 = vand.u32 %v2009, 4294901760
    %v2011 = vsub.f32 %v2009, %v2010
    %v2012 = vand.u32 %v2011, 4294901760
    %2013 = vmatpush1.msra.mxu0 %v2012
    %2014 = vmatprep.subr.mxu0 0.0
    %v2015 = vand.u32 %v103, 4294901760
    %v2016 = vsub.f32 %v103, %v2015
    %v2017 = vand.u32 %v2016, 4294901760
    %v2018 = vsub.f32 %v2016, %v2017
    %v2019 = vand.u32 %v2018, 4294901760
    %2020 = vmatpush1.msra.mxu0 %v2019
    %2021 = vmatprep.subr.mxu0 0.0
    %v2022 = vand.u32 %v104, 4294901760
    %v2023 = vsub.f32 %v104, %v2022
    %v2024 = vand.u32 %v2023, 4294901760
    %v2025 = vsub.f32 %v2023, %v2024
    %v2026 = vand.u32 %v2025, 4294901760
    %2027 = vmatpush1.msra.mxu0 %v2026
    %2028 = vmatprep.subr.mxu0 0.0
    %v2029 = vand.u32 %v105, 4294901760
    %v2030 = vsub.f32 %v105, %v2029
    %v2031 = vand.u32 %v2030, 4294901760
    %v2032 = vsub.f32 %v2030, %v2031
    %v2033 = vand.u32 %v2032, 4294901760
    %2034 = vmatpush1.msra.mxu0 %v2033
    %2035 = vmatprep.subr.mxu0 0.0
    %v2036 = vand.u32 %v106, 4294901760
    %v2037 = vsub.f32 %v106, %v2036
    %v2038 = vand.u32 %v2037, 4294901760
    %v2039 = vsub.f32 %v2037, %v2038
    %v2040 = vand.u32 %v2039, 4294901760
    %2041 = vmatpush1.msra.mxu0 %v2040
    %2042 = vmatprep.subr.mxu0 0.0
    %v2043 = vand.u32 %v107, 4294901760
    %v2044 = vsub.f32 %v107, %v2043
    %v2045 = vand.u32 %v2044, 4294901760
    %v2046 = vsub.f32 %v2044, %v2045
    %v2047 = vand.u32 %v2046, 4294901760
    %2048 = vmatpush1.msra.mxu0 %v2047
    %2049 = vmatprep.subr.mxu0 0.0
    %v2050 = vand.u32 %v108, 4294901760
    %v2051 = vsub.f32 %v108, %v2050
    %v2052 = vand.u32 %v2051, 4294901760
    %v2053 = vsub.f32 %v2051, %v2052
    %v2054 = vand.u32 %v2053, 4294901760
    %2055 = vmatpush1.msra.mxu0 %v2054
    %2056 = vmatprep.subr.mxu0 0.0
    %v2057 = vand.u32 %v109, 4294901760
    %v2058 = vsub.f32 %v109, %v2057
    %v2059 = vand.u32 %v2058, 4294901760
    %v2060 = vsub.f32 %v2058, %v2059
    %v2061 = vand.u32 %v2060, 4294901760
    %2062 = vmatpush1.msra.mxu0 %v2061
    %2063 = vmatprep.subr.mxu0 0.0
    %v2064 = vand.u32 %v110, 4294901760
    %v2065 = vsub.f32 %v110, %v2064
    %v2066 = vand.u32 %v2065, 4294901760
    %v2067 = vsub.f32 %v2065, %v2066
    %v2068 = vand.u32 %v2067, 4294901760
    %2069 = vmatpush1.msra.mxu0 %v2068
    %2070 = vmatprep.subr.mxu0 0.0
    %v2071 = vand.u32 %v111, 4294901760
    %v2072 = vsub.f32 %v111, %v2071
    %v2073 = vand.u32 %v2072, 4294901760
    %v2074 = vsub.f32 %v2072, %v2073
    %v2075 = vand.u32 %v2074, 4294901760
    %2076 = vmatpush1.msra.mxu0 %v2075
    %2077 = vmatprep.subr.mxu0 0.0
    %v2078 = vand.u32 %v112, 4294901760
    %v2079 = vsub.f32 %v112, %v2078
    %v2080 = vand.u32 %v2079, 4294901760
    %v2081 = vsub.f32 %v2079, %v2080
    %v2082 = vand.u32 %v2081, 4294901760
    %2083 = vmatpush1.msra.mxu0 %v2082
    %2084 = vmatprep.subr.mxu0 0.0
    %v2085 = vand.u32 %v113, 4294901760
    %v2086 = vsub.f32 %v113, %v2085
    %v2087 = vand.u32 %v2086, 4294901760
    %v2088 = vsub.f32 %v2086, %v2087
    %v2089 = vand.u32 %v2088, 4294901760
    %2090 = vmatpush1.msra.mxu0 %v2089
    %2091 = vmatprep.subr.mxu0 0.0
    %v2092 = vand.u32 %v114, 4294901760
    %v2093 = vsub.f32 %v114, %v2092
    %v2094 = vand.u32 %v2093, 4294901760
    %v2095 = vsub.f32 %v2093, %v2094
    %v2096 = vand.u32 %v2095, 4294901760
    %2097 = vmatpush1.msra.mxu0 %v2096
    %2098 = vmatprep.subr.mxu0 0.0
    %v2099 = vand.u32 %v115, 4294901760
    %v2100 = vsub.f32 %v115, %v2099
    %v2101 = vand.u32 %v2100, 4294901760
    %v2102 = vsub.f32 %v2100, %v2101
    %v2103 = vand.u32 %v2102, 4294901760
    %2104 = vmatpush1.msra.mxu0 %v2103
    %2105 = vmatprep.subr.mxu0 0.0
    %v2106 = vand.u32 %v116, 4294901760
    %v2107 = vsub.f32 %v116, %v2106
    %v2108 = vand.u32 %v2107, 4294901760
    %v2109 = vsub.f32 %v2107, %v2108
    %v2110 = vand.u32 %v2109, 4294901760
    %2111 = vmatpush1.msra.mxu0 %v2110
    %2112 = vmatprep.subr.mxu0 0.0
    %v2113 = vand.u32 %v117, 4294901760
    %v2114 = vsub.f32 %v117, %v2113
    %v2115 = vand.u32 %v2114, 4294901760
    %v2116 = vsub.f32 %v2114, %v2115
    %v2117 = vand.u32 %v2116, 4294901760
    %2118 = vmatpush1.msra.mxu0 %v2117
    %2119 = vmatprep.subr.mxu0 0.0
    %v2120 = vand.u32 %v118, 4294901760
    %v2121 = vsub.f32 %v118, %v2120
    %v2122 = vand.u32 %v2121, 4294901760
    %v2123 = vsub.f32 %v2121, %v2122
    %v2124 = vand.u32 %v2123, 4294901760
    %2125 = vmatpush1.msra.mxu0 %v2124
    %2126 = vmatprep.subr.mxu0 0.0
    %v2127 = vand.u32 %v119, 4294901760
    %v2128 = vsub.f32 %v119, %v2127
    %v2129 = vand.u32 %v2128, 4294901760
    %v2130 = vsub.f32 %v2128, %v2129
    %v2131 = vand.u32 %v2130, 4294901760
    %2132 = vmatpush1.msra.mxu0 %v2131
    %2133 = vmatprep.subr.mxu0 0.0
    %v2134 = vand.u32 %v120, 4294901760
    %v2135 = vsub.f32 %v120, %v2134
    %v2136 = vand.u32 %v2135, 4294901760
    %v2137 = vsub.f32 %v2135, %v2136
    %v2138 = vand.u32 %v2137, 4294901760
    %2139 = vmatpush1.msra.mxu0 %v2138
    %2140 = vmatprep.subr.mxu0 0.0
    %v2141 = vand.u32 %v121, 4294901760
    %v2142 = vsub.f32 %v121, %v2141
    %v2143 = vand.u32 %v2142, 4294901760
    %v2144 = vsub.f32 %v2142, %v2143
    %v2145 = vand.u32 %v2144, 4294901760
    %2146 = vmatpush1.msra.mxu0 %v2145
    %2147 = vmatprep.subr.mxu0 0.0
    %v2148 = vand.u32 %v122, 4294901760
    %v2149 = vsub.f32 %v122, %v2148
    %v2150 = vand.u32 %v2149, 4294901760
    %v2151 = vsub.f32 %v2149, %v2150
    %v2152 = vand.u32 %v2151, 4294901760
    %2153 = vmatpush1.msra.mxu0 %v2152
    %2154 = vmatprep.subr.mxu0 0.0
    %v2155 = vand.u32 %v123, 4294901760
    %v2156 = vsub.f32 %v123, %v2155
    %v2157 = vand.u32 %v2156, 4294901760
    %v2158 = vsub.f32 %v2156, %v2157
    %v2159 = vand.u32 %v2158, 4294901760
    %2160 = vmatpush1.msra.mxu0 %v2159
    %2161 = vmatprep.subr.mxu0 0.0
    %v2162 = vand.u32 %v124, 4294901760
    %v2163 = vsub.f32 %v124, %v2162
    %v2164 = vand.u32 %v2163, 4294901760
    %v2165 = vsub.f32 %v2163, %v2164
    %v2166 = vand.u32 %v2165, 4294901760
    %2167 = vmatpush1.msra.mxu0 %v2166
    %2168 = vmatprep.subr.mxu0 0.0
    %v2169 = vand.u32 %v125, 4294901760
    %v2170 = vsub.f32 %v125, %v2169
    %v2171 = vand.u32 %v2170, 4294901760
    %v2172 = vsub.f32 %v2170, %v2171
    %v2173 = vand.u32 %v2172, 4294901760
    %2174 = vmatpush1.msra.mxu0 %v2173
    %2175 = vmatprep.subr.mxu0 0.0
    %v2176 = vand.u32 %v126, 4294901760
    %v2177 = vsub.f32 %v126, %v2176
    %v2178 = vand.u32 %v2177, 4294901760
    %v2179 = vsub.f32 %v2177, %v2178
    %v2180 = vand.u32 %v2179, 4294901760
    %2181 = vmatpush1.msra.mxu0 %v2180
    %2182 = vmatprep.subr.mxu0 0.0
    %v2183 = vand.u32 %v127, 4294901760
    %v2184 = vsub.f32 %v127, %v2183
    %v2185 = vand.u32 %v2184, 4294901760
    %v2186 = vsub.f32 %v2184, %v2185
    %v2187 = vand.u32 %v2186, 4294901760
    %2188 = vmatpush1.msra.mxu0 %v2187
    %2189 = vmatprep.subr.mxu0 0.0
    %v2190 = vand.u32 %v128, 4294901760
    %v2191 = vsub.f32 %v128, %v2190
    %v2192 = vand.u32 %v2191, 4294901760
    %v2193 = vsub.f32 %v2191, %v2192
    %v2194 = vand.u32 %v2193, 4294901760
    %2195 = vmatpush1.msra.mxu0 %v2194
    %2196 = vmatprep.subr.mxu0 0.0
    %v2197 = vand.u32 %v129, 4294901760
    %v2198 = vsub.f32 %v129, %v2197
    %v2199 = vand.u32 %v2198, 4294901760
    %v2200 = vsub.f32 %v2198, %v2199
    %v2201 = vand.u32 %v2200, 4294901760
    %2202 = vmatpush1.msra.mxu0 %v2201
    %v2203 = vand.u32 %v32, 4294901760
    %2204 = vmatprep.mubr.f32.mxu0 %v2203
    %v2205 = vand.u32 %v31, 4294901760
    %2206 = vmatmul.mubr.f32.gmra.mrb[0].mxu0 %v2205
    %v2207 = vpop.f32.mrb[0].mxu0
    %v2208 = vadd.f32 %v1976, %v2207
    %v2209 = vpop.f32.mrb[0].mxu0
    %2210 = vdwg.mxu0
    %2211 = vmatprep.subr.mxu0 0.0
    %v2212 = vand.u32 %v98, 4294901760
    %v2213 = vsub.f32 %v98, %v2212
    %2214 = vmatpush1.msra.mxu0 %v2213
    %2215 = vmatprep.subr.mxu0 0.0
    %v2216 = vand.u32 %v99, 4294901760
    %v2217 = vsub.f32 %v99, %v2216
    %2218 = vmatpush1.msra.mxu0 %v2217
    %2219 = vmatprep.subr.mxu0 0.0
    %v2220 = vand.u32 %v100, 4294901760
    %v2221 = vsub.f32 %v100, %v2220
    %2222 = vmatpush1.msra.mxu0 %v2221
    %2223 = vmatprep.subr.mxu0 0.0
    %v2224 = vand.u32 %v101, 4294901760
    %v2225 = vsub.f32 %v101, %v2224
    %2226 = vmatpush1.msra.mxu0 %v2225
    %2227 = vmatprep.subr.mxu0 0.0
    %v2228 = vand.u32 %v102, 4294901760
    %v2229 = vsub.f32 %v102, %v2228
    %2230 = vmatpush1.msra.mxu0 %v2229
    %2231 = vmatprep.subr.mxu0 0.0
    %v2232 = vand.u32 %v103, 4294901760
    %v2233 = vsub.f32 %v103, %v2232
    %2234 = vmatpush1.msra.mxu0 %v2233
    %2235 = vmatprep.subr.mxu0 0.0
    %v2236 = vand.u32 %v104, 4294901760
    %v2237 = vsub.f32 %v104, %v2236
    %2238 = vmatpush1.msra.mxu0 %v2237
    %2239 = vmatprep.subr.mxu0 0.0
    %v2240 = vand.u32 %v105, 4294901760
    %v2241 = vsub.f32 %v105, %v2240
    %2242 = vmatpush1.msra.mxu0 %v2241
    %2243 = vmatprep.subr.mxu0 0.0
    %v2244 = vand.u32 %v106, 4294901760
    %v2245 = vsub.f32 %v106, %v2244
    %2246 = vmatpush1.msra.mxu0 %v2245
    %2247 = vmatprep.subr.mxu0 0.0
    %v2248 = vand.u32 %v107, 4294901760
    %v2249 = vsub.f32 %v107, %v2248
    %2250 = vmatpush1.msra.mxu0 %v2249
    %2251 = vmatprep.subr.mxu0 0.0
    %v2252 = vand.u32 %v108, 4294901760
    %v2253 = vsub.f32 %v108, %v2252
    %2254 = vmatpush1.msra.mxu0 %v2253
    %2255 = vmatprep.subr.mxu0 0.0
    %v2256 = vand.u32 %v109, 4294901760
    %v2257 = vsub.f32 %v109, %v2256
    %2258 = vmatpush1.msra.mxu0 %v2257
    %2259 = vmatprep.subr.mxu0 0.0
    %v2260 = vand.u32 %v110, 4294901760
    %v2261 = vsub.f32 %v110, %v2260
    %2262 = vmatpush1.msra.mxu0 %v2261
    %2263 = vmatprep.subr.mxu0 0.0
    %v2264 = vand.u32 %v111, 4294901760
    %v2265 = vsub.f32 %v111, %v2264
    %2266 = vmatpush1.msra.mxu0 %v2265
    %2267 = vmatprep.subr.mxu0 0.0
    %v2268 = vand.u32 %v112, 4294901760
    %v2269 = vsub.f32 %v112, %v2268
    %2270 = vmatpush1.msra.mxu0 %v2269
    %2271 = vmatprep.subr.mxu0 0.0
    %v2272 = vand.u32 %v113, 4294901760
    %v2273 = vsub.f32 %v113, %v2272
    %2274 = vmatpush1.msra.mxu0 %v2273
    %2275 = vmatprep.subr.mxu0 0.0
    %v2276 = vand.u32 %v114, 4294901760
    %v2277 = vsub.f32 %v114, %v2276
    %2278 = vmatpush1.msra.mxu0 %v2277
    %2279 = vmatprep.subr.mxu0 0.0
    %v2280 = vand.u32 %v115, 4294901760
    %v2281 = vsub.f32 %v115, %v2280
    %2282 = vmatpush1.msra.mxu0 %v2281
    %2283 = vmatprep.subr.mxu0 0.0
    %v2284 = vand.u32 %v116, 4294901760
    %v2285 = vsub.f32 %v116, %v2284
    %2286 = vmatpush1.msra.mxu0 %v2285
    %2287 = vmatprep.subr.mxu0 0.0
    %v2288 = vand.u32 %v117, 4294901760
    %v2289 = vsub.f32 %v117, %v2288
    %2290 = vmatpush1.msra.mxu0 %v2289
    %2291 = vmatprep.subr.mxu0 0.0
    %v2292 = vand.u32 %v118, 4294901760
    %v2293 = vsub.f32 %v118, %v2292
    %2294 = vmatpush1.msra.mxu0 %v2293
    %2295 = vmatprep.subr.mxu0 0.0
    %v2296 = vand.u32 %v119, 4294901760
    %v2297 = vsub.f32 %v119, %v2296
    %2298 = vmatpush1.msra.mxu0 %v2297
    %2299 = vmatprep.subr.mxu0 0.0
    %v2300 = vand.u32 %v120, 4294901760
    %v2301 = vsub.f32 %v120, %v2300
    %2302 = vmatpush1.msra.mxu0 %v2301
    %2303 = vmatprep.subr.mxu0 0.0
    %v2304 = vand.u32 %v121, 4294901760
    %v2305 = vsub.f32 %v121, %v2304
    %2306 = vmatpush1.msra.mxu0 %v2305
    %2307 = vmatprep.subr.mxu0 0.0
    %v2308 = vand.u32 %v122, 4294901760
    %v2309 = vsub.f32 %v122, %v2308
    %2310 = vmatpush1.msra.mxu0 %v2309
    %2311 = vmatprep.subr.mxu0 0.0
    %v2312 = vand.u32 %v123, 4294901760
    %v2313 = vsub.f32 %v123, %v2312
    %2314 = vmatpush1.msra.mxu0 %v2313
    %2315 = vmatprep.subr.mxu0 0.0
    %v2316 = vand.u32 %v124, 4294901760
    %v2317 = vsub.f32 %v124, %v2316
    %2318 = vmatpush1.msra.mxu0 %v2317
    %2319 = vmatprep.subr.mxu0 0.0
    %v2320 = vand.u32 %v125, 4294901760
    %v2321 = vsub.f32 %v125, %v2320
    %2322 = vmatpush1.msra.mxu0 %v2321
    %2323 = vmatprep.subr.mxu0 0.0
    %v2324 = vand.u32 %v126, 4294901760
    %v2325 = vsub.f32 %v126, %v2324
    %2326 = vmatpush1.msra.mxu0 %v2325
    %2327 = vmatprep.subr.mxu0 0.0
    %v2328 = vand.u32 %v127, 4294901760
    %v2329 = vsub.f32 %v127, %v2328
    %2330 = vmatpush1.msra.mxu0 %v2329
    %2331 = vmatprep.subr.mxu0 0.0
    %v2332 = vand.u32 %v128, 4294901760
    %v2333 = vsub.f32 %v128, %v2332
    %2334 = vmatpush1.msra.mxu0 %v2333
    %2335 = vmatprep.subr.mxu0 0.0
    %v2336 = vand.u32 %v129, 4294901760
    %v2337 = vsub.f32 %v129, %v2336
    %2338 = vmatpush1.msra.mxu0 %v2337
    %v2339 = vand.u32 %v32, 4294901760
    %v2340 = vsub.f32 %v32, %v2339
    %2341 = vmatprep.mubr.f32.mxu0 %v2340
    %v2342 = vand.u32 %v31, 4294901760
    %v2343 = vsub.f32 %v31, %v2342
    %2344 = vmatmul.mubr.f32.gmra.mrb[0].mxu0 %v2343
    %v2345 = vpop.f32.mrb[0].mxu0
    %v2346 = vadd.f32 %v2208, %v2345
    %v2347 = vpop.f32.mrb[0].mxu0
    %2348 = vdwg.mxu0
    %2349 = vmatprep.subr.mxu0 0.0
    %v2350 = vand.u32 %v98, 4294901760
    %2351 = vmatpush1.msra.mxu0 %v2350
    %2352 = vmatprep.subr.mxu0 0.0
    %v2353 = vand.u32 %v99, 4294901760
    %2354 = vmatpush1.msra.mxu0 %v2353
    %2355 = vmatprep.subr.mxu0 0.0
    %v2356 = vand.u32 %v100, 4294901760
    %2357 = vmatpush1.msra.mxu0 %v2356
    %2358 = vmatprep.subr.mxu0 0.0
    %v2359 = vand.u32 %v101, 4294901760
    %2360 = vmatpush1.msra.mxu0 %v2359
    %2361 = vmatprep.subr.mxu0 0.0
    %v2362 = vand.u32 %v102, 4294901760
    %2363 = vmatpush1.msra.mxu0 %v2362
    %2364 = vmatprep.subr.mxu0 0.0
    %v2365 = vand.u32 %v103, 4294901760
    %2366 = vmatpush1.msra.mxu0 %v2365
    %2367 = vmatprep.subr.mxu0 0.0
    %v2368 = vand.u32 %v104, 4294901760
    %2369 = vmatpush1.msra.mxu0 %v2368
    %2370 = vmatprep.subr.mxu0 0.0
    %v2371 = vand.u32 %v105, 4294901760
    %2372 = vmatpush1.msra.mxu0 %v2371
    %2373 = vmatprep.subr.mxu0 0.0
    %v2374 = vand.u32 %v106, 4294901760
    %2375 = vmatpush1.msra.mxu0 %v2374
    %2376 = vmatprep.subr.mxu0 0.0
    %v2377 = vand.u32 %v107, 4294901760
    %2378 = vmatpush1.msra.mxu0 %v2377
    %2379 = vmatprep.subr.mxu0 0.0
    %v2380 = vand.u32 %v108, 4294901760
    %2381 = vmatpush1.msra.mxu0 %v2380
    %2382 = vmatprep.subr.mxu0 0.0
    %v2383 = vand.u32 %v109, 4294901760
    %2384 = vmatpush1.msra.mxu0 %v2383
    %2385 = vmatprep.subr.mxu0 0.0
    %v2386 = vand.u32 %v110, 4294901760
    %2387 = vmatpush1.msra.mxu0 %v2386
    %2388 = vmatprep.subr.mxu0 0.0
    %v2389 = vand.u32 %v111, 4294901760
    %2390 = vmatpush1.msra.mxu0 %v2389
    %2391 = vmatprep.subr.mxu0 0.0
    %v2392 = vand.u32 %v112, 4294901760
    %2393 = vmatpush1.msra.mxu0 %v2392
    %2394 = vmatprep.subr.mxu0 0.0
    %v2395 = vand.u32 %v113, 4294901760
    %2396 = vmatpush1.msra.mxu0 %v2395
    %2397 = vmatprep.subr.mxu0 0.0
    %v2398 = vand.u32 %v114, 4294901760
    %2399 = vmatpush1.msra.mxu0 %v2398
    %2400 = vmatprep.subr.mxu0 0.0
    %v2401 = vand.u32 %v115, 4294901760
    %2402 = vmatpush1.msra.mxu0 %v2401
    %2403 = vmatprep.subr.mxu0 0.0
    %v2404 = vand.u32 %v116, 4294901760
    %2405 = vmatpush1.msra.mxu0 %v2404
    %2406 = vmatprep.subr.mxu0 0.0
    %v2407 = vand.u32 %v117, 4294901760
    %2408 = vmatpush1.msra.mxu0 %v2407
    %2409 = vmatprep.subr.mxu0 0.0
    %v2410 = vand.u32 %v118, 4294901760
    %2411 = vmatpush1.msra.mxu0 %v2410
    %2412 = vmatprep.subr.mxu0 0.0
    %v2413 = vand.u32 %v119, 4294901760
    %2414 = vmatpush1.msra.mxu0 %v2413
    %2415 = vmatprep.subr.mxu0 0.0
    %v2416 = vand.u32 %v120, 4294901760
    %2417 = vmatpush1.msra.mxu0 %v2416
    %2418 = vmatprep.subr.mxu0 0.0
    %v2419 = vand.u32 %v121, 4294901760
    %2420 = vmatpush1.msra.mxu0 %v2419
    %2421 = vmatprep.subr.mxu0 0.0
    %v2422 = vand.u32 %v122, 4294901760
    %2423 = vmatpush1.msra.mxu0 %v2422
    %2424 = vmatprep.subr.mxu0 0.0
    %v2425 = vand.u32 %v123, 4294901760
    %2426 = vmatpush1.msra.mxu0 %v2425
    %2427 = vmatprep.subr.mxu0 0.0
    %v2428 = vand.u32 %v124, 4294901760
    %2429 = vmatpush1.msra.mxu0 %v2428
    %2430 = vmatprep.subr.mxu0 0.0
    %v2431 = vand.u32 %v125, 4294901760
    %2432 = vmatpush1.msra.mxu0 %v2431
    %2433 = vmatprep.subr.mxu0 0.0
    %v2434 = vand.u32 %v126, 4294901760
    %2435 = vmatpush1.msra.mxu0 %v2434
    %2436 = vmatprep.subr.mxu0 0.0
    %v2437 = vand.u32 %v127, 4294901760
    %2438 = vmatpush1.msra.mxu0 %v2437
    %2439 = vmatprep.subr.mxu0 0.0
    %v2440 = vand.u32 %v128, 4294901760
    %2441 = vmatpush1.msra.mxu0 %v2440
    %2442 = vmatprep.subr.mxu0 0.0
    %v2443 = vand.u32 %v129, 4294901760
    %2444 = vmatpush1.msra.mxu0 %v2443
    %v2445 = vand.u32 %v32, 4294901760
    %v2446 = vsub.f32 %v32, %v2445
    %v2447 = vand.u32 %v2446, 4294901760
    %2448 = vmatprep.mubr.f32.mxu0 %v2447
    %v2449 = vand.u32 %v31, 4294901760
    %v2450 = vsub.f32 %v31, %v2449
    %v2451 = vand.u32 %v2450, 4294901760
    %2452 = vmatmul.mubr.f32.gmra.mrb[0].mxu0 %v2451
    %v2453 = vpop.f32.mrb[0].mxu0
    %v2454 = vadd.f32 %v2346, %v2453
    %v2455 = vpop.f32.mrb[0].mxu0
    %2456 = vdwg.mxu0
    %2457 = vmatprep.subr.mxu0 0.0
    %v2458 = vand.u32 %v98, 4294901760
    %v2459 = vsub.f32 %v98, %v2458
    %v2460 = vand.u32 %v2459, 4294901760
    %2461 = vmatpush1.msra.mxu0 %v2460
    %2462 = vmatprep.subr.mxu0 0.0
    %v2463 = vand.u32 %v99, 4294901760
    %v2464 = vsub.f32 %v99, %v2463
    %v2465 = vand.u32 %v2464, 4294901760
    %2466 = vmatpush1.msra.mxu0 %v2465
    %2467 = vmatprep.subr.mxu0 0.0
    %v2468 = vand.u32 %v100, 4294901760
    %v2469 = vsub.f32 %v100, %v2468
    %v2470 = vand.u32 %v2469, 4294901760
    %2471 = vmatpush1.msra.mxu0 %v2470
    %2472 = vmatprep.subr.mxu0 0.0
    %v2473 = vand.u32 %v101, 4294901760
    %v2474 = vsub.f32 %v101, %v2473
    %v2475 = vand.u32 %v2474, 4294901760
    %2476 = vmatpush1.msra.mxu0 %v2475
    %2477 = vmatprep.subr.mxu0 0.0
    %v2478 = vand.u32 %v102, 4294901760
    %v2479 = vsub.f32 %v102, %v2478
    %v2480 = vand.u32 %v2479, 4294901760
    %2481 = vmatpush1.msra.mxu0 %v2480
    %2482 = vmatprep.subr.mxu0 0.0
    %v2483 = vand.u32 %v103, 4294901760
    %v2484 = vsub.f32 %v103, %v2483
    %v2485 = vand.u32 %v2484, 4294901760
    %2486 = vmatpush1.msra.mxu0 %v2485
    %2487 = vmatprep.subr.mxu0 0.0
    %v2488 = vand.u32 %v104, 4294901760
    %v2489 = vsub.f32 %v104, %v2488
    %v2490 = vand.u32 %v2489, 4294901760
    %2491 = vmatpush1.msra.mxu0 %v2490
    %2492 = vmatprep.subr.mxu0 0.0
    %v2493 = vand.u32 %v105, 4294901760
    %v2494 = vsub.f32 %v105, %v2493
    %v2495 = vand.u32 %v2494, 4294901760
    %2496 = vmatpush1.msra.mxu0 %v2495
    %2497 = vmatprep.subr.mxu0 0.0
    %v2498 = vand.u32 %v106, 4294901760
    %v2499 = vsub.f32 %v106, %v2498
    %v2500 = vand.u32 %v2499, 4294901760
    %2501 = vmatpush1.msra.mxu0 %v2500
    %2502 = vmatprep.subr.mxu0 0.0
    %v2503 = vand.u32 %v107, 4294901760
    %v2504 = vsub.f32 %v107, %v2503
    %v2505 = vand.u32 %v2504, 4294901760
    %2506 = vmatpush1.msra.mxu0 %v2505
    %2507 = vmatprep.subr.mxu0 0.0
    %v2508 = vand.u32 %v108, 4294901760
    %v2509 = vsub.f32 %v108, %v2508
    %v2510 = vand.u32 %v2509, 4294901760
    %2511 = vmatpush1.msra.mxu0 %v2510
    %2512 = vmatprep.subr.mxu0 0.0
    %v2513 = vand.u32 %v109, 4294901760
    %v2514 = vsub.f32 %v109, %v2513
    %v2515 = vand.u32 %v2514, 4294901760
    %2516 = vmatpush1.msra.mxu0 %v2515
    %2517 = vmatprep.subr.mxu0 0.0
    %v2518 = vand.u32 %v110, 4294901760
    %v2519 = vsub.f32 %v110, %v2518
    %v2520 = vand.u32 %v2519, 4294901760
    %2521 = vmatpush1.msra.mxu0 %v2520
    %2522 = vmatprep.subr.mxu0 0.0
    %v2523 = vand.u32 %v111, 4294901760
    %v2524 = vsub.f32 %v111, %v2523
    %v2525 = vand.u32 %v2524, 4294901760
    %2526 = vmatpush1.msra.mxu0 %v2525
    %2527 = vmatprep.subr.mxu0 0.0
    %v2528 = vand.u32 %v112, 4294901760
    %v2529 = vsub.f32 %v112, %v2528
    %v2530 = vand.u32 %v2529, 4294901760
    %2531 = vmatpush1.msra.mxu0 %v2530
    %2532 = vmatprep.subr.mxu0 0.0
    %v2533 = vand.u32 %v113, 4294901760
    %v2534 = vsub.f32 %v113, %v2533
    %v2535 = vand.u32 %v2534, 4294901760
    %2536 = vmatpush1.msra.mxu0 %v2535
    %2537 = vmatprep.subr.mxu0 0.0
    %v2538 = vand.u32 %v114, 4294901760
    %v2539 = vsub.f32 %v114, %v2538
    %v2540 = vand.u32 %v2539, 4294901760
    %2541 = vmatpush1.msra.mxu0 %v2540
    %2542 = vmatprep.subr.mxu0 0.0
    %v2543 = vand.u32 %v115, 4294901760
    %v2544 = vsub.f32 %v115, %v2543
    %v2545 = vand.u32 %v2544, 4294901760
    %2546 = vmatpush1.msra.mxu0 %v2545
    %2547 = vmatprep.subr.mxu0 0.0
    %v2548 = vand.u32 %v116, 4294901760
    %v2549 = vsub.f32 %v116, %v2548
    %v2550 = vand.u32 %v2549, 4294901760
    %2551 = vmatpush1.msra.mxu0 %v2550
    %2552 = vmatprep.subr.mxu0 0.0
    %v2553 = vand.u32 %v117, 4294901760
    %v2554 = vsub.f32 %v117, %v2553
    %v2555 = vand.u32 %v2554, 4294901760
    %2556 = vmatpush1.msra.mxu0 %v2555
    %2557 = vmatprep.subr.mxu0 0.0
    %v2558 = vand.u32 %v118, 4294901760
    %v2559 = vsub.f32 %v118, %v2558
    %v2560 = vand.u32 %v2559, 4294901760
    %2561 = vmatpush1.msra.mxu0 %v2560
    %2562 = vmatprep.subr.mxu0 0.0
    %v2563 = vand.u32 %v119, 4294901760
    %v2564 = vsub.f32 %v119, %v2563
    %v2565 = vand.u32 %v2564, 4294901760
    %2566 = vmatpush1.msra.mxu0 %v2565
    %2567 = vmatprep.subr.mxu0 0.0
    %v2568 = vand.u32 %v120, 4294901760
    %v2569 = vsub.f32 %v120, %v2568
    %v2570 = vand.u32 %v2569, 4294901760
    %2571 = vmatpush1.msra.mxu0 %v2570
    %2572 = vmatprep.subr.mxu0 0.0
    %v2573 = vand.u32 %v121, 4294901760
    %v2574 = vsub.f32 %v121, %v2573
    %v2575 = vand.u32 %v2574, 4294901760
    %2576 = vmatpush1.msra.mxu0 %v2575
    %2577 = vmatprep.subr.mxu0 0.0
    %v2578 = vand.u32 %v122, 4294901760
    %v2579 = vsub.f32 %v122, %v2578
    %v2580 = vand.u32 %v2579, 4294901760
    %2581 = vmatpush1.msra.mxu0 %v2580
    %2582 = vmatprep.subr.mxu0 0.0
    %v2583 = vand.u32 %v123, 4294901760
    %v2584 = vsub.f32 %v123, %v2583
    %v2585 = vand.u32 %v2584, 4294901760
    %2586 = vmatpush1.msra.mxu0 %v2585
    %2587 = vmatprep.subr.mxu0 0.0
    %v2588 = vand.u32 %v124, 4294901760
    %v2589 = vsub.f32 %v124, %v2588
    %v2590 = vand.u32 %v2589, 4294901760
    %2591 = vmatpush1.msra.mxu0 %v2590
    %2592 = vmatprep.subr.mxu0 0.0
    %v2593 = vand.u32 %v125, 4294901760
    %v2594 = vsub.f32 %v125, %v2593
    %v2595 = vand.u32 %v2594, 4294901760
    %2596 = vmatpush1.msra.mxu0 %v2595
    %2597 = vmatprep.subr.mxu0 0.0
    %v2598 = vand.u32 %v126, 4294901760
    %v2599 = vsub.f32 %v126, %v2598
    %v2600 = vand.u32 %v2599, 4294901760
    %2601 = vmatpush1.msra.mxu0 %v2600
    %2602 = vmatprep.subr.mxu0 0.0
    %v2603 = vand.u32 %v127, 4294901760
    %v2604 = vsub.f32 %v127, %v2603
    %v2605 = vand.u32 %v2604, 4294901760
    %2606 = vmatpush1.msra.mxu0 %v2605
    %2607 = vmatprep.subr.mxu0 0.0
    %v2608 = vand.u32 %v128, 4294901760
    %v2609 = vsub.f32 %v128, %v2608
    %v2610 = vand.u32 %v2609, 4294901760
    %2611 = vmatpush1.msra.mxu0 %v2610
    %2612 = vmatprep.subr.mxu0 0.0
    %v2613 = vand.u32 %v129, 4294901760
    %v2614 = vsub.f32 %v129, %v2613
    %v2615 = vand.u32 %v2614, 4294901760
    %2616 = vmatpush1.msra.mxu0 %v2615
    %v2617 = vand.u32 %v32, 4294901760
    %2618 = vmatprep.mubr.f32.mxu0 %v2617
    %v2619 = vand.u32 %v31, 4294901760
    %2620 = vmatmul.mubr.f32.gmra.mrb[0].mxu0 %v2619
    %v2621 = vpop.f32.mrb[0].mxu0
    %v2622 = vadd.f32 %v2454, %v2621
    %v2623 = vpop.f32.mrb[0].mxu0
    %2624 = vdwg.mxu0
    %2625 = vmatprep.subr.mxu0 0.0
    %v2626 = vand.u32 %v98, 4294901760
    %2627 = vmatpush1.msra.mxu0 %v2626
    %2628 = vmatprep.subr.mxu0 0.0
    %v2629 = vand.u32 %v99, 4294901760
    %2630 = vmatpush1.msra.mxu0 %v2629
    %2631 = vmatprep.subr.mxu0 0.0
    %v2632 = vand.u32 %v100, 4294901760
    %2633 = vmatpush1.msra.mxu0 %v2632
    %2634 = vmatprep.subr.mxu0 0.0
    %v2635 = vand.u32 %v101, 4294901760
    %2636 = vmatpush1.msra.mxu0 %v2635
    %2637 = vmatprep.subr.mxu0 0.0
    %v2638 = vand.u32 %v102, 4294901760
    %2639 = vmatpush1.msra.mxu0 %v2638
    %2640 = vmatprep.subr.mxu0 0.0
    %v2641 = vand.u32 %v103, 4294901760
    %2642 = vmatpush1.msra.mxu0 %v2641
    %2643 = vmatprep.subr.mxu0 0.0
    %v2644 = vand.u32 %v104, 4294901760
    %2645 = vmatpush1.msra.mxu0 %v2644
    %2646 = vmatprep.subr.mxu0 0.0
    %v2647 = vand.u32 %v105, 4294901760
    %2648 = vmatpush1.msra.mxu0 %v2647
    %2649 = vmatprep.subr.mxu0 0.0
    %v2650 = vand.u32 %v106, 4294901760
    %2651 = vmatpush1.msra.mxu0 %v2650
    %2652 = vmatprep.subr.mxu0 0.0
    %v2653 = vand.u32 %v107, 4294901760
    %2654 = vmatpush1.msra.mxu0 %v2653
    %2655 = vmatprep.subr.mxu0 0.0
    %v2656 = vand.u32 %v108, 4294901760
    %2657 = vmatpush1.msra.mxu0 %v2656
    %2658 = vmatprep.subr.mxu0 0.0
    %v2659 = vand.u32 %v109, 4294901760
    %2660 = vmatpush1.msra.mxu0 %v2659
    %2661 = vmatprep.subr.mxu0 0.0
    %v2662 = vand.u32 %v110, 4294901760
    %2663 = vmatpush1.msra.mxu0 %v2662
    %2664 = vmatprep.subr.mxu0 0.0
    %v2665 = vand.u32 %v111, 4294901760
    %2666 = vmatpush1.msra.mxu0 %v2665
    %2667 = vmatprep.subr.mxu0 0.0
    %v2668 = vand.u32 %v112, 4294901760
    %2669 = vmatpush1.msra.mxu0 %v2668
    %2670 = vmatprep.subr.mxu0 0.0
    %v2671 = vand.u32 %v113, 4294901760
    %2672 = vmatpush1.msra.mxu0 %v2671
    %2673 = vmatprep.subr.mxu0 0.0
    %v2674 = vand.u32 %v114, 4294901760
    %2675 = vmatpush1.msra.mxu0 %v2674
    %2676 = vmatprep.subr.mxu0 0.0
    %v2677 = vand.u32 %v115, 4294901760
    %2678 = vmatpush1.msra.mxu0 %v2677
    %2679 = vmatprep.subr.mxu0 0.0
    %v2680 = vand.u32 %v116, 4294901760
    %2681 = vmatpush1.msra.mxu0 %v2680
    %2682 = vmatprep.subr.mxu0 0.0
    %v2683 = vand.u32 %v117, 4294901760
    %2684 = vmatpush1.msra.mxu0 %v2683
    %2685 = vmatprep.subr.mxu0 0.0
    %v2686 = vand.u32 %v118, 4294901760
    %2687 = vmatpush1.msra.mxu0 %v2686
    %2688 = vmatprep.subr.mxu0 0.0
    %v2689 = vand.u32 %v119, 4294901760
    %2690 = vmatpush1.msra.mxu0 %v2689
    %2691 = vmatprep.subr.mxu0 0.0
    %v2692 = vand.u32 %v120, 4294901760
    %2693 = vmatpush1.msra.mxu0 %v2692
    %2694 = vmatprep.subr.mxu0 0.0
    %v2695 = vand.u32 %v121, 4294901760
    %2696 = vmatpush1.msra.mxu0 %v2695
    %2697 = vmatprep.subr.mxu0 0.0
    %v2698 = vand.u32 %v122, 4294901760
    %2699 = vmatpush1.msra.mxu0 %v2698
    %2700 = vmatprep.subr.mxu0 0.0
    %v2701 = vand.u32 %v123, 4294901760
    %2702 = vmatpush1.msra.mxu0 %v2701
    %2703 = vmatprep.subr.mxu0 0.0
    %v2704 = vand.u32 %v124, 4294901760
    %2705 = vmatpush1.msra.mxu0 %v2704
    %2706 = vmatprep.subr.mxu0 0.0
    %v2707 = vand.u32 %v125, 4294901760
    %2708 = vmatpush1.msra.mxu0 %v2707
    %2709 = vmatprep.subr.mxu0 0.0
    %v2710 = vand.u32 %v126, 4294901760
    %2711 = vmatpush1.msra.mxu0 %v2710
    %2712 = vmatprep.subr.mxu0 0.0
    %v2713 = vand.u32 %v127, 4294901760
    %2714 = vmatpush1.msra.mxu0 %v2713
    %2715 = vmatprep.subr.mxu0 0.0
    %v2716 = vand.u32 %v128, 4294901760
    %2717 = vmatpush1.msra.mxu0 %v2716
    %2718 = vmatprep.subr.mxu0 0.0
    %v2719 = vand.u32 %v129, 4294901760
    %2720 = vmatpush1.msra.mxu0 %v2719
    %v2721 = vand.u32 %v32, 4294901760
    %2722 = vmatprep.mubr.f32.mxu0 %v2721
    %v2723 = vand.u32 %v31, 4294901760
    %2724 = vmatmul.mubr.f32.gmra.mrb[0].mxu0 %v2723
    %v2725 = vpop.f32.mrb[0].mxu0
    %v2726 = vadd.f32 %v2622, %v2725
    %v2727 = vpop.f32.mrb[0].mxu0
    %2728 = vdwg.mxu0
    %2729 = vmatprep.subr.mxu0 0.0
    %v2730 = vand.u32 %v130, 4294901760
    %2731 = vmatpush1.msra.mxu0 %v2730
    %2732 = vmatprep.subr.mxu0 0.0
    %v2733 = vand.u32 %v131, 4294901760
    %2734 = vmatpush1.msra.mxu0 %v2733
    %2735 = vmatprep.subr.mxu0 0.0
    %2736 = vmatpush1.msra.mxu0 0.0
    %2737 = vmatprep.subr.mxu0 0.0
    %2738 = vmatpush1.msra.mxu0 0.0
    %2739 = vmatprep.subr.mxu0 0.0
    %2740 = vmatpush1.msra.mxu0 0.0
    %2741 = vmatprep.subr.mxu0 0.0
    %2742 = vmatpush1.msra.mxu0 0.0
    %2743 = vmatprep.subr.mxu0 0.0
    %2744 = vmatpush1.msra.mxu0 0.0
    %2745 = vmatprep.subr.mxu0 0.0
    %2746 = vmatpush1.msra.mxu0 0.0
    %2747 = vmatprep.subr.mxu0 0.0
    %2748 = vmatpush1.msra.mxu0 0.0
    %2749 = vmatprep.subr.mxu0 0.0
    %2750 = vmatpush1.msra.mxu0 0.0
    %2751 = vmatprep.subr.mxu0 0.0
    %2752 = vmatpush1.msra.mxu0 0.0
    %2753 = vmatprep.subr.mxu0 0.0
    %2754 = vmatpush1.msra.mxu0 0.0
    %2755 = vmatprep.subr.mxu0 0.0
    %2756 = vmatpush1.msra.mxu0 0.0
    %2757 = vmatprep.subr.mxu0 0.0
    %2758 = vmatpush1.msra.mxu0 0.0
    %2759 = vmatprep.subr.mxu0 0.0
    %2760 = vmatpush1.msra.mxu0 0.0
    %2761 = vmatprep.subr.mxu0 0.0
    %2762 = vmatpush1.msra.mxu0 0.0
    %2763 = vmatprep.subr.mxu0 0.0
    %2764 = vmatpush1.msra.mxu0 0.0
    %2765 = vmatprep.subr.mxu0 0.0
    %2766 = vmatpush1.msra.mxu0 0.0
    %2767 = vmatprep.subr.mxu0 0.0
    %2768 = vmatpush1.msra.mxu0 0.0
    %2769 = vmatprep.subr.mxu0 0.0
    %2770 = vmatpush1.msra.mxu0 0.0
    %2771 = vmatprep.subr.mxu0 0.0
    %2772 = vmatpush1.msra.mxu0 0.0
    %2773 = vmatprep.subr.mxu0 0.0
    %2774 = vmatpush1.msra.mxu0 0.0
    %2775 = vmatprep.subr.mxu0 0.0
    %2776 = vmatpush1.msra.mxu0 0.0
    %2777 = vmatprep.subr.mxu0 0.0
    %2778 = vmatpush1.msra.mxu0 0.0
    %2779 = vmatprep.subr.mxu0 0.0
    %2780 = vmatpush1.msra.mxu0 0.0
    %2781 = vmatprep.subr.mxu0 0.0
    %2782 = vmatpush1.msra.mxu0 0.0
    %2783 = vmatprep.subr.mxu0 0.0
    %2784 = vmatpush1.msra.mxu0 0.0
    %2785 = vmatprep.subr.mxu0 0.0
    %2786 = vmatpush1.msra.mxu0 0.0
    %2787 = vmatprep.subr.mxu0 0.0
    %2788 = vmatpush1.msra.mxu0 0.0
    %2789 = vmatprep.subr.mxu0 0.0
    %2790 = vmatpush1.msra.mxu0 0.0
    %2791 = vmatprep.subr.mxu0 0.0
    %2792 = vmatpush1.msra.mxu0 0.0
    %2793 = vmatprep.subr.mxu0 0.0
    %2794 = vmatpush1.msra.mxu0 0.0
    %2795 = vmatprep.mubr.f32.mxu0 0.0
    %v2796 = vand.u32 %v141, 4294901760
    %v2797 = vsub.f32 %v141, %v2796
    %v2798 = vand.u32 %v2797, 4294901760
    %v2799 = vsub.f32 %v2797, %v2798
    %v2800 = vand.u32 %v2799, 4294901760
    %2801 = vmatmul.mubr.f32.gmra.mrb[0].mxu0 %v2800
    %v2802 = vpop.f32.mrb[0].mxu0
    %v2803 = vadd.f32 %v2726, %v2802
    %v2804 = vpop.f32.mrb[0].mxu0
    %2805 = vdwg.mxu0
    %2806 = vmatprep.subr.mxu0 0.0
    %v2807 = vand.u32 %v130, 4294901760
    %v2808 = vsub.f32 %v130, %v2807
    %v2809 = vand.u32 %v2808, 4294901760
    %v2810 = vsub.f32 %v2808, %v2809
    %v2811 = vand.u32 %v2810, 4294901760
    %2812 = vmatpush1.msra.mxu0 %v2811
    %2813 = vmatprep.subr.mxu0 0.0
    %v2814 = vand.u32 %v131, 4294901760
    %v2815 = vsub.f32 %v131, %v2814
    %v2816 = vand.u32 %v2815, 4294901760
    %v2817 = vsub.f32 %v2815, %v2816
    %v2818 = vand.u32 %v2817, 4294901760
    %2819 = vmatpush1.msra.mxu0 %v2818
    %2820 = vmatprep.subr.mxu0 0.0
    %2821 = vmatpush1.msra.mxu0 0.0
    %2822 = vmatprep.subr.mxu0 0.0
    %2823 = vmatpush1.msra.mxu0 0.0
    %2824 = vmatprep.subr.mxu0 0.0
    %2825 = vmatpush1.msra.mxu0 0.0
    %2826 = vmatprep.subr.mxu0 0.0
    %2827 = vmatpush1.msra.mxu0 0.0
    %2828 = vmatprep.subr.mxu0 0.0
    %2829 = vmatpush1.msra.mxu0 0.0
    %2830 = vmatprep.subr.mxu0 0.0
    %2831 = vmatpush1.msra.mxu0 0.0
    %2832 = vmatprep.subr.mxu0 0.0
    %2833 = vmatpush1.msra.mxu0 0.0
    %2834 = vmatprep.subr.mxu0 0.0
    %2835 = vmatpush1.msra.mxu0 0.0
    %2836 = vmatprep.subr.mxu0 0.0
    %2837 = vmatpush1.msra.mxu0 0.0
    %2838 = vmatprep.subr.mxu0 0.0
    %2839 = vmatpush1.msra.mxu0 0.0
    %2840 = vmatprep.subr.mxu0 0.0
    %2841 = vmatpush1.msra.mxu0 0.0
    %2842 = vmatprep.subr.mxu0 0.0
    %2843 = vmatpush1.msra.mxu0 0.0
    %2844 = vmatprep.subr.mxu0 0.0
    %2845 = vmatpush1.msra.mxu0 0.0
    %2846 = vmatprep.subr.mxu0 0.0
    %2847 = vmatpush1.msra.mxu0 0.0
    %2848 = vmatprep.subr.mxu0 0.0
    %2849 = vmatpush1.msra.mxu0 0.0
    %2850 = vmatprep.subr.mxu0 0.0
    %2851 = vmatpush1.msra.mxu0 0.0
    %2852 = vmatprep.subr.mxu0 0.0
    %2853 = vmatpush1.msra.mxu0 0.0
    %2854 = vmatprep.subr.mxu0 0.0
    %2855 = vmatpush1.msra.mxu0 0.0
    %2856 = vmatprep.subr.mxu0 0.0
    %2857 = vmatpush1.msra.mxu0 0.0
    %2858 = vmatprep.subr.mxu0 0.0
    %2859 = vmatpush1.msra.mxu0 0.0
    %2860 = vmatprep.subr.mxu0 0.0
    %2861 = vmatpush1.msra.mxu0 0.0
    %2862 = vmatprep.subr.mxu0 0.0
    %2863 = vmatpush1.msra.mxu0 0.0
    %2864 = vmatprep.subr.mxu0 0.0
    %2865 = vmatpush1.msra.mxu0 0.0
    %2866 = vmatprep.subr.mxu0 0.0
    %2867 = vmatpush1.msra.mxu0 0.0
    %2868 = vmatprep.subr.mxu0 0.0
    %2869 = vmatpush1.msra.mxu0 0.0
    %2870 = vmatprep.subr.mxu0 0.0
    %2871 = vmatpush1.msra.mxu0 0.0
    %2872 = vmatprep.subr.mxu0 0.0
    %2873 = vmatpush1.msra.mxu0 0.0
    %2874 = vmatprep.subr.mxu0 0.0
    %2875 = vmatpush1.msra.mxu0 0.0
    %2876 = vmatprep.subr.mxu0 0.0
    %2877 = vmatpush1.msra.mxu0 0.0
    %2878 = vmatprep.subr.mxu0 0.0
    %2879 = vmatpush1.msra.mxu0 0.0
    %2880 = vmatprep.mubr.f32.mxu0 0.0
    %v2881 = vand.u32 %v141, 4294901760
    %2882 = vmatmul.mubr.f32.gmra.mrb[0].mxu0 %v2881
    %v2883 = vpop.f32.mrb[0].mxu0
    %v2884 = vadd.f32 %v2803, %v2883
    %v2885 = vpop.f32.mrb[0].mxu0
    %2886 = vdwg.mxu0
    %2887 = vmatprep.subr.mxu0 0.0
    %v2888 = vand.u32 %v130, 4294901760
    %v2889 = vsub.f32 %v130, %v2888
    %2890 = vmatpush1.msra.mxu0 %v2889
    %2891 = vmatprep.subr.mxu0 0.0
    %v2892 = vand.u32 %v131, 4294901760
    %v2893 = vsub.f32 %v131, %v2892
    %2894 = vmatpush1.msra.mxu0 %v2893
    %2895 = vmatprep.subr.mxu0 0.0
    %2896 = vmatpush1.msra.mxu0 0.0
    %2897 = vmatprep.subr.mxu0 0.0
    %2898 = vmatpush1.msra.mxu0 0.0
    %2899 = vmatprep.subr.mxu0 0.0
    %2900 = vmatpush1.msra.mxu0 0.0
    %2901 = vmatprep.subr.mxu0 0.0
    %2902 = vmatpush1.msra.mxu0 0.0
    %2903 = vmatprep.subr.mxu0 0.0
    %2904 = vmatpush1.msra.mxu0 0.0
    %2905 = vmatprep.subr.mxu0 0.0
    %2906 = vmatpush1.msra.mxu0 0.0
    %2907 = vmatprep.subr.mxu0 0.0
    %2908 = vmatpush1.msra.mxu0 0.0
    %2909 = vmatprep.subr.mxu0 0.0
    %2910 = vmatpush1.msra.mxu0 0.0
    %2911 = vmatprep.subr.mxu0 0.0
    %2912 = vmatpush1.msra.mxu0 0.0
    %2913 = vmatprep.subr.mxu0 0.0
    %2914 = vmatpush1.msra.mxu0 0.0
    %2915 = vmatprep.subr.mxu0 0.0
    %2916 = vmatpush1.msra.mxu0 0.0
    %2917 = vmatprep.subr.mxu0 0.0
    %2918 = vmatpush1.msra.mxu0 0.0
    %2919 = vmatprep.subr.mxu0 0.0
    %2920 = vmatpush1.msra.mxu0 0.0
    %2921 = vmatprep.subr.mxu0 0.0
    %2922 = vmatpush1.msra.mxu0 0.0
    %2923 = vmatprep.subr.mxu0 0.0
    %2924 = vmatpush1.msra.mxu0 0.0
    %2925 = vmatprep.subr.mxu0 0.0
    %2926 = vmatpush1.msra.mxu0 0.0
    %2927 = vmatprep.subr.mxu0 0.0
    %2928 = vmatpush1.msra.mxu0 0.0
    %2929 = vmatprep.subr.mxu0 0.0
    %2930 = vmatpush1.msra.mxu0 0.0
    %2931 = vmatprep.subr.mxu0 0.0
    %2932 = vmatpush1.msra.mxu0 0.0
    %2933 = vmatprep.subr.mxu0 0.0
    %2934 = vmatpush1.msra.mxu0 0.0
    %2935 = vmatprep.subr.mxu0 0.0
    %2936 = vmatpush1.msra.mxu0 0.0
    %2937 = vmatprep.subr.mxu0 0.0
    %2938 = vmatpush1.msra.mxu0 0.0
    %2939 = vmatprep.subr.mxu0 0.0
    %2940 = vmatpush1.msra.mxu0 0.0
    %2941 = vmatprep.subr.mxu0 0.0
    %2942 = vmatpush1.msra.mxu0 0.0
    %2943 = vmatprep.subr.mxu0 0.0
    %2944 = vmatpush1.msra.mxu0 0.0
    %2945 = vmatprep.subr.mxu0 0.0
    %2946 = vmatpush1.msra.mxu0 0.0
    %2947 = vmatprep.subr.mxu0 0.0
    %2948 = vmatpush1.msra.mxu0 0.0
    %2949 = vmatprep.subr.mxu0 0.0
    %2950 = vmatpush1.msra.mxu0 0.0
    %2951 = vmatprep.subr.mxu0 0.0
    %2952 = vmatpush1.msra.mxu0 0.0
    %2953 = vmatprep.subr.mxu0 0.0
    %2954 = vmatpush1.msra.mxu0 0.0
    %2955 = vmatprep.mubr.f32.mxu0 0.0
    %v2956 = vand.u32 %v141, 4294901760
    %v2957 = vsub.f32 %v141, %v2956
    %2958 = vmatmul.mubr.f32.gmra.mrb[0].mxu0 %v2957
    %v2959 = vpop.f32.mrb[0].mxu0
    %v2960 = vadd.f32 %v2884, %v2959
    %v2961 = vpop.f32.mrb[0].mxu0
    %2962 = vdwg.mxu0
    %2963 = vmatprep.subr.mxu0 0.0
    %v2964 = vand.u32 %v130, 4294901760
    %2965 = vmatpush1.msra.mxu0 %v2964
    %2966 = vmatprep.subr.mxu0 0.0
    %v2967 = vand.u32 %v131, 4294901760
    %2968 = vmatpush1.msra.mxu0 %v2967
    %2969 = vmatprep.subr.mxu0 0.0
    %2970 = vmatpush1.msra.mxu0 0.0
    %2971 = vmatprep.subr.mxu0 0.0
    %2972 = vmatpush1.msra.mxu0 0.0
    %2973 = vmatprep.subr.mxu0 0.0
    %2974 = vmatpush1.msra.mxu0 0.0
    %2975 = vmatprep.subr.mxu0 0.0
    %2976 = vmatpush1.msra.mxu0 0.0
    %2977 = vmatprep.subr.mxu0 0.0
    %2978 = vmatpush1.msra.mxu0 0.0
    %2979 = vmatprep.subr.mxu0 0.0
    %2980 = vmatpush1.msra.mxu0 0.0
    %2981 = vmatprep.subr.mxu0 0.0
    %2982 = vmatpush1.msra.mxu0 0.0
    %2983 = vmatprep.subr.mxu0 0.0
    %2984 = vmatpush1.msra.mxu0 0.0
    %2985 = vmatprep.subr.mxu0 0.0
    %2986 = vmatpush1.msra.mxu0 0.0
    %2987 = vmatprep.subr.mxu0 0.0
    %2988 = vmatpush1.msra.mxu0 0.0
    %2989 = vmatprep.subr.mxu0 0.0
    %2990 = vmatpush1.msra.mxu0 0.0
    %2991 = vmatprep.subr.mxu0 0.0
    %2992 = vmatpush1.msra.mxu0 0.0
    %2993 = vmatprep.subr.mxu0 0.0
    %2994 = vmatpush1.msra.mxu0 0.0
    %2995 = vmatprep.subr.mxu0 0.0
    %2996 = vmatpush1.msra.mxu0 0.0
    %2997 = vmatprep.subr.mxu0 0.0
    %2998 = vmatpush1.msra.mxu0 0.0
    %2999 = vmatprep.subr.mxu0 0.0
    %3000 = vmatpush1.msra.mxu0 0.0
    %3001 = vmatprep.subr.mxu0 0.0
    %3002 = vmatpush1.msra.mxu0 0.0
    %3003 = vmatprep.subr.mxu0 0.0
    %3004 = vmatpush1.msra.mxu0 0.0
    %3005 = vmatprep.subr.mxu0 0.0
    %3006 = vmatpush1.msra.mxu0 0.0
    %3007 = vmatprep.subr.mxu0 0.0
    %3008 = vmatpush1.msra.mxu0 0.0
    %3009 = vmatprep.subr.mxu0 0.0
    %3010 = vmatpush1.msra.mxu0 0.0
    %3011 = vmatprep.subr.mxu0 0.0
    %3012 = vmatpush1.msra.mxu0 0.0
    %3013 = vmatprep.subr.mxu0 0.0
    %3014 = vmatpush1.msra.mxu0 0.0
    %3015 = vmatprep.subr.mxu0 0.0
    %3016 = vmatpush1.msra.mxu0 0.0
    %3017 = vmatprep.subr.mxu0 0.0
    %3018 = vmatpush1.msra.mxu0 0.0
    %3019 = vmatprep.subr.mxu0 0.0
    %3020 = vmatpush1.msra.mxu0 0.0
    %3021 = vmatprep.subr.mxu0 0.0
    %3022 = vmatpush1.msra.mxu0 0.0
    %3023 = vmatprep.subr.mxu0 0.0
    %3024 = vmatpush1.msra.mxu0 0.0
    %3025 = vmatprep.subr.mxu0 0.0
    %3026 = vmatpush1.msra.mxu0 0.0
    %3027 = vmatprep.subr.mxu0 0.0
    %3028 = vmatpush1.msra.mxu0 0.0
    %3029 = vmatprep.mubr.f32.mxu0 0.0
    %v3030 = vand.u32 %v141, 4294901760
    %v3031 = vsub.f32 %v141, %v3030
    %v3032 = vand.u32 %v3031, 4294901760
    %3033 = vmatmul.mubr.f32.gmra.mrb[0].mxu0 %v3032
    %v3034 = vpop.f32.mrb[0].mxu0
    %v3035 = vadd.f32 %v2960, %v3034
    %v3036 = vpop.f32.mrb[0].mxu0
    %3037 = vdwg.mxu0
    %3038 = vmatprep.subr.mxu0 0.0
    %v3039 = vand.u32 %v130, 4294901760
    %v3040 = vsub.f32 %v130, %v3039
    %v3041 = vand.u32 %v3040, 4294901760
    %3042 = vmatpush1.msra.mxu0 %v3041
    %3043 = vmatprep.subr.mxu0 0.0
    %v3044 = vand.u32 %v131, 4294901760
    %v3045 = vsub.f32 %v131, %v3044
    %v3046 = vand.u32 %v3045, 4294901760
    %3047 = vmatpush1.msra.mxu0 %v3046
    %3048 = vmatprep.subr.mxu0 0.0
    %3049 = vmatpush1.msra.mxu0 0.0
    %3050 = vmatprep.subr.mxu0 0.0
    %3051 = vmatpush1.msra.mxu0 0.0
    %3052 = vmatprep.subr.mxu0 0.0
    %3053 = vmatpush1.msra.mxu0 0.0
    %3054 = vmatprep.subr.mxu0 0.0
    %3055 = vmatpush1.msra.mxu0 0.0
    %3056 = vmatprep.subr.mxu0 0.0
    %3057 = vmatpush1.msra.mxu0 0.0
    %3058 = vmatprep.subr.mxu0 0.0
    %3059 = vmatpush1.msra.mxu0 0.0
    %3060 = vmatprep.subr.mxu0 0.0
    %3061 = vmatpush1.msra.mxu0 0.0
    %3062 = vmatprep.subr.mxu0 0.0
    %3063 = vmatpush1.msra.mxu0 0.0
    %3064 = vmatprep.subr.mxu0 0.0
    %3065 = vmatpush1.msra.mxu0 0.0
    %3066 = vmatprep.subr.mxu0 0.0
    %3067 = vmatpush1.msra.mxu0 0.0
    %3068 = vmatprep.subr.mxu0 0.0
    %3069 = vmatpush1.msra.mxu0 0.0
    %3070 = vmatprep.subr.mxu0 0.0
    %3071 = vmatpush1.msra.mxu0 0.0
    %3072 = vmatprep.subr.mxu0 0.0
    %3073 = vmatpush1.msra.mxu0 0.0
    %3074 = vmatprep.subr.mxu0 0.0
    %3075 = vmatpush1.msra.mxu0 0.0
    %3076 = vmatprep.subr.mxu0 0.0
    %3077 = vmatpush1.msra.mxu0 0.0
    %3078 = vmatprep.subr.mxu0 0.0
    %3079 = vmatpush1.msra.mxu0 0.0
    %3080 = vmatprep.subr.mxu0 0.0
    %3081 = vmatpush1.msra.mxu0 0.0
    %3082 = vmatprep.subr.mxu0 0.0
    %3083 = vmatpush1.msra.mxu0 0.0
    %3084 = vmatprep.subr.mxu0 0.0
    %3085 = vmatpush1.msra.mxu0 0.0
    %3086 = vmatprep.subr.mxu0 0.0
    %3087 = vmatpush1.msra.mxu0 0.0
    %3088 = vmatprep.subr.mxu0 0.0
    %3089 = vmatpush1.msra.mxu0 0.0
    %3090 = vmatprep.subr.mxu0 0.0
    %3091 = vmatpush1.msra.mxu0 0.0
    %3092 = vmatprep.subr.mxu0 0.0
    %3093 = vmatpush1.msra.mxu0 0.0
    %3094 = vmatprep.subr.mxu0 0.0
    %3095 = vmatpush1.msra.mxu0 0.0
    %3096 = vmatprep.subr.mxu0 0.0
    %3097 = vmatpush1.msra.mxu0 0.0
    %3098 = vmatprep.subr.mxu0 0.0
    %3099 = vmatpush1.msra.mxu0 0.0
    %3100 = vmatprep.subr.mxu0 0.0
    %3101 = vmatpush1.msra.mxu0 0.0
    %3102 = vmatprep.subr.mxu0 0.0
    %3103 = vmatpush1.msra.mxu0 0.0
    %3104 = vmatprep.subr.mxu0 0.0
    %3105 = vmatpush1.msra.mxu0 0.0
    %3106 = vmatprep.subr.mxu0 0.0
    %3107 = vmatpush1.msra.mxu0 0.0
    %3108 = vmatprep.mubr.f32.mxu0 0.0
    %v3109 = vand.u32 %v141, 4294901760
    %3110 = vmatmul.mubr.f32.gmra.mrb[0].mxu0 %v3109
    %v3111 = vpop.f32.mrb[0].mxu0
    %v3112 = vadd.f32 %v3035, %v3111
    %v3113 = vpop.f32.mrb[0].mxu0
    %3114 = vdwg.mxu0
    %3115 = vmatprep.subr.mxu0 0.0
    %v3116 = vand.u32 %v130, 4294901760
    %3117 = vmatpush1.msra.mxu0 %v3116
    %3118 = vmatprep.subr.mxu0 0.0
    %v3119 = vand.u32 %v131, 4294901760
    %3120 = vmatpush1.msra.mxu0 %v3119
    %3121 = vmatprep.subr.mxu0 0.0
    %3122 = vmatpush1.msra.mxu0 0.0
    %3123 = vmatprep.subr.mxu0 0.0
    %3124 = vmatpush1.msra.mxu0 0.0
    %3125 = vmatprep.subr.mxu0 0.0
    %3126 = vmatpush1.msra.mxu0 0.0
    %3127 = vmatprep.subr.mxu0 0.0
    %3128 = vmatpush1.msra.mxu0 0.0
    %3129 = vmatprep.subr.mxu0 0.0
    %3130 = vmatpush1.msra.mxu0 0.0
    %3131 = vmatprep.subr.mxu0 0.0
    %3132 = vmatpush1.msra.mxu0 0.0
    %3133 = vmatprep.subr.mxu0 0.0
    %3134 = vmatpush1.msra.mxu0 0.0
    %3135 = vmatprep.subr.mxu0 0.0
    %3136 = vmatpush1.msra.mxu0 0.0
    %3137 = vmatprep.subr.mxu0 0.0
    %3138 = vmatpush1.msra.mxu0 0.0
    %3139 = vmatprep.subr.mxu0 0.0
    %3140 = vmatpush1.msra.mxu0 0.0
    %3141 = vmatprep.subr.mxu0 0.0
    %3142 = vmatpush1.msra.mxu0 0.0
    %3143 = vmatprep.subr.mxu0 0.0
    %3144 = vmatpush1.msra.mxu0 0.0
    %3145 = vmatprep.subr.mxu0 0.0
    %3146 = vmatpush1.msra.mxu0 0.0
    %3147 = vmatprep.subr.mxu0 0.0
    %3148 = vmatpush1.msra.mxu0 0.0
    %3149 = vmatprep.subr.mxu0 0.0
    %3150 = vmatpush1.msra.mxu0 0.0
    %3151 = vmatprep.subr.mxu0 0.0
    %3152 = vmatpush1.msra.mxu0 0.0
    %3153 = vmatprep.subr.mxu0 0.0
    %3154 = vmatpush1.msra.mxu0 0.0
    %3155 = vmatprep.subr.mxu0 0.0
    %3156 = vmatpush1.msra.mxu0 0.0
    %3157 = vmatprep.subr.mxu0 0.0
    %3158 = vmatpush1.msra.mxu0 0.0
    %3159 = vmatprep.subr.mxu0 0.0
    %3160 = vmatpush1.msra.mxu0 0.0
    %3161 = vmatprep.subr.mxu0 0.0
    %3162 = vmatpush1.msra.mxu0 0.0
    %3163 = vmatprep.subr.mxu0 0.0
    %3164 = vmatpush1.msra.mxu0 0.0
    %3165 = vmatprep.subr.mxu0 0.0
    %3166 = vmatpush1.msra.mxu0 0.0
    %3167 = vmatprep.subr.mxu0 0.0
    %3168 = vmatpush1.msra.mxu0 0.0
    %3169 = vmatprep.subr.mxu0 0.0
    %3170 = vmatpush1.msra.mxu0 0.0
    %3171 = vmatprep.subr.mxu0 0.0
    %3172 = vmatpush1.msra.mxu0 0.0
    %3173 = vmatprep.subr.mxu0 0.0
    %3174 = vmatpush1.msra.mxu0 0.0
    %3175 = vmatprep.subr.mxu0 0.0
    %3176 = vmatpush1.msra.mxu0 0.0
    %3177 = vmatprep.subr.mxu0 0.0
    %3178 = vmatpush1.msra.mxu0 0.0
    %3179 = vmatprep.subr.mxu0 0.0
    %3180 = vmatpush1.msra.mxu0 0.0
    %3181 = vmatprep.mubr.f32.mxu0 0.0
    %v3182 = vand.u32 %v141, 4294901760
    %3183 = vmatmul.mubr.f32.gmra.mrb[0].mxu0 %v3182
    %v3184 = vpop.f32.mrb[0].mxu0
    %v3185 = vadd.f32 %v3112, %v3184
    %v3186 = vpop.f32.mrb[0].mxu0
    %3187 = vdwg.mxu0
    %v3188 = vmax.f32 %v3185, 0.0
    %v3189 = vld [vmem:[%s3] sm:$0xff]
    %v3190 = vld [vmem:[%s3 + $0x8] sm:$0xff]
    %v3191 = vld [vmem:[%s3 + $0x10] sm:$0xff]
    %v3192 = vld [vmem:[%s3 + $0x18] sm:$0xff]
    %v3193 = vld [vmem:[%s3 + $0x20] sm:$0xff]
    %v3194 = vld [vmem:[%s3 + $0x28] sm:$0xff]
    %v3195 = vld [vmem:[%s3 + $0x30] sm:$0xff]
    %v3196 = vld [vmem:[%s3 + $0x38] sm:$0xff]
    %v3197 = vld [vmem:[%s4] sm:$0x1]
    %v3199 = vlaneseq
    %v3200 = vshrl.u32 %v3199, 7
    %v3201 = vsub.s32 0, %v3200
    %v3202 = vrot.slane %v3197, %v3201
    %vm3204 = vcmask 523264
    %v3206 = vsel %vm3204, %v3188, 0
    %3208 = vmatprep.subr.mxu0 0.0
    %v3209 = vand.u32 %v3189, 4294901760
    %3210 = vmatpush1.msra.mxu0 %v3209
    %3211 = vmatprep.subr.mxu0 0.0
    %v3212 = vand.u32 %v3190, 4294901760
    %3213 = vmatpush1.msra.mxu0 %v3212
    %3214 = vmatprep.subr.mxu0 0.0
    %v3215 = vand.u32 %v3191, 4294901760
    %3216 = vmatpush1.msra.mxu0 %v3215
    %3217 = vmatprep.subr.mxu0 0.0
    %v3218 = vand.u32 %v3192, 4294901760
    %3219 = vmatpush1.msra.mxu0 %v3218
    %3220 = vmatprep.subr.mxu0 0.0
    %v3221 = vand.u32 %v3193, 4294901760
    %3222 = vmatpush1.msra.mxu0 %v3221
    %3223 = vmatprep.subr.mxu0 0.0
    %v3224 = vand.u32 %v3194, 4294901760
    %3225 = vmatpush1.msra.mxu0 %v3224
    %3226 = vmatprep.subr.mxu0 0.0
    %v3227 = vand.u32 %v3195, 4294901760
    %3228 = vmatpush1.msra.mxu0 %v3227
    %3229 = vmatprep.subr.mxu0 0.0
    %v3230 = vand.u32 %v3196, 4294901760
    %3231 = vmatpush1.msra.mxu0 %v3230
    %3232 = vmatprep.subr.mxu0 0.0
    %3233 = vmatpush1.msra.mxu0 0.0
    %3234 = vmatprep.subr.mxu0 0.0
    %3235 = vmatpush1.msra.mxu0 0.0
    %3236 = vmatprep.subr.mxu0 0.0
    %3237 = vmatpush1.msra.mxu0 0.0
    %3238 = vmatprep.subr.mxu0 0.0
    %3239 = vmatpush1.msra.mxu0 0.0
    %3240 = vmatprep.subr.mxu0 0.0
    %3241 = vmatpush1.msra.mxu0 0.0
    %3242 = vmatprep.subr.mxu0 0.0
    %3243 = vmatpush1.msra.mxu0 0.0
    %3244 = vmatprep.subr.mxu0 0.0
    %3245 = vmatpush1.msra.mxu0 0.0
    %3246 = vmatprep.subr.mxu0 0.0
    %3247 = vmatpush1.msra.mxu0 0.0
    %3248 = vmatprep.subr.mxu0 0.0
    %3249 = vmatpush1.msra.mxu0 0.0
    %3250 = vmatprep.subr.mxu0 0.0
    %3251 = vmatpush1.msra.mxu0 0.0
    %3252 = vmatprep.subr.mxu0 0.0
    %3253 = vmatpush1.msra.mxu0 0.0
    %3254 = vmatprep.subr.mxu0 0.0
    %3255 = vmatpush1.msra.mxu0 0.0
    %3256 = vmatprep.subr.mxu0 0.0
    %3257 = vmatpush1.msra.mxu0 0.0
    %3258 = vmatprep.subr.mxu0 0.0
    %3259 = vmatpush1.msra.mxu0 0.0
    %3260 = vmatprep.subr.mxu0 0.0
    %3261 = vmatpush1.msra.mxu0 0.0
    %3262 = vmatprep.subr.mxu0 0.0
    %3263 = vmatpush1.msra.mxu0 0.0
    %3264 = vmatprep.subr.mxu0 0.0
    %3265 = vmatpush1.msra.mxu0 0.0
    %3266 = vmatprep.subr.mxu0 0.0
    %3267 = vmatpush1.msra.mxu0 0.0
    %3268 = vmatprep.subr.mxu0 0.0
    %3269 = vmatpush1.msra.mxu0 0.0
    %3270 = vmatprep.subr.mxu0 0.0
    %3271 = vmatpush1.msra.mxu0 0.0
    %3272 = vmatprep.subr.mxu0 0.0
    %3273 = vmatpush1.msra.mxu0 0.0
    %3274 = vmatprep.subr.mxu0 0.0
    %3275 = vmatpush1.msra.mxu0 0.0
    %3276 = vmatprep.subr.mxu0 0.0
    %3277 = vmatpush1.msra.mxu0 0.0
    %3278 = vmatprep.subr.mxu0 0.0
    %3279 = vmatpush1.msra.mxu0 0.0
    %3280 = vmatprep.mubr.f32.mxu0 0.0
    %v3281 = vand.u32 %v3206, 4294901760
    %v3282 = vsub.f32 %v3206, %v3281
    %v3283 = vand.u32 %v3282, 4294901760
    %v3284 = vsub.f32 %v3282, %v3283
    %v3285 = vand.u32 %v3284, 4294901760
    %3286 = vmatmul.mubr.f32.gmra.mrb[0].mxu0 %v3285
    %v3287 = vpop.f32.mrb[0].mxu0
    %v3288 = vadd.f32 %v3202, %v3287
    %v3289 = vpop.f32.mrb[0].mxu0
    %3290 = vdwg.mxu0
    %3291 = vmatprep.subr.mxu0 0.0
    %v3292 = vand.u32 %v3189, 4294901760
    %v3293 = vsub.f32 %v3189, %v3292
    %v3294 = vand.u32 %v3293, 4294901760
    %v3295 = vsub.f32 %v3293, %v3294
    %v3296 = vand.u32 %v3295, 4294901760
    %3297 = vmatpush1.msra.mxu0 %v3296
    %3298 = vmatprep.subr.mxu0 0.0
    %v3299 = vand.u32 %v3190, 4294901760
    %v3300 = vsub.f32 %v3190, %v3299
    %v3301 = vand.u32 %v3300, 4294901760
    %v3302 = vsub.f32 %v3300, %v3301
    %v3303 = vand.u32 %v3302, 4294901760
    %3304 = vmatpush1.msra.mxu0 %v3303
    %3305 = vmatprep.subr.mxu0 0.0
    %v3306 = vand.u32 %v3191, 4294901760
    %v3307 = vsub.f32 %v3191, %v3306
    %v3308 = vand.u32 %v3307, 4294901760
    %v3309 = vsub.f32 %v3307, %v3308
    %v3310 = vand.u32 %v3309, 4294901760
    %3311 = vmatpush1.msra.mxu0 %v3310
    %3312 = vmatprep.subr.mxu0 0.0
    %v3313 = vand.u32 %v3192, 4294901760
    %v3314 = vsub.f32 %v3192, %v3313
    %v3315 = vand.u32 %v3314, 4294901760
    %v3316 = vsub.f32 %v3314, %v3315
    %v3317 = vand.u32 %v3316, 4294901760
    %3318 = vmatpush1.msra.mxu0 %v3317
    %3319 = vmatprep.subr.mxu0 0.0
    %v3320 = vand.u32 %v3193, 4294901760
    %v3321 = vsub.f32 %v3193, %v3320
    %v3322 = vand.u32 %v3321, 4294901760
    %v3323 = vsub.f32 %v3321, %v3322
    %v3324 = vand.u32 %v3323, 4294901760
    %3325 = vmatpush1.msra.mxu0 %v3324
    %3326 = vmatprep.subr.mxu0 0.0
    %v3327 = vand.u32 %v3194, 4294901760
    %v3328 = vsub.f32 %v3194, %v3327
    %v3329 = vand.u32 %v3328, 4294901760
    %v3330 = vsub.f32 %v3328, %v3329
    %v3331 = vand.u32 %v3330, 4294901760
    %3332 = vmatpush1.msra.mxu0 %v3331
    %3333 = vmatprep.subr.mxu0 0.0
    %v3334 = vand.u32 %v3195, 4294901760
    %v3335 = vsub.f32 %v3195, %v3334
    %v3336 = vand.u32 %v3335, 4294901760
    %v3337 = vsub.f32 %v3335, %v3336
    %v3338 = vand.u32 %v3337, 4294901760
    %3339 = vmatpush1.msra.mxu0 %v3338
    %3340 = vmatprep.subr.mxu0 0.0
    %v3341 = vand.u32 %v3196, 4294901760
    %v3342 = vsub.f32 %v3196, %v3341
    %v3343 = vand.u32 %v3342, 4294901760
    %v3344 = vsub.f32 %v3342, %v3343
    %v3345 = vand.u32 %v3344, 4294901760
    %3346 = vmatpush1.msra.mxu0 %v3345
    %3347 = vmatprep.subr.mxu0 0.0
    %3348 = vmatpush1.msra.mxu0 0.0
    %3349 = vmatprep.subr.mxu0 0.0
    %3350 = vmatpush1.msra.mxu0 0.0
    %3351 = vmatprep.subr.mxu0 0.0
    %3352 = vmatpush1.msra.mxu0 0.0
    %3353 = vmatprep.subr.mxu0 0.0
    %3354 = vmatpush1.msra.mxu0 0.0
    %3355 = vmatprep.subr.mxu0 0.0
    %3356 = vmatpush1.msra.mxu0 0.0
    %3357 = vmatprep.subr.mxu0 0.0
    %3358 = vmatpush1.msra.mxu0 0.0
    %3359 = vmatprep.subr.mxu0 0.0
    %3360 = vmatpush1.msra.mxu0 0.0
    %3361 = vmatprep.subr.mxu0 0.0
    %3362 = vmatpush1.msra.mxu0 0.0
    %3363 = vmatprep.subr.mxu0 0.0
    %3364 = vmatpush1.msra.mxu0 0.0
    %3365 = vmatprep.subr.mxu0 0.0
    %3366 = vmatpush1.msra.mxu0 0.0
    %3367 = vmatprep.subr.mxu0 0.0
    %3368 = vmatpush1.msra.mxu0 0.0
    %3369 = vmatprep.subr.mxu0 0.0
    %3370 = vmatpush1.msra.mxu0 0.0
    %3371 = vmatprep.subr.mxu0 0.0
    %3372 = vmatpush1.msra.mxu0 0.0
    %3373 = vmatprep.subr.mxu0 0.0
    %3374 = vmatpush1.msra.mxu0 0.0
    %3375 = vmatprep.subr.mxu0 0.0
    %3376 = vmatpush1.msra.mxu0 0.0
    %3377 = vmatprep.subr.mxu0 0.0
    %3378 = vmatpush1.msra.mxu0 0.0
    %3379 = vmatprep.subr.mxu0 0.0
    %3380 = vmatpush1.msra.mxu0 0.0
    %3381 = vmatprep.subr.mxu0 0.0
    %3382 = vmatpush1.msra.mxu0 0.0
    %3383 = vmatprep.subr.mxu0 0.0
    %3384 = vmatpush1.msra.mxu0 0.0
    %3385 = vmatprep.subr.mxu0 0.0
    %3386 = vmatpush1.msra.mxu0 0.0
    %3387 = vmatprep.subr.mxu0 0.0
    %3388 = vmatpush1.msra.mxu0 0.0
    %3389 = vmatprep.subr.mxu0 0.0
    %3390 = vmatpush1.msra.mxu0 0.0
    %3391 = vmatprep.subr.mxu0 0.0
    %3392 = vmatpush1.msra.mxu0 0.0
    %3393 = vmatprep.subr.mxu0 0.0
    %3394 = vmatpush1.msra.mxu0 0.0
    %3395 = vmatprep.mubr.f32.mxu0 0.0
    %v3396 = vand.u32 %v3206, 4294901760
    %3397 = vmatmul.mubr.f32.gmra.mrb[0].mxu0 %v3396
    %v3398 = vpop.f32.mrb[0].mxu0
    %v3399 = vadd.f32 %v3288, %v3398
    %v3400 = vpop.f32.mrb[0].mxu0
    %3401 = vdwg.mxu0
    %3402 = vmatprep.subr.mxu0 0.0
    %v3403 = vand.u32 %v3189, 4294901760
    %v3404 = vsub.f32 %v3189, %v3403
    %3405 = vmatpush1.msra.mxu0 %v3404
    %3406 = vmatprep.subr.mxu0 0.0
    %v3407 = vand.u32 %v3190, 4294901760
    %v3408 = vsub.f32 %v3190, %v3407
    %3409 = vmatpush1.msra.mxu0 %v3408
    %3410 = vmatprep.subr.mxu0 0.0
    %v3411 = vand.u32 %v3191, 4294901760
    %v3412 = vsub.f32 %v3191, %v3411
    %3413 = vmatpush1.msra.mxu0 %v3412
    %3414 = vmatprep.subr.mxu0 0.0
    %v3415 = vand.u32 %v3192, 4294901760
    %v3416 = vsub.f32 %v3192, %v3415
    %3417 = vmatpush1.msra.mxu0 %v3416
    %3418 = vmatprep.subr.mxu0 0.0
    %v3419 = vand.u32 %v3193, 4294901760
    %v3420 = vsub.f32 %v3193, %v3419
    %3421 = vmatpush1.msra.mxu0 %v3420
    %3422 = vmatprep.subr.mxu0 0.0
    %v3423 = vand.u32 %v3194, 4294901760
    %v3424 = vsub.f32 %v3194, %v3423
    %3425 = vmatpush1.msra.mxu0 %v3424
    %3426 = vmatprep.subr.mxu0 0.0
    %v3427 = vand.u32 %v3195, 4294901760
    %v3428 = vsub.f32 %v3195, %v3427
    %3429 = vmatpush1.msra.mxu0 %v3428
    %3430 = vmatprep.subr.mxu0 0.0
    %v3431 = vand.u32 %v3196, 4294901760
    %v3432 = vsub.f32 %v3196, %v3431
    %3433 = vmatpush1.msra.mxu0 %v3432
    %3434 = vmatprep.subr.mxu0 0.0
    %3435 = vmatpush1.msra.mxu0 0.0
    %3436 = vmatprep.subr.mxu0 0.0
    %3437 = vmatpush1.msra.mxu0 0.0
    %3438 = vmatprep.subr.mxu0 0.0
    %3439 = vmatpush1.msra.mxu0 0.0
    %3440 = vmatprep.subr.mxu0 0.0
    %3441 = vmatpush1.msra.mxu0 0.0
    %3442 = vmatprep.subr.mxu0 0.0
    %3443 = vmatpush1.msra.mxu0 0.0
    %3444 = vmatprep.subr.mxu0 0.0
    %3445 = vmatpush1.msra.mxu0 0.0
    %3446 = vmatprep.subr.mxu0 0.0
    %3447 = vmatpush1.msra.mxu0 0.0
    %3448 = vmatprep.subr.mxu0 0.0
    %3449 = vmatpush1.msra.mxu0 0.0
    %3450 = vmatprep.subr.mxu0 0.0
    %3451 = vmatpush1.msra.mxu0 0.0
    %3452 = vmatprep.subr.mxu0 0.0
    %3453 = vmatpush1.msra.mxu0 0.0
    %3454 = vmatprep.subr.mxu0 0.0
    %3455 = vmatpush1.msra.mxu0 0.0
    %3456 = vmatprep.subr.mxu0 0.0
    %3457 = vmatpush1.msra.mxu0 0.0
    %3458 = vmatprep.subr.mxu0 0.0
    %3459 = vmatpush1.msra.mxu0 0.0
    %3460 = vmatprep.subr.mxu0 0.0
    %3461 = vmatpush1.msra.mxu0 0.0
    %3462 = vmatprep.subr.mxu0 0.0
    %3463 = vmatpush1.msra.mxu0 0.0
    %3464 = vmatprep.subr.mxu0 0.0
    %3465 = vmatpush1.msra.mxu0 0.0
    %3466 = vmatprep.subr.mxu0 0.0
    %3467 = vmatpush1.msra.mxu0 0.0
    %3468 = vmatprep.subr.mxu0 0.0
    %3469 = vmatpush1.msra.mxu0 0.0
    %3470 = vmatprep.subr.mxu0 0.0
    %3471 = vmatpush1.msra.mxu0 0.0
    %3472 = vmatprep.subr.mxu0 0.0
    %3473 = vmatpush1.msra.mxu0 0.0
    %3474 = vmatprep.subr.mxu0 0.0
    %3475 = vmatpush1.msra.mxu0 0.0
    %3476 = vmatprep.subr.mxu0 0.0
    %3477 = vmatpush1.msra.mxu0 0.0
    %3478 = vmatprep.subr.mxu0 0.0
    %3479 = vmatpush1.msra.mxu0 0.0
    %3480 = vmatprep.subr.mxu0 0.0
    %3481 = vmatpush1.msra.mxu0 0.0
    %3482 = vmatprep.mubr.f32.mxu0 0.0
    %v3483 = vand.u32 %v3206, 4294901760
    %v3484 = vsub.f32 %v3206, %v3483
    %3485 = vmatmul.mubr.f32.gmra.mrb[0].mxu0 %v3484
    %v3486 = vpop.f32.mrb[0].mxu0
    %v3487 = vadd.f32 %v3399, %v3486
    %v3488 = vpop.f32.mrb[0].mxu0
    %3489 = vdwg.mxu0
    %3490 = vmatprep.subr.mxu0 0.0
    %v3491 = vand.u32 %v3189, 4294901760
    %3492 = vmatpush1.msra.mxu0 %v3491
    %3493 = vmatprep.subr.mxu0 0.0
    %v3494 = vand.u32 %v3190, 4294901760
    %3495 = vmatpush1.msra.mxu0 %v3494
    %3496 = vmatprep.subr.mxu0 0.0
    %v3497 = vand.u32 %v3191, 4294901760
    %3498 = vmatpush1.msra.mxu0 %v3497
    %3499 = vmatprep.subr.mxu0 0.0
    %v3500 = vand.u32 %v3192, 4294901760
    %3501 = vmatpush1.msra.mxu0 %v3500
    %3502 = vmatprep.subr.mxu0 0.0
    %v3503 = vand.u32 %v3193, 4294901760
    %3504 = vmatpush1.msra.mxu0 %v3503
    %3505 = vmatprep.subr.mxu0 0.0
    %v3506 = vand.u32 %v3194, 4294901760
    %3507 = vmatpush1.msra.mxu0 %v3506
    %3508 = vmatprep.subr.mxu0 0.0
    %v3509 = vand.u32 %v3195, 4294901760
    %3510 = vmatpush1.msra.mxu0 %v3509
    %3511 = vmatprep.subr.mxu0 0.0
    %v3512 = vand.u32 %v3196, 4294901760
    %3513 = vmatpush1.msra.mxu0 %v3512
    %3514 = vmatprep.subr.mxu0 0.0
    %3515 = vmatpush1.msra.mxu0 0.0
    %3516 = vmatprep.subr.mxu0 0.0
    %3517 = vmatpush1.msra.mxu0 0.0
    %3518 = vmatprep.subr.mxu0 0.0
    %3519 = vmatpush1.msra.mxu0 0.0
    %3520 = vmatprep.subr.mxu0 0.0
    %3521 = vmatpush1.msra.mxu0 0.0
    %3522 = vmatprep.subr.mxu0 0.0
    %3523 = vmatpush1.msra.mxu0 0.0
    %3524 = vmatprep.subr.mxu0 0.0
    %3525 = vmatpush1.msra.mxu0 0.0
    %3526 = vmatprep.subr.mxu0 0.0
    %3527 = vmatpush1.msra.mxu0 0.0
    %3528 = vmatprep.subr.mxu0 0.0
    %3529 = vmatpush1.msra.mxu0 0.0
    %3530 = vmatprep.subr.mxu0 0.0
    %3531 = vmatpush1.msra.mxu0 0.0
    %3532 = vmatprep.subr.mxu0 0.0
    %3533 = vmatpush1.msra.mxu0 0.0
    %3534 = vmatprep.subr.mxu0 0.0
    %3535 = vmatpush1.msra.mxu0 0.0
    %3536 = vmatprep.subr.mxu0 0.0
    %3537 = vmatpush1.msra.mxu0 0.0
    %3538 = vmatprep.subr.mxu0 0.0
    %3539 = vmatpush1.msra.mxu0 0.0
    %3540 = vmatprep.subr.mxu0 0.0
    %3541 = vmatpush1.msra.mxu0 0.0
    %3542 = vmatprep.subr.mxu0 0.0
    %3543 = vmatpush1.msra.mxu0 0.0
    %3544 = vmatprep.subr.mxu0 0.0
    %3545 = vmatpush1.msra.mxu0 0.0
    %3546 = vmatprep.subr.mxu0 0.0
    %3547 = vmatpush1.msra.mxu0 0.0
    %3548 = vmatprep.subr.mxu0 0.0
    %3549 = vmatpush1.msra.mxu0 0.0
    %3550 = vmatprep.subr.mxu0 0.0
    %3551 = vmatpush1.msra.mxu0 0.0
    %3552 = vmatprep.subr.mxu0 0.0
    %3553 = vmatpush1.msra.mxu0 0.0
    %3554 = vmatprep.subr.mxu0 0.0
    %3555 = vmatpush1.msra.mxu0 0.0
    %3556 = vmatprep.subr.mxu0 0.0
    %3557 = vmatpush1.msra.mxu0 0.0
    %3558 = vmatprep.subr.mxu0 0.0
    %3559 = vmatpush1.msra.mxu0 0.0
    %3560 = vmatprep.subr.mxu0 0.0
    %3561 = vmatpush1.msra.mxu0 0.0
    %3562 = vmatprep.mubr.f32.mxu0 0.0
    %v3563 = vand.u32 %v3206, 4294901760
    %v3564 = vsub.f32 %v3206, %v3563
    %v3565 = vand.u32 %v3564, 4294901760
    %3566 = vmatmul.mubr.f32.gmra.mrb[0].mxu0 %v3565
    %v3567 = vpop.f32.mrb[0].mxu0
    %v3568 = vadd.f32 %v3487, %v3567
    %v3569 = vpop.f32.mrb[0].mxu0
    %3570 = vdwg.mxu0
    %3571 = vmatprep.subr.mxu0 0.0
    %v3572 = vand.u32 %v3189, 4294901760
    %v3573 = vsub.f32 %v3189, %v3572
    %v3574 = vand.u32 %v3573, 4294901760
    %3575 = vmatpush1.msra.mxu0 %v3574
    %3576 = vmatprep.subr.mxu0 0.0
    %v3577 = vand.u32 %v3190, 4294901760
    %v3578 = vsub.f32 %v3190, %v3577
    %v3579 = vand.u32 %v3578, 4294901760
    %3580 = vmatpush1.msra.mxu0 %v3579
    %3581 = vmatprep.subr.mxu0 0.0
    %v3582 = vand.u32 %v3191, 4294901760
    %v3583 = vsub.f32 %v3191, %v3582
    %v3584 = vand.u32 %v3583, 4294901760
    %3585 = vmatpush1.msra.mxu0 %v3584
    %3586 = vmatprep.subr.mxu0 0.0
    %v3587 = vand.u32 %v3192, 4294901760
    %v3588 = vsub.f32 %v3192, %v3587
    %v3589 = vand.u32 %v3588, 4294901760
    %3590 = vmatpush1.msra.mxu0 %v3589
    %3591 = vmatprep.subr.mxu0 0.0
    %v3592 = vand.u32 %v3193, 4294901760
    %v3593 = vsub.f32 %v3193, %v3592
    %v3594 = vand.u32 %v3593, 4294901760
    %3595 = vmatpush1.msra.mxu0 %v3594
    %3596 = vmatprep.subr.mxu0 0.0
    %v3597 = vand.u32 %v3194, 4294901760
    %v3598 = vsub.f32 %v3194, %v3597
    %v3599 = vand.u32 %v3598, 4294901760
    %3600 = vmatpush1.msra.mxu0 %v3599
    %3601 = vmatprep.subr.mxu0 0.0
    %v3602 = vand.u32 %v3195, 4294901760
    %v3603 = vsub.f32 %v3195, %v3602
    %v3604 = vand.u32 %v3603, 4294901760
    %3605 = vmatpush1.msra.mxu0 %v3604
    %3606 = vmatprep.subr.mxu0 0.0
    %v3607 = vand.u32 %v3196, 4294901760
    %v3608 = vsub.f32 %v3196, %v3607
    %v3609 = vand.u32 %v3608, 4294901760
    %3610 = vmatpush1.msra.mxu0 %v3609
    %3611 = vmatprep.subr.mxu0 0.0
    %3612 = vmatpush1.msra.mxu0 0.0
    %3613 = vmatprep.subr.mxu0 0.0
    %3614 = vmatpush1.msra.mxu0 0.0
    %3615 = vmatprep.subr.mxu0 0.0
    %3616 = vmatpush1.msra.mxu0 0.0
    %3617 = vmatprep.subr.mxu0 0.0
    %3618 = vmatpush1.msra.mxu0 0.0
    %3619 = vmatprep.subr.mxu0 0.0
    %3620 = vmatpush1.msra.mxu0 0.0
    %3621 = vmatprep.subr.mxu0 0.0
    %3622 = vmatpush1.msra.mxu0 0.0
    %3623 = vmatprep.subr.mxu0 0.0
    %3624 = vmatpush1.msra.mxu0 0.0
    %3625 = vmatprep.subr.mxu0 0.0
    %3626 = vmatpush1.msra.mxu0 0.0
    %3627 = vmatprep.subr.mxu0 0.0
    %3628 = vmatpush1.msra.mxu0 0.0
    %3629 = vmatprep.subr.mxu0 0.0
    %3630 = vmatpush1.msra.mxu0 0.0
    %3631 = vmatprep.subr.mxu0 0.0
    %3632 = vmatpush1.msra.mxu0 0.0
    %3633 = vmatprep.subr.mxu0 0.0
    %3634 = vmatpush1.msra.mxu0 0.0
    %3635 = vmatprep.subr.mxu0 0.0
    %3636 = vmatpush1.msra.mxu0 0.0
    %3637 = vmatprep.subr.mxu0 0.0
    %3638 = vmatpush1.msra.mxu0 0.0
    %3639 = vmatprep.subr.mxu0 0.0
    %3640 = vmatpush1.msra.mxu0 0.0
    %3641 = vmatprep.subr.mxu0 0.0
    %3642 = vmatpush1.msra.mxu0 0.0
    %3643 = vmatprep.subr.mxu0 0.0
    %3644 = vmatpush1.msra.mxu0 0.0
    %3645 = vmatprep.subr.mxu0 0.0
    %3646 = vmatpush1.msra.mxu0 0.0
    %3647 = vmatprep.subr.mxu0 0.0
    %3648 = vmatpush1.msra.mxu0 0.0
    %3649 = vmatprep.subr.mxu0 0.0
    %3650 = vmatpush1.msra.mxu0 0.0
    %3651 = vmatprep.subr.mxu0 0.0
    %3652 = vmatpush1.msra.mxu0 0.0
    %3653 = vmatprep.subr.mxu0 0.0
    %3654 = vmatpush1.msra.mxu0 0.0
    %3655 = vmatprep.subr.mxu0 0.0
    %3656 = vmatpush1.msra.mxu0 0.0
    %3657 = vmatprep.subr.mxu0 0.0
    %3658 = vmatpush1.msra.mxu0 0.0
    %3659 = vmatprep.mubr.f32.mxu0 0.0
    %v3660 = vand.u32 %v3206, 4294901760
    %3661 = vmatmul.mubr.f32.gmra.mrb[0].mxu0 %v3660
    %v3662 = vpop.f32.mrb[0].mxu0
    %v3663 = vadd.f32 %v3568, %v3662
    %v3664 = vpop.f32.mrb[0].mxu0
    %3665 = vdwg.mxu0
    %3666 = vmatprep.subr.mxu0 0.0
    %v3667 = vand.u32 %v3189, 4294901760
    %3668 = vmatpush1.msra.mxu0 %v3667
    %3669 = vmatprep.subr.mxu0 0.0
    %v3670 = vand.u32 %v3190, 4294901760
    %3671 = vmatpush1.msra.mxu0 %v3670
    %3672 = vmatprep.subr.mxu0 0.0
    %v3673 = vand.u32 %v3191, 4294901760
    %3674 = vmatpush1.msra.mxu0 %v3673
    %3675 = vmatprep.subr.mxu0 0.0
    %v3676 = vand.u32 %v3192, 4294901760
    %3677 = vmatpush1.msra.mxu0 %v3676
    %3678 = vmatprep.subr.mxu0 0.0
    %v3679 = vand.u32 %v3193, 4294901760
    %3680 = vmatpush1.msra.mxu0 %v3679
    %3681 = vmatprep.subr.mxu0 0.0
    %v3682 = vand.u32 %v3194, 4294901760
    %3683 = vmatpush1.msra.mxu0 %v3682
    %3684 = vmatprep.subr.mxu0 0.0
    %v3685 = vand.u32 %v3195, 4294901760
    %3686 = vmatpush1.msra.mxu0 %v3685
    %3687 = vmatprep.subr.mxu0 0.0
    %v3688 = vand.u32 %v3196, 4294901760
    %3689 = vmatpush1.msra.mxu0 %v3688
    %3690 = vmatprep.subr.mxu0 0.0
    %3691 = vmatpush1.msra.mxu0 0.0
    %3692 = vmatprep.subr.mxu0 0.0
    %3693 = vmatpush1.msra.mxu0 0.0
    %3694 = vmatprep.subr.mxu0 0.0
    %3695 = vmatpush1.msra.mxu0 0.0
    %3696 = vmatprep.subr.mxu0 0.0
    %3697 = vmatpush1.msra.mxu0 0.0
    %3698 = vmatprep.subr.mxu0 0.0
    %3699 = vmatpush1.msra.mxu0 0.0
    %3700 = vmatprep.subr.mxu0 0.0
    %3701 = vmatpush1.msra.mxu0 0.0
    %3702 = vmatprep.subr.mxu0 0.0
    %3703 = vmatpush1.msra.mxu0 0.0
    %3704 = vmatprep.subr.mxu0 0.0
    %3705 = vmatpush1.msra.mxu0 0.0
    %3706 = vmatprep.subr.mxu0 0.0
    %3707 = vmatpush1.msra.mxu0 0.0
    %3708 = vmatprep.subr.mxu0 0.0
    %3709 = vmatpush1.msra.mxu0 0.0
    %3710 = vmatprep.subr.mxu0 0.0
    %3711 = vmatpush1.msra.mxu0 0.0
    %3712 = vmatprep.subr.mxu0 0.0
    %3713 = vmatpush1.msra.mxu0 0.0
    %3714 = vmatprep.subr.mxu0 0.0
    %3715 = vmatpush1.msra.mxu0 0.0
    %3716 = vmatprep.subr.mxu0 0.0
    %3717 = vmatpush1.msra.mxu0 0.0
    %3718 = vmatprep.subr.mxu0 0.0
    %3719 = vmatpush1.msra.mxu0 0.0
    %3720 = vmatprep.subr.mxu0 0.0
    %3721 = vmatpush1.msra.mxu0 0.0
    %3722 = vmatprep.subr.mxu0 0.0
    %3723 = vmatpush1.msra.mxu0 0.0
    %3724 = vmatprep.subr.mxu0 0.0
    %3725 = vmatpush1.msra.mxu0 0.0
    %3726 = vmatprep.subr.mxu0 0.0
    %3727 = vmatpush1.msra.mxu0 0.0
    %3728 = vmatprep.subr.mxu0 0.0
    %3729 = vmatpush1.msra.mxu0 0.0
    %3730 = vmatprep.subr.mxu0 0.0
    %3731 = vmatpush1.msra.mxu0 0.0
    %3732 = vmatprep.subr.mxu0 0.0
    %3733 = vmatpush1.msra.mxu0 0.0
    %3734 = vmatprep.subr.mxu0 0.0
    %3735 = vmatpush1.msra.mxu0 0.0
    %3736 = vmatprep.subr.mxu0 0.0
    %3737 = vmatpush1.msra.mxu0 0.0
    %3738 = vmatprep.mubr.f32.mxu0 0.0
    %v3739 = vand.u32 %v3206, 4294901760
    %3740 = vmatmul.mubr.f32.gmra.mrb[0].mxu0 %v3739
    %v3741 = vpop.f32.mrb[0].mxu0
    %v3742 = vadd.f32 %v3663, %v3741
    %v3743 = vpop.f32.mrb[0].mxu0
    %3744 = vdwg.mxu0
    %v3745 = vmax.f32 %v3742, 0.0
    %v3746 = vld [vmem:[%s5] sm:$0xff]
    %v3747 = vld [vmem:[%s5 + $0x8] sm:$0xff]
    %v3748 = vld [vmem:[%s5 + $0x10] sm:$0xff]
    %v3749 = vld [vmem:[%s5 + $0x18] sm:$0xff]
    %v3750 = vld [vmem:[%s6] sm:$0x1]
    %v3752 = vlaneseq
    %v3753 = vshrl.u32 %v3752, 7
    %v3754 = vsub.s32 0, %v3753
    %v3755 = vrot.slane %v3750, %v3754
    %vm3757 = vcmask 261120
    %v3759 = vsel %vm3757, %v3745, 0
    %3761 = vmatprep.subr.mxu0 0.0
    %v3762 = vand.u32 %v3746, 4294901760
    %3763 = vmatpush1.msra.mxu0 %v3762
    %3764 = vmatprep.subr.mxu0 0.0
    %v3765 = vand.u32 %v3747, 4294901760
    %3766 = vmatpush1.msra.mxu0 %v3765
    %3767 = vmatprep.subr.mxu0 0.0
    %v3768 = vand.u32 %v3748, 4294901760
    %3769 = vmatpush1.msra.mxu0 %v3768
    %3770 = vmatprep.subr.mxu0 0.0
    %v3771 = vand.u32 %v3749, 4294901760
    %3772 = vmatpush1.msra.mxu0 %v3771
    %3773 = vmatprep.subr.mxu0 0.0
    %3774 = vmatpush1.msra.mxu0 0.0
    %3775 = vmatprep.subr.mxu0 0.0
    %3776 = vmatpush1.msra.mxu0 0.0
    %3777 = vmatprep.subr.mxu0 0.0
    %3778 = vmatpush1.msra.mxu0 0.0
    %3779 = vmatprep.subr.mxu0 0.0
    %3780 = vmatpush1.msra.mxu0 0.0
    %3781 = vmatprep.subr.mxu0 0.0
    %3782 = vmatpush1.msra.mxu0 0.0
    %3783 = vmatprep.subr.mxu0 0.0
    %3784 = vmatpush1.msra.mxu0 0.0
    %3785 = vmatprep.subr.mxu0 0.0
    %3786 = vmatpush1.msra.mxu0 0.0
    %3787 = vmatprep.subr.mxu0 0.0
    %3788 = vmatpush1.msra.mxu0 0.0
    %3789 = vmatprep.subr.mxu0 0.0
    %3790 = vmatpush1.msra.mxu0 0.0
    %3791 = vmatprep.subr.mxu0 0.0
    %3792 = vmatpush1.msra.mxu0 0.0
    %3793 = vmatprep.subr.mxu0 0.0
    %3794 = vmatpush1.msra.mxu0 0.0
    %3795 = vmatprep.subr.mxu0 0.0
    %3796 = vmatpush1.msra.mxu0 0.0
    %3797 = vmatprep.subr.mxu0 0.0
    %3798 = vmatpush1.msra.mxu0 0.0
    %3799 = vmatprep.subr.mxu0 0.0
    %3800 = vmatpush1.msra.mxu0 0.0
    %3801 = vmatprep.subr.mxu0 0.0
    %3802 = vmatpush1.msra.mxu0 0.0
    %3803 = vmatprep.subr.mxu0 0.0
    %3804 = vmatpush1.msra.mxu0 0.0
    %3805 = vmatprep.subr.mxu0 0.0
    %3806 = vmatpush1.msra.mxu0 0.0
    %3807 = vmatprep.subr.mxu0 0.0
    %3808 = vmatpush1.msra.mxu0 0.0
    %3809 = vmatprep.subr.mxu0 0.0
    %3810 = vmatpush1.msra.mxu0 0.0
    %3811 = vmatprep.subr.mxu0 0.0
    %3812 = vmatpush1.msra.mxu0 0.0
    %3813 = vmatprep.subr.mxu0 0.0
    %3814 = vmatpush1.msra.mxu0 0.0
    %3815 = vmatprep.subr.mxu0 0.0
    %3816 = vmatpush1.msra.mxu0 0.0
    %3817 = vmatprep.subr.mxu0 0.0
    %3818 = vmatpush1.msra.mxu0 0.0
    %3819 = vmatprep.subr.mxu0 0.0
    %3820 = vmatpush1.msra.mxu0 0.0
    %3821 = vmatprep.subr.mxu0 0.0
    %3822 = vmatpush1.msra.mxu0 0.0
    %3823 = vmatprep.subr.mxu0 0.0
    %3824 = vmatpush1.msra.mxu0 0.0
    %3825 = vmatprep.subr.mxu0 0.0
    %3826 = vmatpush1.msra.mxu0 0.0
    %3827 = vmatprep.subr.mxu0 0.0
    %3828 = vmatpush1.msra.mxu0 0.0
    %3829 = vmatprep.mubr.f32.mxu0 0.0
    %v3830 = vand.u32 %v3759, 4294901760
    %v3831 = vsub.f32 %v3759, %v3830
    %v3832 = vand.u32 %v3831, 4294901760
    %v3833 = vsub.f32 %v3831, %v3832
    %v3834 = vand.u32 %v3833, 4294901760
    %3835 = vmatmul.mubr.f32.gmra.mrb[0].mxu0 %v3834
    %v3836 = vpop.f32.mrb[0].mxu0
    %v3837 = vadd.f32 %v3755, %v3836
    %v3838 = vpop.f32.mrb[0].mxu0
    %3839 = vdwg.mxu0
    %3840 = vmatprep.subr.mxu0 0.0
    %v3841 = vand.u32 %v3746, 4294901760
    %v3842 = vsub.f32 %v3746, %v3841
    %v3843 = vand.u32 %v3842, 4294901760
    %v3844 = vsub.f32 %v3842, %v3843
    %v3845 = vand.u32 %v3844, 4294901760
    %3846 = vmatpush1.msra.mxu0 %v3845
    %3847 = vmatprep.subr.mxu0 0.0
    %v3848 = vand.u32 %v3747, 4294901760
    %v3849 = vsub.f32 %v3747, %v3848
    %v3850 = vand.u32 %v3849, 4294901760
    %v3851 = vsub.f32 %v3849, %v3850
    %v3852 = vand.u32 %v3851, 4294901760
    %3853 = vmatpush1.msra.mxu0 %v3852
    %3854 = vmatprep.subr.mxu0 0.0
    %v3855 = vand.u32 %v3748, 4294901760
    %v3856 = vsub.f32 %v3748, %v3855
    %v3857 = vand.u32 %v3856, 4294901760
    %v3858 = vsub.f32 %v3856, %v3857
    %v3859 = vand.u32 %v3858, 4294901760
    %3860 = vmatpush1.msra.mxu0 %v3859
    %3861 = vmatprep.subr.mxu0 0.0
    %v3862 = vand.u32 %v3749, 4294901760
    %v3863 = vsub.f32 %v3749, %v3862
    %v3864 = vand.u32 %v3863, 4294901760
    %v3865 = vsub.f32 %v3863, %v3864
    %v3866 = vand.u32 %v3865, 4294901760
    %3867 = vmatpush1.msra.mxu0 %v3866
    %3868 = vmatprep.subr.mxu0 0.0
    %3869 = vmatpush1.msra.mxu0 0.0
    %3870 = vmatprep.subr.mxu0 0.0
    %3871 = vmatpush1.msra.mxu0 0.0
    %3872 = vmatprep.subr.mxu0 0.0
    %3873 = vmatpush1.msra.mxu0 0.0
    %3874 = vmatprep.subr.mxu0 0.0
    %3875 = vmatpush1.msra.mxu0 0.0
    %3876 = vmatprep.subr.mxu0 0.0
    %3877 = vmatpush1.msra.mxu0 0.0
    %3878 = vmatprep.subr.mxu0 0.0
    %3879 = vmatpush1.msra.mxu0 0.0
    %3880 = vmatprep.subr.mxu0 0.0
    %3881 = vmatpush1.msra.mxu0 0.0
    %3882 = vmatprep.subr.mxu0 0.0
    %3883 = vmatpush1.msra.mxu0 0.0
    %3884 = vmatprep.subr.mxu0 0.0
    %3885 = vmatpush1.msra.mxu0 0.0
    %3886 = vmatprep.subr.mxu0 0.0
    %3887 = vmatpush1.msra.mxu0 0.0
    %3888 = vmatprep.subr.mxu0 0.0
    %3889 = vmatpush1.msra.mxu0 0.0
    %3890 = vmatprep.subr.mxu0 0.0
    %3891 = vmatpush1.msra.mxu0 0.0
    %3892 = vmatprep.subr.mxu0 0.0
    %3893 = vmatpush1.msra.mxu0 0.0
    %3894 = vmatprep.subr.mxu0 0.0
    %3895 = vmatpush1.msra.mxu0 0.0
    %3896 = vmatprep.subr.mxu0 0.0
    %3897 = vmatpush1.msra.mxu0 0.0
    %3898 = vmatprep.subr.mxu0 0.0
    %3899 = vmatpush1.msra.mxu0 0.0
    %3900 = vmatprep.subr.mxu0 0.0
    %3901 = vmatpush1.msra.mxu0 0.0
    %3902 = vmatprep.subr.mxu0 0.0
    %3903 = vmatpush1.msra.mxu0 0.0
    %3904 = vmatprep.subr.mxu0 0.0
    %3905 = vmatpush1.msra.mxu0 0.0
    %3906 = vmatprep.subr.mxu0 0.0
    %3907 = vmatpush1.msra.mxu0 0.0
    %3908 = vmatprep.subr.mxu0 0.0
    %3909 = vmatpush1.msra.mxu0 0.0
    %3910 = vmatprep.subr.mxu0 0.0
    %3911 = vmatpush1.msra.mxu0 0.0
    %3912 = vmatprep.subr.mxu0 0.0
    %3913 = vmatpush1.msra.mxu0 0.0
    %3914 = vmatprep.subr.mxu0 0.0
    %3915 = vmatpush1.msra.mxu0 0.0
    %3916 = vmatprep.subr.mxu0 0.0
    %3917 = vmatpush1.msra.mxu0 0.0
    %3918 = vmatprep.subr.mxu0 0.0
    %3919 = vmatpush1.msra.mxu0 0.0
    %3920 = vmatprep.subr.mxu0 0.0
    %3921 = vmatpush1.msra.mxu0 0.0
    %3922 = vmatprep.subr.mxu0 0.0
    %3923 = vmatpush1.msra.mxu0 0.0
    %3924 = vmatprep.mubr.f32.mxu0 0.0
    %v3925 = vand.u32 %v3759, 4294901760
    %3926 = vmatmul.mubr.f32.gmra.mrb[0].mxu0 %v3925
    %v3927 = vpop.f32.mrb[0].mxu0
    %v3928 = vadd.f32 %v3837, %v3927
    %v3929 = vpop.f32.mrb[0].mxu0
    %3930 = vdwg.mxu0
    %3931 = vmatprep.subr.mxu0 0.0
    %v3932 = vand.u32 %v3746, 4294901760
    %v3933 = vsub.f32 %v3746, %v3932
    %3934 = vmatpush1.msra.mxu0 %v3933
    %3935 = vmatprep.subr.mxu0 0.0
    %v3936 = vand.u32 %v3747, 4294901760
    %v3937 = vsub.f32 %v3747, %v3936
    %3938 = vmatpush1.msra.mxu0 %v3937
    %3939 = vmatprep.subr.mxu0 0.0
    %v3940 = vand.u32 %v3748, 4294901760
    %v3941 = vsub.f32 %v3748, %v3940
    %3942 = vmatpush1.msra.mxu0 %v3941
    %3943 = vmatprep.subr.mxu0 0.0
    %v3944 = vand.u32 %v3749, 4294901760
    %v3945 = vsub.f32 %v3749, %v3944
    %3946 = vmatpush1.msra.mxu0 %v3945
    %3947 = vmatprep.subr.mxu0 0.0
    %3948 = vmatpush1.msra.mxu0 0.0
    %3949 = vmatprep.subr.mxu0 0.0
    %3950 = vmatpush1.msra.mxu0 0.0
    %3951 = vmatprep.subr.mxu0 0.0
    %3952 = vmatpush1.msra.mxu0 0.0
    %3953 = vmatprep.subr.mxu0 0.0
    %3954 = vmatpush1.msra.mxu0 0.0
    %3955 = vmatprep.subr.mxu0 0.0
    %3956 = vmatpush1.msra.mxu0 0.0
    %3957 = vmatprep.subr.mxu0 0.0
    %3958 = vmatpush1.msra.mxu0 0.0
    %3959 = vmatprep.subr.mxu0 0.0
    %3960 = vmatpush1.msra.mxu0 0.0
    %3961 = vmatprep.subr.mxu0 0.0
    %3962 = vmatpush1.msra.mxu0 0.0
    %3963 = vmatprep.subr.mxu0 0.0
    %3964 = vmatpush1.msra.mxu0 0.0
    %3965 = vmatprep.subr.mxu0 0.0
    %3966 = vmatpush1.msra.mxu0 0.0
    %3967 = vmatprep.subr.mxu0 0.0
    %3968 = vmatpush1.msra.mxu0 0.0
    %3969 = vmatprep.subr.mxu0 0.0
    %3970 = vmatpush1.msra.mxu0 0.0
    %3971 = vmatprep.subr.mxu0 0.0
    %3972 = vmatpush1.msra.mxu0 0.0
    %3973 = vmatprep.subr.mxu0 0.0
    %3974 = vmatpush1.msra.mxu0 0.0
    %3975 = vmatprep.subr.mxu0 0.0
    %3976 = vmatpush1.msra.mxu0 0.0
    %3977 = vmatprep.subr.mxu0 0.0
    %3978 = vmatpush1.msra.mxu0 0.0
    %3979 = vmatprep.subr.mxu0 0.0
    %3980 = vmatpush1.msra.mxu0 0.0
    %3981 = vmatprep.subr.mxu0 0.0
    %3982 = vmatpush1.msra.mxu0 0.0
    %3983 = vmatprep.subr.mxu0 0.0
    %3984 = vmatpush1.msra.mxu0 0.0
    %3985 = vmatprep.subr.mxu0 0.0
    %3986 = vmatpush1.msra.mxu0 0.0
    %3987 = vmatprep.subr.mxu0 0.0
    %3988 = vmatpush1.msra.mxu0 0.0
    %3989 = vmatprep.subr.mxu0 0.0
    %3990 = vmatpush1.msra.mxu0 0.0
    %3991 = vmatprep.subr.mxu0 0.0
    %3992 = vmatpush1.msra.mxu0 0.0
    %3993 = vmatprep.subr.mxu0 0.0
    %3994 = vmatpush1.msra.mxu0 0.0
    %3995 = vmatprep.subr.mxu0 0.0
    %3996 = vmatpush1.msra.mxu0 0.0
    %3997 = vmatprep.subr.mxu0 0.0
    %3998 = vmatpush1.msra.mxu0 0.0
    %3999 = vmatprep.subr.mxu0 0.0
    %4000 = vmatpush1.msra.mxu0 0.0
    %4001 = vmatprep.subr.mxu0 0.0
    %4002 = vmatpush1.msra.mxu0 0.0
    %4003 = vmatprep.mubr.f32.mxu0 0.0
    %v4004 = vand.u32 %v3759, 4294901760
    %v4005 = vsub.f32 %v3759, %v4004
    %4006 = vmatmul.mubr.f32.gmra.mrb[0].mxu0 %v4005
    %v4007 = vpop.f32.mrb[0].mxu0
    %v4008 = vadd.f32 %v3928, %v4007
    %v4009 = vpop.f32.mrb[0].mxu0
    %4010 = vdwg.mxu0
    %4011 = vmatprep.subr.mxu0 0.0
    %v4012 = vand.u32 %v3746, 4294901760
    %4013 = vmatpush1.msra.mxu0 %v4012
    %4014 = vmatprep.subr.mxu0 0.0
    %v4015 = vand.u32 %v3747, 4294901760
    %4016 = vmatpush1.msra.mxu0 %v4015
    %4017 = vmatprep.subr.mxu0 0.0
    %v4018 = vand.u32 %v3748, 4294901760
    %4019 = vmatpush1.msra.mxu0 %v4018
    %4020 = vmatprep.subr.mxu0 0.0
    %v4021 = vand.u32 %v3749, 4294901760
    %4022 = vmatpush1.msra.mxu0 %v4021
    %4023 = vmatprep.subr.mxu0 0.0
    %4024 = vmatpush1.msra.mxu0 0.0
    %4025 = vmatprep.subr.mxu0 0.0
    %4026 = vmatpush1.msra.mxu0 0.0
    %4027 = vmatprep.subr.mxu0 0.0
    %4028 = vmatpush1.msra.mxu0 0.0
    %4029 = vmatprep.subr.mxu0 0.0
    %4030 = vmatpush1.msra.mxu0 0.0
    %4031 = vmatprep.subr.mxu0 0.0
    %4032 = vmatpush1.msra.mxu0 0.0
    %4033 = vmatprep.subr.mxu0 0.0
    %4034 = vmatpush1.msra.mxu0 0.0
    %4035 = vmatprep.subr.mxu0 0.0
    %4036 = vmatpush1.msra.mxu0 0.0
    %4037 = vmatprep.subr.mxu0 0.0
    %4038 = vmatpush1.msra.mxu0 0.0
    %4039 = vmatprep.subr.mxu0 0.0
    %4040 = vmatpush1.msra.mxu0 0.0
    %4041 = vmatprep.subr.mxu0 0.0
    %4042 = vmatpush1.msra.mxu0 0.0
    %4043 = vmatprep.subr.mxu0 0.0
    %4044 = vmatpush1.msra.mxu0 0.0
    %4045 = vmatprep.subr.mxu0 0.0
    %4046 = vmatpush1.msra.mxu0 0.0
    %4047 = vmatprep.subr.mxu0 0.0
    %4048 = vmatpush1.msra.mxu0 0.0
    %4049 = vmatprep.subr.mxu0 0.0
    %4050 = vmatpush1.msra.mxu0 0.0
    %4051 = vmatprep.subr.mxu0 0.0
    %4052 = vmatpush1.msra.mxu0 0.0
    %4053 = vmatprep.subr.mxu0 0.0
    %4054 = vmatpush1.msra.mxu0 0.0
    %4055 = vmatprep.subr.mxu0 0.0
    %4056 = vmatpush1.msra.mxu0 0.0
    %4057 = vmatprep.subr.mxu0 0.0
    %4058 = vmatpush1.msra.mxu0 0.0
    %4059 = vmatprep.subr.mxu0 0.0
    %4060 = vmatpush1.msra.mxu0 0.0
    %4061 = vmatprep.subr.mxu0 0.0
    %4062 = vmatpush1.msra.mxu0 0.0
    %4063 = vmatprep.subr.mxu0 0.0
    %4064 = vmatpush1.msra.mxu0 0.0
    %4065 = vmatprep.subr.mxu0 0.0
    %4066 = vmatpush1.msra.mxu0 0.0
    %4067 = vmatprep.subr.mxu0 0.0
    %4068 = vmatpush1.msra.mxu0 0.0
    %4069 = vmatprep.subr.mxu0 0.0
    %4070 = vmatpush1.msra.mxu0 0.0
    %4071 = vmatprep.subr.mxu0 0.0
    %4072 = vmatpush1.msra.mxu0 0.0
    %4073 = vmatprep.subr.mxu0 0.0
    %4074 = vmatpush1.msra.mxu0 0.0
    %4075 = vmatprep.subr.mxu0 0.0
    %4076 = vmatpush1.msra.mxu0 0.0
    %4077 = vmatprep.subr.mxu0 0.0
    %4078 = vmatpush1.msra.mxu0 0.0
    %4079 = vmatprep.mubr.f32.mxu0 0.0
    %v4080 = vand.u32 %v3759, 4294901760
    %v4081 = vsub.f32 %v3759, %v4080
    %v4082 = vand.u32 %v4081, 4294901760
    %4083 = vmatmul.mubr.f32.gmra.mrb[0].mxu0 %v4082
    %v4084 = vpop.f32.mrb[0].mxu0
    %v4085 = vadd.f32 %v4008, %v4084
    %v4086 = vpop.f32.mrb[0].mxu0
    %4087 = vdwg.mxu0
    %4088 = vmatprep.subr.mxu0 0.0
    %v4089 = vand.u32 %v3746, 4294901760
    %v4090 = vsub.f32 %v3746, %v4089
    %v4091 = vand.u32 %v4090, 4294901760
    %4092 = vmatpush1.msra.mxu0 %v4091
    %4093 = vmatprep.subr.mxu0 0.0
    %v4094 = vand.u32 %v3747, 4294901760
    %v4095 = vsub.f32 %v3747, %v4094
    %v4096 = vand.u32 %v4095, 4294901760
    %4097 = vmatpush1.msra.mxu0 %v4096
    %4098 = vmatprep.subr.mxu0 0.0
    %v4099 = vand.u32 %v3748, 4294901760
    %v4100 = vsub.f32 %v3748, %v4099
    %v4101 = vand.u32 %v4100, 4294901760
    %4102 = vmatpush1.msra.mxu0 %v4101
    %4103 = vmatprep.subr.mxu0 0.0
    %v4104 = vand.u32 %v3749, 4294901760
    %v4105 = vsub.f32 %v3749, %v4104
    %v4106 = vand.u32 %v4105, 4294901760
    %4107 = vmatpush1.msra.mxu0 %v4106
    %4108 = vmatprep.subr.mxu0 0.0
    %4109 = vmatpush1.msra.mxu0 0.0
    %4110 = vmatprep.subr.mxu0 0.0
    %4111 = vmatpush1.msra.mxu0 0.0
    %4112 = vmatprep.subr.mxu0 0.0
    %4113 = vmatpush1.msra.mxu0 0.0
    %4114 = vmatprep.subr.mxu0 0.0
    %4115 = vmatpush1.msra.mxu0 0.0
    %4116 = vmatprep.subr.mxu0 0.0
    %4117 = vmatpush1.msra.mxu0 0.0
    %4118 = vmatprep.subr.mxu0 0.0
    %4119 = vmatpush1.msra.mxu0 0.0
    %4120 = vmatprep.subr.mxu0 0.0
    %4121 = vmatpush1.msra.mxu0 0.0
    %4122 = vmatprep.subr.mxu0 0.0
    %4123 = vmatpush1.msra.mxu0 0.0
    %4124 = vmatprep.subr.mxu0 0.0
    %4125 = vmatpush1.msra.mxu0 0.0
    %4126 = vmatprep.subr.mxu0 0.0
    %4127 = vmatpush1.msra.mxu0 0.0
    %4128 = vmatprep.subr.mxu0 0.0
    %4129 = vmatpush1.msra.mxu0 0.0
    %4130 = vmatprep.subr.mxu0 0.0
    %4131 = vmatpush1.msra.mxu0 0.0
    %4132 = vmatprep.subr.mxu0 0.0
    %4133 = vmatpush1.msra.mxu0 0.0
    %4134 = vmatprep.subr.mxu0 0.0
    %4135 = vmatpush1.msra.mxu0 0.0
    %4136 = vmatprep.subr.mxu0 0.0
    %4137 = vmatpush1.msra.mxu0 0.0
    %4138 = vmatprep.subr.mxu0 0.0
    %4139 = vmatpush1.msra.mxu0 0.0
    %4140 = vmatprep.subr.mxu0 0.0
    %4141 = vmatpush1.msra.mxu0 0.0
    %4142 = vmatprep.subr.mxu0 0.0
    %4143 = vmatpush1.msra.mxu0 0.0
    %4144 = vmatprep.subr.mxu0 0.0
    %4145 = vmatpush1.msra.mxu0 0.0
    %4146 = vmatprep.subr.mxu0 0.0
    %4147 = vmatpush1.msra.mxu0 0.0
    %4148 = vmatprep.subr.mxu0 0.0
    %4149 = vmatpush1.msra.mxu0 0.0
    %4150 = vmatprep.subr.mxu0 0.0
    %4151 = vmatpush1.msra.mxu0 0.0
    %4152 = vmatprep.subr.mxu0 0.0
    %4153 = vmatpush1.msra.mxu0 0.0
    %4154 = vmatprep.subr.mxu0 0.0
    %4155 = vmatpush1.msra.mxu0 0.0
    %4156 = vmatprep.subr.mxu0 0.0
    %4157 = vmatpush1.msra.mxu0 0.0
    %4158 = vmatprep.subr.mxu0 0.0
    %4159 = vmatpush1.msra.mxu0 0.0
    %4160 = vmatprep.subr.mxu0 0.0
    %4161 = vmatpush1.msra.mxu0 0.0
    %4162 = vmatprep.subr.mxu0 0.0
    %4163 = vmatpush1.msra.mxu0 0.0
    %4164 = vmatprep.mubr.f32.mxu0 0.0
    %v4165 = vand.u32 %v3759, 4294901760
    %4166 = vmatmul.mubr.f32.gmra.mrb[0].mxu0 %v4165
    %v4167 = vpop.f32.mrb[0].mxu0
    %v4168 = vadd.f32 %v4085, %v4167
    %v4169 = vpop.f32.mrb[0].mxu0
    %4170 = vdwg.mxu0
    %4171 = vmatprep.subr.mxu0 0.0
    %v4172 = vand.u32 %v3746, 4294901760
    %4173 = vmatpush1.msra.mxu0 %v4172
    %4174 = vmatprep.subr.mxu0 0.0
    %v4175 = vand.u32 %v3747, 4294901760
    %4176 = vmatpush1.msra.mxu0 %v4175
    %4177 = vmatprep.subr.mxu0 0.0
    %v4178 = vand.u32 %v3748, 4294901760
    %4179 = vmatpush1.msra.mxu0 %v4178
    %4180 = vmatprep.subr.mxu0 0.0
    %v4181 = vand.u32 %v3749, 4294901760
    %4182 = vmatpush1.msra.mxu0 %v4181
    %4183 = vmatprep.subr.mxu0 0.0
    %4184 = vmatpush1.msra.mxu0 0.0
    %4185 = vmatprep.subr.mxu0 0.0
    %4186 = vmatpush1.msra.mxu0 0.0
    %4187 = vmatprep.subr.mxu0 0.0
    %4188 = vmatpush1.msra.mxu0 0.0
    %4189 = vmatprep.subr.mxu0 0.0
    %4190 = vmatpush1.msra.mxu0 0.0
    %4191 = vmatprep.subr.mxu0 0.0
    %4192 = vmatpush1.msra.mxu0 0.0
    %4193 = vmatprep.subr.mxu0 0.0
    %4194 = vmatpush1.msra.mxu0 0.0
    %4195 = vmatprep.subr.mxu0 0.0
    %4196 = vmatpush1.msra.mxu0 0.0
    %4197 = vmatprep.subr.mxu0 0.0
    %4198 = vmatpush1.msra.mxu0 0.0
    %4199 = vmatprep.subr.mxu0 0.0
    %4200 = vmatpush1.msra.mxu0 0.0
    %4201 = vmatprep.subr.mxu0 0.0
    %4202 = vmatpush1.msra.mxu0 0.0
    %4203 = vmatprep.subr.mxu0 0.0
    %4204 = vmatpush1.msra.mxu0 0.0
    %4205 = vmatprep.subr.mxu0 0.0
    %4206 = vmatpush1.msra.mxu0 0.0
    %4207 = vmatprep.subr.mxu0 0.0
    %4208 = vmatpush1.msra.mxu0 0.0
    %4209 = vmatprep.subr.mxu0 0.0
    %4210 = vmatpush1.msra.mxu0 0.0
    %4211 = vmatprep.subr.mxu0 0.0
    %4212 = vmatpush1.msra.mxu0 0.0
    %4213 = vmatprep.subr.mxu0 0.0
    %4214 = vmatpush1.msra.mxu0 0.0
    %4215 = vmatprep.subr.mxu0 0.0
    %4216 = vmatpush1.msra.mxu0 0.0
    %4217 = vmatprep.subr.mxu0 0.0
    %4218 = vmatpush1.msra.mxu0 0.0
    %4219 = vmatprep.subr.mxu0 0.0
    %4220 = vmatpush1.msra.mxu0 0.0
    %4221 = vmatprep.subr.mxu0 0.0
    %4222 = vmatpush1.msra.mxu0 0.0
    %4223 = vmatprep.subr.mxu0 0.0
    %4224 = vmatpush1.msra.mxu0 0.0
    %4225 = vmatprep.subr.mxu0 0.0
    %4226 = vmatpush1.msra.mxu0 0.0
    %4227 = vmatprep.subr.mxu0 0.0
    %4228 = vmatpush1.msra.mxu0 0.0
    %4229 = vmatprep.subr.mxu0 0.0
    %4230 = vmatpush1.msra.mxu0 0.0
    %4231 = vmatprep.subr.mxu0 0.0
    %4232 = vmatpush1.msra.mxu0 0.0
    %4233 = vmatprep.subr.mxu0 0.0
    %4234 = vmatpush1.msra.mxu0 0.0
    %4235 = vmatprep.subr.mxu0 0.0
    %4236 = vmatpush1.msra.mxu0 0.0
    %4237 = vmatprep.subr.mxu0 0.0
    %4238 = vmatpush1.msra.mxu0 0.0
    %4239 = vmatprep.mubr.f32.mxu0 0.0
    %v4240 = vand.u32 %v3759, 4294901760
    %4241 = vmatmul.mubr.f32.gmra.mrb[0].mxu0 %v4240
    %v4242 = vpop.f32.mrb[0].mxu0
    %v4243 = vadd.f32 %v4168, %v4242
    %v4244 = vpop.f32.mrb[0].mxu0
    %4245 = vdwg.mxu0
    %4246 = vst.msk [vmem:[#allocation2] sm:$0xff] %vm139, %v4243
    // Predicated region
    $region30: #{tpu_custom_call.1} parent=1 // pred_check
      _
    $region31: #{tpu_custom_call.1} parent=1 // pred_check_branch
      %4248 = sbr.rel (0) target = $region33
    $region32: #{tpu_custom_call.1} parent=1 // pred_region
      %s4250 = ssub.s32 128, 128
      %4251 = vsyncadd [#allocation3], %s4250
      %s4253 = sshll.u32 [#allocation2], 4
      %s4254 = int_to_ptr.vmem [resolvable:$true] %s4253
      %4256 = dma.vmem_to_hbm [thread:$0]  %s4254, 128, %s7, [#allocation3]
    $region33: #{tpu_custom_call.1} parent=1 // pred_fallthru
      _
    // Predicated region
    $region34: #{tpu_custom_call.1} parent=1 // pred_check
      _
    $region35: #{tpu_custom_call.1} parent=1 // pred_check_branch
      %4258 = sbr.rel (0) target = $region37
    $region36: #{tpu_custom_call.1} parent=1 // pred_region
      %4259 = dma.done [#allocation3], 128
    $region37: #{tpu_custom_call.1} parent=1 // pred_fallthru
      _
    %4260 = vsyncpa [#allocation3], 1

</llo_original>
